<compile_context>
chip_gen: v6e
topology: v6e:2x2x1
jax: 0.10.0
libtpu: 0.0.40
codegen_flags: <defaults>
</compile_context>

<pallas_src>
import jax
import jax.numpy as jnp
from jax.experimental import pallas as pl
from jax.experimental.pallas import tpu as pltpu

# ---------------- network config (concrete instantiation) ----------------
N_E = 128            # excitatory population size
N_I = 128            # inhibitory population size
N_TOT = N_E + N_I    # fused state width (lane dim)
T = 8                # time_steps
SUB = 8              # state replicated over the 8 sublanes of one vreg tile
BETA = 0.9           # membrane decay
V_TH = 1.0           # spike threshold
V_RESET = 0.0        # reset potential
DTYPE = jnp.float32


def _make_rsnn_kernel(time_steps: int):
    """Build the single-invocation recurrence kernel for a fixed time_steps."""

    def kernel(ext_exc_ref, ext_inh_ref, w_hi_ref, w_lo_ref,
               hist_exc_ref, hist_inh_ref):
        # ext_exc_ref : (T, N_E)      time-varying external current for "exc"
        # ext_inh_ref : (1, N_I)      constant external current for "inh"
        # w_hi_ref    : (N_TOT,N_TOT) bf16 hi part of fused pre-transposed weights
        # w_lo_ref    : (N_TOT,N_TOT) bf16 lo part (W_f32 ~= hi + lo)
        # hist_*_ref  : (T, N_E/N_I)  spike history outputs (f32, values in {0,1})

        # Fused external-current table [exc | inh] built ONCE in VMEM/vregs
        # (replaces the wrapper-side concat/broadcast XLA ops).
        ext_all = jnp.concatenate(
            [ext_exc_ref[...],
             jnp.broadcast_to(ext_inh_ref[...], (time_steps, N_I))],
            axis=1)                                   # (T, N_TOT)

        # reset_state() semantics: zero membrane potential and zero prev spikes.
        # Rows replicated over SUB sublanes (same vreg cost as a single row).
        v = jnp.zeros((SUB, N_TOT), DTYPE)
        s = jnp.zeros((SUB, N_TOT), jnp.bfloat16)     # previous-step spikes

        # Fully unrolled recurrence (T is small & static): straight-line code,
        # no per-step grid/pipeline overhead, static row indices everywhere.
        for t in range(time_steps):
            # Recurrent current from PREVIOUS step's spikes.  Two native bf16
            # MXU passes (hi + lo) with f32 accumulation; weights read straight
            # from their VMEM refs (no whole-weight vreg hoist).
            i_rec = (
                jnp.dot(s, w_hi_ref[...], preferred_element_type=jnp.float32)
                + jnp.dot(s, w_lo_ref[...], preferred_element_type=jnp.float32))

            # total current = external input (row t, static slice) + recurrent
            i_total = i_rec + ext_all[t:t + 1, :]

            # LIF update for all populations simultaneously
            v = BETA * v + i_total
            mask = v >= V_TH                          # one compare reused twice
            spk = mask.astype(DTYPE)
            v = jnp.where(mask, V_RESET, v)
            s = spk.astype(jnp.bfloat16)              # exact: spikes are 0/1

            # record spike history row t (lane-dense 128-wide stores)
            hist_exc_ref[pl.ds(t, 1), :] = spk[0:1, :N_E]
            hist_inh_ref[pl.ds(t, 1), :] = spk[0:1, N_E:]

    return kernel


def prepare_weights(w_ee_t, w_ie_t, w_ei_t, w_ii_t):
    """One-time (NOT per forward call) weight preparation.

    Fuses the four pre-transposed synapse blocks so that
        [s_exc | s_inh] @ W_all = [i_exc_rec | i_inh_rec],
    then splits into a bf16 hi/lo pair for two-pass near-exact MXU matmuls."""
    w_all = jnp.block([[w_ee_t, w_ei_t],
                       [w_ie_t, w_ii_t]]).astype(jnp.float32)
    w_hi = w_all.astype(jnp.bfloat16)
    w_lo = (w_all - w_hi.astype(jnp.float32)).astype(jnp.bfloat16)
    return w_hi, w_lo


def recurrent_spiking_network(ext_exc, ext_inh, w_hi, w_lo, time_steps=T):
    """ext_exc: [T, N_E] time-varying external current for "exc".
       ext_inh: [1, N_I] constant external current for "inh".
       w_hi/w_lo: fused pre-transposed weights from prepare_weights().
       Returns spike histories: exc [T, N_E], inh [T, N_I]."""
    vmem = lambda: pl.BlockSpec(memory_space=pltpu.MemorySpace.VMEM)

    hist_exc, hist_inh = pl.pallas_call(
        _make_rsnn_kernel(time_steps),
        out_shape=(jax.ShapeDtypeStruct((time_steps, N_E), DTYPE),
                   jax.ShapeDtypeStruct((time_steps, N_I), DTYPE)),
        in_specs=[vmem(), vmem(), vmem(), vmem()],
        out_specs=(vmem(), vmem()),
    )(ext_exc.astype(DTYPE), ext_inh.astype(DTYPE), w_hi, w_lo)

    return hist_exc, hist_inh


if __name__ == "__main__":
    key = jax.random.PRNGKey(0)
    k1, k2, k3, k4, k5, k6 = jax.random.split(key, 6)

    # deterministic synthetic weights (synapse nn.Linear-style weights, transposed)
    scale = 0.5 / jnp.sqrt(float(N_E))
    w_ee_t = (scale * jax.random.normal(k1, (N_E, N_E))).astype(DTYPE)            # exc -> exc
    w_ie_t = (-scale * jnp.abs(jax.random.normal(k2, (N_I, N_E)))).astype(DTYPE)  # inh -> exc
    w_ei_t = (scale * jax.random.normal(k3, (N_E, N_I))).astype(DTYPE)            # exc -> inh
    w_ii_t = (-scale * jnp.abs(jax.random.normal(k4, (N_I, N_I)))).astype(DTYPE)  # inh -> inh

    # one-time weight fusion + bf16 hi/lo split (kept off the per-call path)
    w_hi, w_lo = prepare_weights(w_ee_t, w_ie_t, w_ei_t, w_ii_t)

    # external inputs: drive around threshold so spiking occurs
    ext_exc = (1.2 * jax.random.uniform(k5, (T, N_E))).astype(DTYPE)   # 2D -> indexed by t
    ext_inh = (0.8 * jax.random.uniform(k6, (1, N_I))).astype(DTYPE)   # constant

    hist_exc, hist_inh = recurrent_spiking_network(
        ext_exc, ext_inh, w_hi, w_lo, time_steps=T)
    jax.block_until_ready((hist_exc, hist_inh))

    assert hist_exc.shape == (T, N_E) and hist_inh.shape == (T, N_I)
    assert bool(jnp.all(jnp.isfinite(hist_exc))) and bool(jnp.all(jnp.isfinite(hist_inh)))
    # spikes must be binary
    assert bool(jnp.all((hist_exc == 0) | (hist_exc == 1)))
    assert bool(jnp.all((hist_inh == 0) | (hist_inh == 1)))
    print("KERNEL_OK")
</pallas_src>

<mosaic_0001>
module attributes {stable_mosaic.version = 11 : i64} {
  func.func @kernel(%arg0: memref<8x128xf32, #tpu.memory_space<vmem>>, %arg1: memref<1x128xf32, #tpu.memory_space<vmem>>, %arg2: memref<256x256xbf16, #tpu.memory_space<vmem>>, %arg3: memref<256x256xbf16, #tpu.memory_space<vmem>>, %arg4: memref<8x128xf32, #tpu.memory_space<vmem>>, %arg5: memref<8x128xf32, #tpu.memory_space<vmem>>) attributes {dimension_semantics = [], scalar_prefetch = 0 : i64, scratch_operands = 0 : i64, tpu.core_type = #tpu.core_type<tc>} {
    %c0 = arith.constant 0 : index
    %c0_0 = arith.constant 0 : index
    %0 = vector.load %arg0[%c0, %c0_0] : memref<8x128xf32, #tpu.memory_space<vmem>>, vector<8x128xf32>
    %c0_1 = arith.constant 0 : index
    %c0_2 = arith.constant 0 : index
    %1 = vector.load %arg1[%c0_1, %c0_2] : memref<1x128xf32, #tpu.memory_space<vmem>>, vector<1x128xf32>
    %2 = vector.shape_cast %1 : vector<1x128xf32> to vector<1x128xf32>
    %3 = vector.broadcast %2 : vector<1x128xf32> to vector<8x128xf32>
    %4 = tpu.concatenate %0, %3 in 1 : vector<8x128xf32>, vector<8x128xf32> -> vector<8x256xf32>
    %cst = arith.constant 0.000000e+00 : f32
    %5 = vector.broadcast %cst : f32 to vector<8x256xf32>
    %cst_3 = arith.constant 0.000000e+00 : bf16
    %6 = vector.broadcast %cst_3 : bf16 to vector<8x256xbf16>
    %c0_4 = arith.constant 0 : index
    %c0_5 = arith.constant 0 : index
    %7 = vector.load %arg2[%c0_4, %c0_5] : memref<256x256xbf16, #tpu.memory_space<vmem>>, vector<256x256xbf16>
    %cst_6 = arith.constant dense<0.000000e+00> : vector<8x256xf32>
    %8 = tpu.matmul %6, %7, %cst_6 {dimension_numbers = #tpu.dot_dimension_numbers<[1], [0], [0], [1], [0, 0, 1, 1], [], []>} : vector<8x256xbf16>, vector<256x256xbf16>, vector<8x256xf32> -> vector<8x256xf32>
    %c0_7 = arith.constant 0 : index
    %c0_8 = arith.constant 0 : index
    %9 = vector.load %arg3[%c0_7, %c0_8] : memref<256x256xbf16, #tpu.memory_space<vmem>>, vector<256x256xbf16>
    %cst_9 = arith.constant dense<0.000000e+00> : vector<8x256xf32>
    %10 = tpu.matmul %6, %9, %cst_9 {dimension_numbers = #tpu.dot_dimension_numbers<[1], [0], [0], [1], [0, 0, 1, 1], [], []>} : vector<8x256xbf16>, vector<256x256xbf16>, vector<8x256xf32> -> vector<8x256xf32>
    %11 = arith.addf %8, %10 : vector<8x256xf32>
    %12 = vector.extract_strided_slice %4 {offsets = [0, 0], sizes = [1, 256], strides = [1, 1]} : vector<8x256xf32> to vector<1x256xf32>
    %13 = vector.broadcast %12 : vector<1x256xf32> to vector<8x256xf32>
    %14 = arith.addf %11, %13 : vector<8x256xf32>
    %cst_10 = arith.constant 0.899999976 : f32
    %15 = vector.broadcast %cst_10 : f32 to vector<8x256xf32>
    %16 = arith.mulf %15, %5 : vector<8x256xf32>
    %17 = arith.addf %16, %14 : vector<8x256xf32>
    %cst_11 = arith.constant 1.000000e+00 : f32
    %18 = vector.broadcast %cst_11 : f32 to vector<8x256xf32>
    %19 = arith.cmpf oge, %17, %18 : vector<8x256xf32>
    %20 = arith.extui %19 : vector<8x256xi1> to vector<8x256xi32>
    %21 = arith.sitofp %20 : vector<8x256xi32> to vector<8x256xf32>
    %cst_12 = arith.constant 0.000000e+00 : f32
    %22 = vector.broadcast %cst_12 : f32 to vector<8x256xf32>
    %23 = arith.select %19, %22, %17 : vector<8x256xi1>, vector<8x256xf32>
    %24 = arith.truncf %21 : vector<8x256xf32> to vector<8x256xbf16>
    %25 = vector.extract_strided_slice %21 {offsets = [0, 0], sizes = [1, 128], strides = [1, 1]} : vector<8x256xf32> to vector<1x128xf32>
    %c0_13 = arith.constant 0 : index
    %c0_14 = arith.constant 0 : index
    %26 = vector.load %arg4[%c0_13, %c0_14] : memref<8x128xf32, #tpu.memory_space<vmem>>, vector<1x128xf32>
    tpu.vector_store %arg4[%c0_13, %c0_14], %25 {strides = array<i32>} : memref<8x128xf32, #tpu.memory_space<vmem>>, vector<1x128xf32>,
    %27 = vector.extract_strided_slice %21 {offsets = [0, 128], sizes = [1, 128], strides = [1, 1]} : vector<8x256xf32> to vector<1x128xf32>
    %c0_15 = arith.constant 0 : index
    %c0_16 = arith.constant 0 : index
    %28 = vector.load %arg5[%c0_15, %c0_16] : memref<8x128xf32, #tpu.memory_space<vmem>>, vector<1x128xf32>
    tpu.vector_store %arg5[%c0_15, %c0_16], %27 {strides = array<i32>} : memref<8x128xf32, #tpu.memory_space<vmem>>, vector<1x128xf32>,
    %c0_17 = arith.constant 0 : index
    %c0_18 = arith.constant 0 : index
    %29 = vector.load %arg2[%c0_17, %c0_18] : memref<256x256xbf16, #tpu.memory_space<vmem>>, vector<256x256xbf16>
    %cst_19 = arith.constant dense<0.000000e+00> : vector<8x256xf32>
    %30 = tpu.matmul %24, %29, %cst_19 {dimension_numbers = #tpu.dot_dimension_numbers<[1], [0], [0], [1], [0, 0, 1, 1], [], []>} : vector<8x256xbf16>, vector<256x256xbf16>, vector<8x256xf32> -> vector<8x256xf32>
    %c0_20 = arith.constant 0 : index
    %c0_21 = arith.constant 0 : index
    %31 = vector.load %arg3[%c0_20, %c0_21] : memref<256x256xbf16, #tpu.memory_space<vmem>>, vector<256x256xbf16>
    %cst_22 = arith.constant dense<0.000000e+00> : vector<8x256xf32>
    %32 = tpu.matmul %24, %31, %cst_22 {dimension_numbers = #tpu.dot_dimension_numbers<[1], [0], [0], [1], [0, 0, 1, 1], [], []>} : vector<8x256xbf16>, vector<256x256xbf16>, vector<8x256xf32> -> vector<8x256xf32>
    %33 = arith.addf %30, %32 : vector<8x256xf32>
    %34 = vector.extract_strided_slice %4 {offsets = [1, 0], sizes = [1, 256], strides = [1, 1]} : vector<8x256xf32> to vector<1x256xf32>
    %35 = vector.broadcast %34 : vector<1x256xf32> to vector<8x256xf32>
    %36 = arith.addf %33, %35 : vector<8x256xf32>
    %cst_23 = arith.constant 0.899999976 : f32
    %37 = vector.broadcast %cst_23 : f32 to vector<8x256xf32>
    %38 = arith.mulf %37, %23 : vector<8x256xf32>
    %39 = arith.addf %38, %36 : vector<8x256xf32>
    %cst_24 = arith.constant 1.000000e+00 : f32
    %40 = vector.broadcast %cst_24 : f32 to vector<8x256xf32>
    %41 = arith.cmpf oge, %39, %40 : vector<8x256xf32>
    %42 = arith.extui %41 : vector<8x256xi1> to vector<8x256xi32>
    %43 = arith.sitofp %42 : vector<8x256xi32> to vector<8x256xf32>
    %cst_25 = arith.constant 0.000000e+00 : f32
    %44 = vector.broadcast %cst_25 : f32 to vector<8x256xf32>
    %45 = arith.select %41, %44, %39 : vector<8x256xi1>, vector<8x256xf32>
    %46 = arith.truncf %43 : vector<8x256xf32> to vector<8x256xbf16>
    %47 = vector.extract_strided_slice %43 {offsets = [0, 0], sizes = [1, 128], strides = [1, 1]} : vector<8x256xf32> to vector<1x128xf32>
    %c1 = arith.constant 1 : index
    %c0_26 = arith.constant 0 : index
    %48 = vector.load %arg4[%c1, %c0_26] : memref<8x128xf32, #tpu.memory_space<vmem>>, vector<1x128xf32>
    tpu.vector_store %arg4[%c1, %c0_26], %47 {strides = array<i32>} : memref<8x128xf32, #tpu.memory_space<vmem>>, vector<1x128xf32>,
    %49 = vector.extract_strided_slice %43 {offsets = [0, 128], sizes = [1, 128], strides = [1, 1]} : vector<8x256xf32> to vector<1x128xf32>
    %c1_27 = arith.constant 1 : index
    %c0_28 = arith.constant 0 : index
    %50 = vector.load %arg5[%c1_27, %c0_28] : memref<8x128xf32, #tpu.memory_space<vmem>>, vector<1x128xf32>
    tpu.vector_store %arg5[%c1_27, %c0_28], %49 {strides = array<i32>} : memref<8x128xf32, #tpu.memory_space<vmem>>, vector<1x128xf32>,
    %c0_29 = arith.constant 0 : index
    %c0_30 = arith.constant 0 : index
    %51 = vector.load %arg2[%c0_29, %c0_30] : memref<256x256xbf16, #tpu.memory_space<vmem>>, vector<256x256xbf16>
    %cst_31 = arith.constant dense<0.000000e+00> : vector<8x256xf32>
    %52 = tpu.matmul %46, %51, %cst_31 {dimension_numbers = #tpu.dot_dimension_numbers<[1], [0], [0], [1], [0, 0, 1, 1], [], []>} : vector<8x256xbf16>, vector<256x256xbf16>, vector<8x256xf32> -> vector<8x256xf32>
    %c0_32 = arith.constant 0 : index
    %c0_33 = arith.constant 0 : index
    %53 = vector.load %arg3[%c0_32, %c0_33] : memref<256x256xbf16, #tpu.memory_space<vmem>>, vector<256x256xbf16>
    %cst_34 = arith.constant dense<0.000000e+00> : vector<8x256xf32>
    %54 = tpu.matmul %46, %53, %cst_34 {dimension_numbers = #tpu.dot_dimension_numbers<[1], [0], [0], [1], [0, 0, 1, 1], [], []>} : vector<8x256xbf16>, vector<256x256xbf16>, vector<8x256xf32> -> vector<8x256xf32>
    %55 = arith.addf %52, %54 : vector<8x256xf32>
    %56 = vector.extract_strided_slice %4 {offsets = [2, 0], sizes = [1, 256], strides = [1, 1]} : vector<8x256xf32> to vector<1x256xf32>
    %57 = vector.broadcast %56 : vector<1x256xf32> to vector<8x256xf32>
    %58 = arith.addf %55, %57 : vector<8x256xf32>
    %cst_35 = arith.constant 0.899999976 : f32
    %59 = vector.broadcast %cst_35 : f32 to vector<8x256xf32>
    %60 = arith.mulf %59, %45 : vector<8x256xf32>
    %61 = arith.addf %60, %58 : vector<8x256xf32>
    %cst_36 = arith.constant 1.000000e+00 : f32
    %62 = vector.broadcast %cst_36 : f32 to vector<8x256xf32>
    %63 = arith.cmpf oge, %61, %62 : vector<8x256xf32>
    %64 = arith.extui %63 : vector<8x256xi1> to vector<8x256xi32>
    %65 = arith.sitofp %64 : vector<8x256xi32> to vector<8x256xf32>
    %cst_37 = arith.constant 0.000000e+00 : f32
    %66 = vector.broadcast %cst_37 : f32 to vector<8x256xf32>
    %67 = arith.select %63, %66, %61 : vector<8x256xi1>, vector<8x256xf32>
    %68 = arith.truncf %65 : vector<8x256xf32> to vector<8x256xbf16>
    %69 = vector.extract_strided_slice %65 {offsets = [0, 0], sizes = [1, 128], strides = [1, 1]} : vector<8x256xf32> to vector<1x128xf32>
    %c2 = arith.constant 2 : index
    %c0_38 = arith.constant 0 : index
    %70 = vector.load %arg4[%c2, %c0_38] : memref<8x128xf32, #tpu.memory_space<vmem>>, vector<1x128xf32>
    tpu.vector_store %arg4[%c2, %c0_38], %69 {strides = array<i32>} : memref<8x128xf32, #tpu.memory_space<vmem>>, vector<1x128xf32>,
    %71 = vector.extract_strided_slice %65 {offsets = [0, 128], sizes = [1, 128], strides = [1, 1]} : vector<8x256xf32> to vector<1x128xf32>
    %c2_39 = arith.constant 2 : index
    %c0_40 = arith.constant 0 : index
    %72 = vector.load %arg5[%c2_39, %c0_40] : memref<8x128xf32, #tpu.memory_space<vmem>>, vector<1x128xf32>
    tpu.vector_store %arg5[%c2_39, %c0_40], %71 {strides = array<i32>} : memref<8x128xf32, #tpu.memory_space<vmem>>, vector<1x128xf32>,
    %c0_41 = arith.constant 0 : index
    %c0_42 = arith.constant 0 : index
    %73 = vector.load %arg2[%c0_41, %c0_42] : memref<256x256xbf16, #tpu.memory_space<vmem>>, vector<256x256xbf16>
    %cst_43 = arith.constant dense<0.000000e+00> : vector<8x256xf32>
    %74 = tpu.matmul %68, %73, %cst_43 {dimension_numbers = #tpu.dot_dimension_numbers<[1], [0], [0], [1], [0, 0, 1, 1], [], []>} : vector<8x256xbf16>, vector<256x256xbf16>, vector<8x256xf32> -> vector<8x256xf32>
    %c0_44 = arith.constant 0 : index
    %c0_45 = arith.constant 0 : index
    %75 = vector.load %arg3[%c0_44, %c0_45] : memref<256x256xbf16, #tpu.memory_space<vmem>>, vector<256x256xbf16>
    %cst_46 = arith.constant dense<0.000000e+00> : vector<8x256xf32>
    %76 = tpu.matmul %68, %75, %cst_46 {dimension_numbers = #tpu.dot_dimension_numbers<[1], [0], [0], [1], [0, 0, 1, 1], [], []>} : vector<8x256xbf16>, vector<256x256xbf16>, vector<8x256xf32> -> vector<8x256xf32>
    %77 = arith.addf %74, %76 : vector<8x256xf32>
    %78 = vector.extract_strided_slice %4 {offsets = [3, 0], sizes = [1, 256], strides = [1, 1]} : vector<8x256xf32> to vector<1x256xf32>
    %79 = vector.broadcast %78 : vector<1x256xf32> to vector<8x256xf32>
    %80 = arith.addf %77, %79 : vector<8x256xf32>
    %cst_47 = arith.constant 0.899999976 : f32
    %81 = vector.broadcast %cst_47 : f32 to vector<8x256xf32>
    %82 = arith.mulf %81, %67 : vector<8x256xf32>
    %83 = arith.addf %82, %80 : vector<8x256xf32>
    %cst_48 = arith.constant 1.000000e+00 : f32
    %84 = vector.broadcast %cst_48 : f32 to vector<8x256xf32>
    %85 = arith.cmpf oge, %83, %84 : vector<8x256xf32>
    %86 = arith.extui %85 : vector<8x256xi1> to vector<8x256xi32>
    %87 = arith.sitofp %86 : vector<8x256xi32> to vector<8x256xf32>
    %cst_49 = arith.constant 0.000000e+00 : f32
    %88 = vector.broadcast %cst_49 : f32 to vector<8x256xf32>
    %89 = arith.select %85, %88, %83 : vector<8x256xi1>, vector<8x256xf32>
    %90 = arith.truncf %87 : vector<8x256xf32> to vector<8x256xbf16>
    %91 = vector.extract_strided_slice %87 {offsets = [0, 0], sizes = [1, 128], strides = [1, 1]} : vector<8x256xf32> to vector<1x128xf32>
    %c3 = arith.constant 3 : index
    %c0_50 = arith.constant 0 : index
    %92 = vector.load %arg4[%c3, %c0_50] : memref<8x128xf32, #tpu.memory_space<vmem>>, vector<1x128xf32>
    tpu.vector_store %arg4[%c3, %c0_50], %91 {strides = array<i32>} : memref<8x128xf32, #tpu.memory_space<vmem>>, vector<1x128xf32>,
    %93 = vector.extract_strided_slice %87 {offsets = [0, 128], sizes = [1, 128], strides = [1, 1]} : vector<8x256xf32> to vector<1x128xf32>
    %c3_51 = arith.constant 3 : index
    %c0_52 = arith.constant 0 : index
    %94 = vector.load %arg5[%c3_51, %c0_52] : memref<8x128xf32, #tpu.memory_space<vmem>>, vector<1x128xf32>
    tpu.vector_store %arg5[%c3_51, %c0_52], %93 {strides = array<i32>} : memref<8x128xf32, #tpu.memory_space<vmem>>, vector<1x128xf32>,
    %c0_53 = arith.constant 0 : index
    %c0_54 = arith.constant 0 : index
    %95 = vector.load %arg2[%c0_53, %c0_54] : memref<256x256xbf16, #tpu.memory_space<vmem>>, vector<256x256xbf16>
    %cst_55 = arith.constant dense<0.000000e+00> : vector<8x256xf32>
    %96 = tpu.matmul %90, %95, %cst_55 {dimension_numbers = #tpu.dot_dimension_numbers<[1], [0], [0], [1], [0, 0, 1, 1], [], []>} : vector<8x256xbf16>, vector<256x256xbf16>, vector<8x256xf32> -> vector<8x256xf32>
    %c0_56 = arith.constant 0 : index
    %c0_57 = arith.constant 0 : index
    %97 = vector.load %arg3[%c0_56, %c0_57] : memref<256x256xbf16, #tpu.memory_space<vmem>>, vector<256x256xbf16>
    %cst_58 = arith.constant dense<0.000000e+00> : vector<8x256xf32>
    %98 = tpu.matmul %90, %97, %cst_58 {dimension_numbers = #tpu.dot_dimension_numbers<[1], [0], [0], [1], [0, 0, 1, 1], [], []>} : vector<8x256xbf16>, vector<256x256xbf16>, vector<8x256xf32> -> vector<8x256xf32>
    %99 = arith.addf %96, %98 : vector<8x256xf32>
    %100 = vector.extract_strided_slice %4 {offsets = [4, 0], sizes = [1, 256], strides = [1, 1]} : vector<8x256xf32> to vector<1x256xf32>
    %101 = vector.broadcast %100 : vector<1x256xf32> to vector<8x256xf32>
    %102 = arith.addf %99, %101 : vector<8x256xf32>
    %cst_59 = arith.constant 0.899999976 : f32
    %103 = vector.broadcast %cst_59 : f32 to vector<8x256xf32>
    %104 = arith.mulf %103, %89 : vector<8x256xf32>
    %105 = arith.addf %104, %102 : vector<8x256xf32>
    %cst_60 = arith.constant 1.000000e+00 : f32
    %106 = vector.broadcast %cst_60 : f32 to vector<8x256xf32>
    %107 = arith.cmpf oge, %105, %106 : vector<8x256xf32>
    %108 = arith.extui %107 : vector<8x256xi1> to vector<8x256xi32>
    %109 = arith.sitofp %108 : vector<8x256xi32> to vector<8x256xf32>
    %cst_61 = arith.constant 0.000000e+00 : f32
    %110 = vector.broadcast %cst_61 : f32 to vector<8x256xf32>
    %111 = arith.select %107, %110, %105 : vector<8x256xi1>, vector<8x256xf32>
    %112 = arith.truncf %109 : vector<8x256xf32> to vector<8x256xbf16>
    %113 = vector.extract_strided_slice %109 {offsets = [0, 0], sizes = [1, 128], strides = [1, 1]} : vector<8x256xf32> to vector<1x128xf32>
    %c4 = arith.constant 4 : index
    %c0_62 = arith.constant 0 : index
    %114 = vector.load %arg4[%c4, %c0_62] : memref<8x128xf32, #tpu.memory_space<vmem>>, vector<1x128xf32>
    tpu.vector_store %arg4[%c4, %c0_62], %113 {strides = array<i32>} : memref<8x128xf32, #tpu.memory_space<vmem>>, vector<1x128xf32>,
    %115 = vector.extract_strided_slice %109 {offsets = [0, 128], sizes = [1, 128], strides = [1, 1]} : vector<8x256xf32> to vector<1x128xf32>
    %c4_63 = arith.constant 4 : index
    %c0_64 = arith.constant 0 : index
    %116 = vector.load %arg5[%c4_63, %c0_64] : memref<8x128xf32, #tpu.memory_space<vmem>>, vector<1x128xf32>
    tpu.vector_store %arg5[%c4_63, %c0_64], %115 {strides = array<i32>} : memref<8x128xf32, #tpu.memory_space<vmem>>, vector<1x128xf32>,
    %c0_65 = arith.constant 0 : index
    %c0_66 = arith.constant 0 : index
    %117 = vector.load %arg2[%c0_65, %c0_66] : memref<256x256xbf16, #tpu.memory_space<vmem>>, vector<256x256xbf16>
    %cst_67 = arith.constant dense<0.000000e+00> : vector<8x256xf32>
    %118 = tpu.matmul %112, %117, %cst_67 {dimension_numbers = #tpu.dot_dimension_numbers<[1], [0], [0], [1], [0, 0, 1, 1], [], []>} : vector<8x256xbf16>, vector<256x256xbf16>, vector<8x256xf32> -> vector<8x256xf32>
    %c0_68 = arith.constant 0 : index
    %c0_69 = arith.constant 0 : index
    %119 = vector.load %arg3[%c0_68, %c0_69] : memref<256x256xbf16, #tpu.memory_space<vmem>>, vector<256x256xbf16>
    %cst_70 = arith.constant dense<0.000000e+00> : vector<8x256xf32>
    %120 = tpu.matmul %112, %119, %cst_70 {dimension_numbers = #tpu.dot_dimension_numbers<[1], [0], [0], [1], [0, 0, 1, 1], [], []>} : vector<8x256xbf16>, vector<256x256xbf16>, vector<8x256xf32> -> vector<8x256xf32>
    %121 = arith.addf %118, %120 : vector<8x256xf32>
    %122 = vector.extract_strided_slice %4 {offsets = [5, 0], sizes = [1, 256], strides = [1, 1]} : vector<8x256xf32> to vector<1x256xf32>
    %123 = vector.broadcast %122 : vector<1x256xf32> to vector<8x256xf32>
    %124 = arith.addf %121, %123 : vector<8x256xf32>
    %cst_71 = arith.constant 0.899999976 : f32
    %125 = vector.broadcast %cst_71 : f32 to vector<8x256xf32>
    %126 = arith.mulf %125, %111 : vector<8x256xf32>
    %127 = arith.addf %126, %124 : vector<8x256xf32>
    %cst_72 = arith.constant 1.000000e+00 : f32
    %128 = vector.broadcast %cst_72 : f32 to vector<8x256xf32>
    %129 = arith.cmpf oge, %127, %128 : vector<8x256xf32>
    %130 = arith.extui %129 : vector<8x256xi1> to vector<8x256xi32>
    %131 = arith.sitofp %130 : vector<8x256xi32> to vector<8x256xf32>
    %cst_73 = arith.constant 0.000000e+00 : f32
    %132 = vector.broadcast %cst_73 : f32 to vector<8x256xf32>
    %133 = arith.select %129, %132, %127 : vector<8x256xi1>, vector<8x256xf32>
    %134 = arith.truncf %131 : vector<8x256xf32> to vector<8x256xbf16>
    %135 = vector.extract_strided_slice %131 {offsets = [0, 0], sizes = [1, 128], strides = [1, 1]} : vector<8x256xf32> to vector<1x128xf32>
    %c5 = arith.constant 5 : index
    %c0_74 = arith.constant 0 : index
    %136 = vector.load %arg4[%c5, %c0_74] : memref<8x128xf32, #tpu.memory_space<vmem>>, vector<1x128xf32>
    tpu.vector_store %arg4[%c5, %c0_74], %135 {strides = array<i32>} : memref<8x128xf32, #tpu.memory_space<vmem>>, vector<1x128xf32>,
    %137 = vector.extract_strided_slice %131 {offsets = [0, 128], sizes = [1, 128], strides = [1, 1]} : vector<8x256xf32> to vector<1x128xf32>
    %c5_75 = arith.constant 5 : index
    %c0_76 = arith.constant 0 : index
    %138 = vector.load %arg5[%c5_75, %c0_76] : memref<8x128xf32, #tpu.memory_space<vmem>>, vector<1x128xf32>
    tpu.vector_store %arg5[%c5_75, %c0_76], %137 {strides = array<i32>} : memref<8x128xf32, #tpu.memory_space<vmem>>, vector<1x128xf32>,
    %c0_77 = arith.constant 0 : index
    %c0_78 = arith.constant 0 : index
    %139 = vector.load %arg2[%c0_77, %c0_78] : memref<256x256xbf16, #tpu.memory_space<vmem>>, vector<256x256xbf16>
    %cst_79 = arith.constant dense<0.000000e+00> : vector<8x256xf32>
    %140 = tpu.matmul %134, %139, %cst_79 {dimension_numbers = #tpu.dot_dimension_numbers<[1], [0], [0], [1], [0, 0, 1, 1], [], []>} : vector<8x256xbf16>, vector<256x256xbf16>, vector<8x256xf32> -> vector<8x256xf32>
    %c0_80 = arith.constant 0 : index
    %c0_81 = arith.constant 0 : index
    %141 = vector.load %arg3[%c0_80, %c0_81] : memref<256x256xbf16, #tpu.memory_space<vmem>>, vector<256x256xbf16>
    %cst_82 = arith.constant dense<0.000000e+00> : vector<8x256xf32>
    %142 = tpu.matmul %134, %141, %cst_82 {dimension_numbers = #tpu.dot_dimension_numbers<[1], [0], [0], [1], [0, 0, 1, 1], [], []>} : vector<8x256xbf16>, vector<256x256xbf16>, vector<8x256xf32> -> vector<8x256xf32>
    %143 = arith.addf %140, %142 : vector<8x256xf32>
    %144 = vector.extract_strided_slice %4 {offsets = [6, 0], sizes = [1, 256], strides = [1, 1]} : vector<8x256xf32> to vector<1x256xf32>
    %145 = vector.broadcast %144 : vector<1x256xf32> to vector<8x256xf32>
    %146 = arith.addf %143, %145 : vector<8x256xf32>
    %cst_83 = arith.constant 0.899999976 : f32
    %147 = vector.broadcast %cst_83 : f32 to vector<8x256xf32>
    %148 = arith.mulf %147, %133 : vector<8x256xf32>
    %149 = arith.addf %148, %146 : vector<8x256xf32>
    %cst_84 = arith.constant 1.000000e+00 : f32
    %150 = vector.broadcast %cst_84 : f32 to vector<8x256xf32>
    %151 = arith.cmpf oge, %149, %150 : vector<8x256xf32>
    %152 = arith.extui %151 : vector<8x256xi1> to vector<8x256xi32>
    %153 = arith.sitofp %152 : vector<8x256xi32> to vector<8x256xf32>
    %cst_85 = arith.constant 0.000000e+00 : f32
    %154 = vector.broadcast %cst_85 : f32 to vector<8x256xf32>
    %155 = arith.select %151, %154, %149 : vector<8x256xi1>, vector<8x256xf32>
    %156 = arith.truncf %153 : vector<8x256xf32> to vector<8x256xbf16>
    %157 = vector.extract_strided_slice %153 {offsets = [0, 0], sizes = [1, 128], strides = [1, 1]} : vector<8x256xf32> to vector<1x128xf32>
    %c6 = arith.constant 6 : index
    %c0_86 = arith.constant 0 : index
    %158 = vector.load %arg4[%c6, %c0_86] : memref<8x128xf32, #tpu.memory_space<vmem>>, vector<1x128xf32>
    tpu.vector_store %arg4[%c6, %c0_86], %157 {strides = array<i32>} : memref<8x128xf32, #tpu.memory_space<vmem>>, vector<1x128xf32>,
    %159 = vector.extract_strided_slice %153 {offsets = [0, 128], sizes = [1, 128], strides = [1, 1]} : vector<8x256xf32> to vector<1x128xf32>
    %c6_87 = arith.constant 6 : index
    %c0_88 = arith.constant 0 : index
    %160 = vector.load %arg5[%c6_87, %c0_88] : memref<8x128xf32, #tpu.memory_space<vmem>>, vector<1x128xf32>
    tpu.vector_store %arg5[%c6_87, %c0_88], %159 {strides = array<i32>} : memref<8x128xf32, #tpu.memory_space<vmem>>, vector<1x128xf32>,
    %c0_89 = arith.constant 0 : index
    %c0_90 = arith.constant 0 : index
    %161 = vector.load %arg2[%c0_89, %c0_90] : memref<256x256xbf16, #tpu.memory_space<vmem>>, vector<256x256xbf16>
    %cst_91 = arith.constant dense<0.000000e+00> : vector<8x256xf32>
    %162 = tpu.matmul %156, %161, %cst_91 {dimension_numbers = #tpu.dot_dimension_numbers<[1], [0], [0], [1], [0, 0, 1, 1], [], []>} : vector<8x256xbf16>, vector<256x256xbf16>, vector<8x256xf32> -> vector<8x256xf32>
    %c0_92 = arith.constant 0 : index
    %c0_93 = arith.constant 0 : index
    %163 = vector.load %arg3[%c0_92, %c0_93] : memref<256x256xbf16, #tpu.memory_space<vmem>>, vector<256x256xbf16>
    %cst_94 = arith.constant dense<0.000000e+00> : vector<8x256xf32>
    %164 = tpu.matmul %156, %163, %cst_94 {dimension_numbers = #tpu.dot_dimension_numbers<[1], [0], [0], [1], [0, 0, 1, 1], [], []>} : vector<8x256xbf16>, vector<256x256xbf16>, vector<8x256xf32> -> vector<8x256xf32>
    %165 = arith.addf %162, %164 : vector<8x256xf32>
    %166 = vector.extract_strided_slice %4 {offsets = [7, 0], sizes = [1, 256], strides = [1, 1]} : vector<8x256xf32> to vector<1x256xf32>
    %167 = vector.broadcast %166 : vector<1x256xf32> to vector<8x256xf32>
    %168 = arith.addf %165, %167 : vector<8x256xf32>
    %cst_95 = arith.constant 0.899999976 : f32
    %169 = vector.broadcast %cst_95 : f32 to vector<8x256xf32>
    %170 = arith.mulf %169, %155 : vector<8x256xf32>
    %171 = arith.addf %170, %168 : vector<8x256xf32>
    %cst_96 = arith.constant 1.000000e+00 : f32
    %172 = vector.broadcast %cst_96 : f32 to vector<8x256xf32>
    %173 = arith.cmpf oge, %171, %172 : vector<8x256xf32>
    %174 = arith.extui %173 : vector<8x256xi1> to vector<8x256xi32>
    %175 = arith.sitofp %174 : vector<8x256xi32> to vector<8x256xf32>
    %176 = vector.extract_strided_slice %175 {offsets = [0, 0], sizes = [1, 128], strides = [1, 1]} : vector<8x256xf32> to vector<1x128xf32>
    %c7 = arith.constant 7 : index
    %c0_97 = arith.constant 0 : index
    %177 = vector.load %arg4[%c7, %c0_97] : memref<8x128xf32, #tpu.memory_space<vmem>>, vector<1x128xf32>
    tpu.vector_store %arg4[%c7, %c0_97], %176 {strides = array<i32>} : memref<8x128xf32, #tpu.memory_space<vmem>>, vector<1x128xf32>,
    %178 = vector.extract_strided_slice %175 {offsets = [0, 128], sizes = [1, 128], strides = [1, 1]} : vector<8x256xf32> to vector<1x128xf32>
    %c7_98 = arith.constant 7 : index
    %c0_99 = arith.constant 0 : index
    %179 = vector.load %arg5[%c7_98, %c0_99] : memref<8x128xf32, #tpu.memory_space<vmem>>, vector<1x128xf32>
    tpu.vector_store %arg5[%c7_98, %c0_99], %178 {strides = array<i32>} : memref<8x128xf32, #tpu.memory_space<vmem>>, vector<1x128xf32>,
    return
  }
}

</mosaic_0001>

<llo_original>
// kernel: tpu_custom_call.1
$region0: #{tpu_custom_call.1}
  #allocation0 [shape = 'u32[]', space=smem, size = 0x4, offset = 0x4, fixed_abs, tag = 'smem constant byte address 0x4 - core index']
  #allocation1 [shape = 'u32[144,128]{1,0:T(1,128)}', space=vmem, size = 0x12000, scoped, tag = 'internal scratch']
  %s0 = inlined_call_operand.hbm [shape: f32[8,128], index: 0, kind: input, shape index: {}]
  %s1 = inlined_call_operand.vmem [shape: f32[1,128], index: 1, kind: input, shape index: {}]
  %s2 = inlined_call_operand.hbm [shape: bf16[256,256], index: 2, kind: input, shape index: {}]
  %s3 = inlined_call_operand.hbm [shape: bf16[256,256], index: 3, kind: input, shape index: {}]
  %s4 = inlined_call_operand.hbm [shape: f32[8,128], index: 4, kind: output, shape index: {0}]
  %s5 = inlined_call_operand.hbm [shape: f32[8,128], index: 5, kind: output, shape index: {1}]
  %6 = xla_tuple %s4, %s5
  %s7 = sld [smem:[#allocation0]]
  $region46: #{tpu_custom_call.1} parent=0
    _
  %s9 = ssub.s32 1, %s7
  %s10 = scalar_select 0, %s9, %s7
  $region1: #{tpu_custom_call.1} parent=0
    #allocation2 [shape = 'u8[4096]{0}', space=vmem, size = 0x1000, scoped, tag = 'input window, operand 0, single buffered']
    #allocation3 [shape = 's32[1]{0}', space=sflag, size = 0x4, scoped, tag = 'scoped memory for tpu_custom_call.1']
    #allocation4 [shape = 's32[1]{0}', space=sflag, size = 0x4, scoped, tag = 'scoped memory for tpu_custom_call.1']
    #allocation5 [shape = 'u8[131072]{0}', space=vmem, size = 0x20000, scoped, tag = 'input window, operand 2, single buffered']
    #allocation6 [shape = 's32[1]{0}', space=sflag, size = 0x4, scoped, tag = 'scoped memory for tpu_custom_call.1']
    #allocation7 [shape = 'u8[131072]{0}', space=vmem, size = 0x20000, scoped, tag = 'input window, operand 3, single buffered']
    #allocation8 [shape = 'u8[4096]{0}', space=vmem, size = 0x1000, scoped, tag = 'output window, operand 0, single buffered']
    #allocation9 [shape = 'u8[4096]{0}', space=vmem, size = 0x1000, scoped, tag = 'output window, operand 1, single buffered']
    #allocation10 [shape = 's32[1]{0}', space=sflag, size = 0x4, scoped, tag = 'scoped memory for tpu_custom_call.1']
    %11 = vsyncpa [#allocation3], 0
    %12 = vsyncpa [#allocation6], 0
    %13 = vsyncpa [#allocation4], 0
    %14 = vsyncpa [#allocation10], 0
    // Predicated region
    $region2: #{tpu_custom_call.1} parent=1 // pred_check
      _
    $region3: #{tpu_custom_call.1} parent=1 // pred_check_branch
      %16 = sbr.rel (0) target = $region5
    $region4: #{tpu_custom_call.1} parent=1 // pred_region
      %s18 = ssub.s32 128, 128
      %19 = vsyncadd [#allocation3], %s18
      %s21 = sshll.u32 [#allocation2], 4
      %s22 = int_to_ptr.vmem [resolvable:$true] %s21
      %24 = dma.hbm_to_vmem [thread:$0]  %s0, 128, %s22, [#allocation3]
    $region5: #{tpu_custom_call.1} parent=1 // pred_fallthru
      _
    // Predicated region
    $region6: #{tpu_custom_call.1} parent=1 // pred_check
      _
    $region7: #{tpu_custom_call.1} parent=1 // pred_check_branch
      %26 = sbr.rel (0) target = $region9
    $region8: #{tpu_custom_call.1} parent=1 // pred_region
      _
    $region9: #{tpu_custom_call.1} parent=1 // pred_fallthru
      _
    // Predicated region
    $region10: #{tpu_custom_call.1} parent=1 // pred_check
      _
    $region11: #{tpu_custom_call.1} parent=1 // pred_check_branch
      %28 = sbr.rel (0) target = $region13
    $region12: #{tpu_custom_call.1} parent=1 // pred_region
      %s30 = ssub.s32 4096, 4096
      %31 = vsyncadd [#allocation6], %s30
      %s32 = sshll.u32 [#allocation5], 4
      %s33 = int_to_ptr.vmem [resolvable:$true] %s32
      %38 = dma.hbm_to_vmem [thread:$0]  %s2, 4096, %s33, [#allocation6], 128, 128, 8
    $region13: #{tpu_custom_call.1} parent=1 // pred_fallthru
      _
    // Predicated region
    $region14: #{tpu_custom_call.1} parent=1 // pred_check
      _
    $region15: #{tpu_custom_call.1} parent=1 // pred_check_branch
      %40 = sbr.rel (0) target = $region17
    $region16: #{tpu_custom_call.1} parent=1 // pred_region
      %s42 = ssub.s32 4096, 4096
      %43 = vsyncadd [#allocation6], %s42
      %s44 = sshll.u32 [#allocation7], 4
      %s45 = int_to_ptr.vmem [resolvable:$true] %s44
      %50 = dma.hbm_to_vmem [thread:$0]  %s3, 4096, %s45, [#allocation6], 128, 128, 8
    $region17: #{tpu_custom_call.1} parent=1 // pred_fallthru
      _
    // Predicated region
    $region18: #{tpu_custom_call.1} parent=1 // pred_check
      _
    $region19: #{tpu_custom_call.1} parent=1 // pred_check_branch
      %52 = sbr.rel (0) target = $region21
    $region20: #{tpu_custom_call.1} parent=1 // pred_region
      %53 = dma.done [#allocation3], 128
    $region21: #{tpu_custom_call.1} parent=1 // pred_fallthru
      _
    // Predicated region
    $region22: #{tpu_custom_call.1} parent=1 // pred_check
      _
    $region23: #{tpu_custom_call.1} parent=1 // pred_check_branch
      %55 = sbr.rel (0) target = $region25
    $region24: #{tpu_custom_call.1} parent=1 // pred_region
      %56 = dma.done [#allocation6], 4096
    $region25: #{tpu_custom_call.1} parent=1 // pred_fallthru
      _
    // Predicated region
    $region26: #{tpu_custom_call.1} parent=1 // pred_check
      _
    $region27: #{tpu_custom_call.1} parent=1 // pred_check_branch
      %58 = sbr.rel (0) target = $region29
    $region28: #{tpu_custom_call.1} parent=1 // pred_region
      %59 = dma.done [#allocation6], 4096
    $region29: #{tpu_custom_call.1} parent=1 // pred_fallthru
      _
    %v61 = vld [vmem:[#allocation2] sm:$0xff]
    %v62 = vld [vmem:[%s1] sm:$0x1]
    %v64 = vlaneseq
    %v65 = vshrl.u32 %v64, 7
    %v66 = vsub.s32 0, %v65
    %v67 = vrot.slane %v62, %v66
    %v69 = vld [vmem:[#allocation5] sm:$0xff]
    %v70 = vld [vmem:[#allocation5 + $0x8] sm:$0xff]
    %v71 = vld [vmem:[#allocation5 + $0x10] sm:$0xff]
    %v72 = vld [vmem:[#allocation5 + $0x18] sm:$0xff]
    %v73 = vld [vmem:[#allocation5 + $0x20] sm:$0xff]
    %v74 = vld [vmem:[#allocation5 + $0x28] sm:$0xff]
    %v75 = vld [vmem:[#allocation5 + $0x30] sm:$0xff]
    %v76 = vld [vmem:[#allocation5 + $0x38] sm:$0xff]
    %v77 = vld [vmem:[#allocation5 + $0x40] sm:$0xff]
    %v78 = vld [vmem:[#allocation5 + $0x48] sm:$0xff]
    %v79 = vld [vmem:[#allocation5 + $0x50] sm:$0xff]
    %v80 = vld [vmem:[#allocation5 + $0x58] sm:$0xff]
    %v81 = vld [vmem:[#allocation5 + $0x60] sm:$0xff]
    %v82 = vld [vmem:[#allocation5 + $0x68] sm:$0xff]
    %v83 = vld [vmem:[#allocation5 + $0x70] sm:$0xff]
    %v84 = vld [vmem:[#allocation5 + $0x78] sm:$0xff]
    %v85 = vld [vmem:[#allocation5 + $0x80] sm:$0xff]
    %v86 = vld [vmem:[#allocation5 + $0x88] sm:$0xff]
    %v87 = vld [vmem:[#allocation5 + $0x90] sm:$0xff]
    %v88 = vld [vmem:[#allocation5 + $0x98] sm:$0xff]
    %v89 = vld [vmem:[#allocation5 + $0xa0] sm:$0xff]
    %v90 = vld [vmem:[#allocation5 + $0xa8] sm:$0xff]
    %v91 = vld [vmem:[#allocation5 + $0xb0] sm:$0xff]
    %v92 = vld [vmem:[#allocation5 + $0xb8] sm:$0xff]
    %v93 = vld [vmem:[#allocation5 + $0xc0] sm:$0xff]
    %v94 = vld [vmem:[#allocation5 + $0xc8] sm:$0xff]
    %v95 = vld [vmem:[#allocation5 + $0xd0] sm:$0xff]
    %v96 = vld [vmem:[#allocation5 + $0xd8] sm:$0xff]
    %v97 = vld [vmem:[#allocation5 + $0xe0] sm:$0xff]
    %v98 = vld [vmem:[#allocation5 + $0xe8] sm:$0xff]
    %v99 = vld [vmem:[#allocation5 + $0xf0] sm:$0xff]
    %v100 = vld [vmem:[#allocation5 + $0xf8] sm:$0xff]
    %v101 = vld [vmem:[#allocation7] sm:$0xff]
    %v102 = vld [vmem:[#allocation7 + $0x8] sm:$0xff]
    %v103 = vld [vmem:[#allocation7 + $0x10] sm:$0xff]
    %v104 = vld [vmem:[#allocation7 + $0x18] sm:$0xff]
    %v105 = vld [vmem:[#allocation7 + $0x20] sm:$0xff]
    %v106 = vld [vmem:[#allocation7 + $0x28] sm:$0xff]
    %v107 = vld [vmem:[#allocation7 + $0x30] sm:$0xff]
    %v108 = vld [vmem:[#allocation7 + $0x38] sm:$0xff]
    %v109 = vld [vmem:[#allocation7 + $0x40] sm:$0xff]
    %v110 = vld [vmem:[#allocation7 + $0x48] sm:$0xff]
    %v111 = vld [vmem:[#allocation7 + $0x50] sm:$0xff]
    %v112 = vld [vmem:[#allocation7 + $0x58] sm:$0xff]
    %v113 = vld [vmem:[#allocation7 + $0x60] sm:$0xff]
    %v114 = vld [vmem:[#allocation7 + $0x68] sm:$0xff]
    %v115 = vld [vmem:[#allocation7 + $0x70] sm:$0xff]
    %v116 = vld [vmem:[#allocation7 + $0x78] sm:$0xff]
    %v117 = vld [vmem:[#allocation7 + $0x80] sm:$0xff]
    %v118 = vld [vmem:[#allocation7 + $0x88] sm:$0xff]
    %v119 = vld [vmem:[#allocation7 + $0x90] sm:$0xff]
    %v120 = vld [vmem:[#allocation7 + $0x98] sm:$0xff]
    %v121 = vld [vmem:[#allocation7 + $0xa0] sm:$0xff]
    %v122 = vld [vmem:[#allocation7 + $0xa8] sm:$0xff]
    %v123 = vld [vmem:[#allocation7 + $0xb0] sm:$0xff]
    %v124 = vld [vmem:[#allocation7 + $0xb8] sm:$0xff]
    %v125 = vld [vmem:[#allocation7 + $0xc0] sm:$0xff]
    %v126 = vld [vmem:[#allocation7 + $0xc8] sm:$0xff]
    %v127 = vld [vmem:[#allocation7 + $0xd0] sm:$0xff]
    %v128 = vld [vmem:[#allocation7 + $0xd8] sm:$0xff]
    %v129 = vld [vmem:[#allocation7 + $0xe0] sm:$0xff]
    %v130 = vld [vmem:[#allocation7 + $0xe8] sm:$0xff]
    %v131 = vld [vmem:[#allocation7 + $0xf0] sm:$0xff]
    %v132 = vld [vmem:[#allocation7 + $0xf8] sm:$0xff]
    %v165 = vunpack.c.l.b16 %v101
    %v166 = vunpack.c.h.b16 %v101
    %v167 = vunpack.c.l.b16 %v102
    %v168 = vunpack.c.h.b16 %v102
    %v169 = vunpack.c.l.b16 %v103
    %v170 = vunpack.c.h.b16 %v103
    %v171 = vunpack.c.l.b16 %v104
    %v172 = vunpack.c.h.b16 %v104
    %v173 = vunpack.c.l.b16 %v105
    %v174 = vunpack.c.h.b16 %v105
    %v175 = vunpack.c.l.b16 %v106
    %v176 = vunpack.c.h.b16 %v106
    %v177 = vunpack.c.l.b16 %v107
    %v178 = vunpack.c.h.b16 %v107
    %v179 = vunpack.c.l.b16 %v108
    %v180 = vunpack.c.h.b16 %v108
    %v181 = vunpack.c.l.b16 %v109
    %v182 = vunpack.c.h.b16 %v109
    %v183 = vunpack.c.l.b16 %v110
    %v184 = vunpack.c.h.b16 %v110
    %v185 = vunpack.c.l.b16 %v111
    %v186 = vunpack.c.h.b16 %v111
    %v187 = vunpack.c.l.b16 %v112
    %v188 = vunpack.c.h.b16 %v112
    %v189 = vunpack.c.l.b16 %v113
    %v190 = vunpack.c.h.b16 %v113
    %v191 = vunpack.c.l.b16 %v114
    %v192 = vunpack.c.h.b16 %v114
    %v193 = vunpack.c.l.b16 %v115
    %v194 = vunpack.c.h.b16 %v115
    %v195 = vunpack.c.l.b16 %v116
    %v196 = vunpack.c.h.b16 %v116
    %v197 = vunpack.c.l.b16 %v117
    %v198 = vunpack.c.h.b16 %v117
    %v199 = vunpack.c.l.b16 %v118
    %v200 = vunpack.c.h.b16 %v118
    %v201 = vunpack.c.l.b16 %v119
    %v202 = vunpack.c.h.b16 %v119
    %v203 = vunpack.c.l.b16 %v120
    %v204 = vunpack.c.h.b16 %v120
    %v205 = vunpack.c.l.b16 %v121
    %v206 = vunpack.c.h.b16 %v121
    %v207 = vunpack.c.l.b16 %v122
    %v208 = vunpack.c.h.b16 %v122
    %v209 = vunpack.c.l.b16 %v123
    %v210 = vunpack.c.h.b16 %v123
    %v211 = vunpack.c.l.b16 %v124
    %v212 = vunpack.c.h.b16 %v124
    %v213 = vunpack.c.l.b16 %v125
    %v214 = vunpack.c.h.b16 %v125
    %v215 = vunpack.c.l.b16 %v126
    %v216 = vunpack.c.h.b16 %v126
    %v217 = vunpack.c.l.b16 %v127
    %v218 = vunpack.c.h.b16 %v127
    %v219 = vunpack.c.l.b16 %v128
    %v220 = vunpack.c.h.b16 %v128
    %v221 = vunpack.c.l.b16 %v129
    %v222 = vunpack.c.h.b16 %v129
    %v223 = vunpack.c.l.b16 %v130
    %v224 = vunpack.c.h.b16 %v130
    %v225 = vunpack.c.l.b16 %v131
    %v226 = vunpack.c.h.b16 %v131
    %v227 = vunpack.c.l.b16 %v132
    %v228 = vunpack.c.h.b16 %v132
    %v229 = vpack.c.b16 %v167, %v165
    %v230 = vpack.c.b16 %v168, %v166
    %v231 = vpack.c.b16 %v171, %v169
    %v232 = vpack.c.b16 %v172, %v170
    %v233 = vpack.c.b16 %v175, %v173
    %v234 = vpack.c.b16 %v176, %v174
    %v235 = vpack.c.b16 %v179, %v177
    %v236 = vpack.c.b16 %v180, %v178
    %v237 = vpack.c.b16 %v183, %v181
    %v238 = vpack.c.b16 %v184, %v182
    %v239 = vpack.c.b16 %v187, %v185
    %v240 = vpack.c.b16 %v188, %v186
    %v241 = vpack.c.b16 %v191, %v189
    %v242 = vpack.c.b16 %v192, %v190
    %v243 = vpack.c.b16 %v195, %v193
    %v244 = vpack.c.b16 %v196, %v194
    %v245 = vpack.c.b16 %v199, %v197
    %v246 = vpack.c.b16 %v200, %v198
    %v247 = vpack.c.b16 %v203, %v201
    %v248 = vpack.c.b16 %v204, %v202
    %v249 = vpack.c.b16 %v207, %v205
    %v250 = vpack.c.b16 %v208, %v206
    %v251 = vpack.c.b16 %v211, %v209
    %v252 = vpack.c.b16 %v212, %v210
    %v253 = vpack.c.b16 %v215, %v213
    %v254 = vpack.c.b16 %v216, %v214
    %v255 = vpack.c.b16 %v219, %v217
    %v256 = vpack.c.b16 %v220, %v218
    %v257 = vpack.c.b16 %v223, %v221
    %v258 = vpack.c.b16 %v224, %v222
    %v259 = vpack.c.b16 %v227, %v225
    %v260 = vpack.c.b16 %v228, %v226
    %293 = vmatprep.subr.bf16.mxu0 %v244
    %294 = vmatpush1.bf16.msra.mxu0 %v243
    %295 = vmatprep.subr.bf16.mxu0 %v242
    %296 = vmatpush1.bf16.msra.mxu0 %v241
    %297 = vmatprep.subr.bf16.mxu0 %v240
    %298 = vmatpush1.bf16.msra.mxu0 %v239
    %299 = vmatprep.subr.bf16.mxu0 %v238
    %300 = vmatpush1.bf16.msra.mxu0 %v237
    %301 = vmatprep.subr.bf16.mxu0 %v236
    %302 = vmatpush1.bf16.msra.mxu0 %v235
    %303 = vmatprep.subr.bf16.mxu0 %v234
    %304 = vmatpush1.bf16.msra.mxu0 %v233
    %305 = vmatprep.subr.bf16.mxu0 %v232
    %306 = vmatpush1.bf16.msra.mxu0 %v231
    %307 = vmatprep.subr.bf16.mxu0 %v230
    %308 = vmatpush1.bf16.msra.mxu0 %v229
    %309 = vmatprep.subr.bf16.mxu0 %v260
    %310 = vmatpush2.bf16.msra.mxu0 %v259
    %311 = vmatprep.subr.bf16.mxu0 %v258
    %312 = vmatpush2.bf16.msra.mxu0 %v257
    %313 = vmatprep.subr.bf16.mxu0 %v256
    %314 = vmatpush2.bf16.msra.mxu0 %v255
    %315 = vmatprep.subr.bf16.mxu0 %v254
    %316 = vmatpush2.bf16.msra.mxu0 %v253
    %317 = vmatprep.subr.bf16.mxu0 %v252
    %318 = vmatpush2.bf16.msra.mxu0 %v251
    %319 = vmatprep.subr.bf16.mxu0 %v250
    %320 = vmatpush2.bf16.msra.mxu0 %v249
    %321 = vmatprep.subr.bf16.mxu0 %v248
    %322 = vmatpush2.bf16.msra.mxu0 %v247
    %323 = vmatprep.subr.bf16.mxu0 %v246
    %324 = vmatpush2.bf16.msra.mxu0 %v245
    %325 = vmatprep.mubr.bf16.mxu0 0
    %326 = vmatmul.mubr.bf16.gmra.mxu0 0
    %v327 = vpop.f32.mrf.mxu0
    %v328 = vadd.f32 0.0, %v327
    %v329 = vpop.f32.mrf.mxu0
    %v330 = vadd.f32 0.0, %v329
    %v331 = vpop.f32.mrf.mxu0
    %v332 = vpop.f32.mrf.mxu0
    %333 = vdwg.mxu0
    %v366 = vunpack.c.l.b16 %v69
    %v367 = vunpack.c.h.b16 %v69
    %v368 = vunpack.c.l.b16 %v70
    %v369 = vunpack.c.h.b16 %v70
    %v370 = vunpack.c.l.b16 %v71
    %v371 = vunpack.c.h.b16 %v71
    %v372 = vunpack.c.l.b16 %v72
    %v373 = vunpack.c.h.b16 %v72
    %v374 = vunpack.c.l.b16 %v73
    %v375 = vunpack.c.h.b16 %v73
    %v376 = vunpack.c.l.b16 %v74
    %v377 = vunpack.c.h.b16 %v74
    %v378 = vunpack.c.l.b16 %v75
    %v379 = vunpack.c.h.b16 %v75
    %v380 = vunpack.c.l.b16 %v76
    %v381 = vunpack.c.h.b16 %v76
    %v382 = vunpack.c.l.b16 %v77
    %v383 = vunpack.c.h.b16 %v77
    %v384 = vunpack.c.l.b16 %v78
    %v385 = vunpack.c.h.b16 %v78
    %v386 = vunpack.c.l.b16 %v79
    %v387 = vunpack.c.h.b16 %v79
    %v388 = vunpack.c.l.b16 %v80
    %v389 = vunpack.c.h.b16 %v80
    %v390 = vunpack.c.l.b16 %v81
    %v391 = vunpack.c.h.b16 %v81
    %v392 = vunpack.c.l.b16 %v82
    %v393 = vunpack.c.h.b16 %v82
    %v394 = vunpack.c.l.b16 %v83
    %v395 = vunpack.c.h.b16 %v83
    %v396 = vunpack.c.l.b16 %v84
    %v397 = vunpack.c.h.b16 %v84
    %v398 = vunpack.c.l.b16 %v85
    %v399 = vunpack.c.h.b16 %v85
    %v400 = vunpack.c.l.b16 %v86
    %v401 = vunpack.c.h.b16 %v86
    %v402 = vunpack.c.l.b16 %v87
    %v403 = vunpack.c.h.b16 %v87
    %v404 = vunpack.c.l.b16 %v88
    %v405 = vunpack.c.h.b16 %v88
    %v406 = vunpack.c.l.b16 %v89
    %v407 = vunpack.c.h.b16 %v89
    %v408 = vunpack.c.l.b16 %v90
    %v409 = vunpack.c.h.b16 %v90
    %v410 = vunpack.c.l.b16 %v91
    %v411 = vunpack.c.h.b16 %v91
    %v412 = vunpack.c.l.b16 %v92
    %v413 = vunpack.c.h.b16 %v92
    %v414 = vunpack.c.l.b16 %v93
    %v415 = vunpack.c.h.b16 %v93
    %v416 = vunpack.c.l.b16 %v94
    %v417 = vunpack.c.h.b16 %v94
    %v418 = vunpack.c.l.b16 %v95
    %v419 = vunpack.c.h.b16 %v95
    %v420 = vunpack.c.l.b16 %v96
    %v421 = vunpack.c.h.b16 %v96
    %v422 = vunpack.c.l.b16 %v97
    %v423 = vunpack.c.h.b16 %v97
    %v424 = vunpack.c.l.b16 %v98
    %v425 = vunpack.c.h.b16 %v98
    %v426 = vunpack.c.l.b16 %v99
    %v427 = vunpack.c.h.b16 %v99
    %v428 = vunpack.c.l.b16 %v100
    %v429 = vunpack.c.h.b16 %v100
    %v430 = vpack.c.b16 %v368, %v366
    %v431 = vpack.c.b16 %v369, %v367
    %v432 = vpack.c.b16 %v372, %v370
    %v433 = vpack.c.b16 %v373, %v371
    %v434 = vpack.c.b16 %v376, %v374
    %v435 = vpack.c.b16 %v377, %v375
    %v436 = vpack.c.b16 %v380, %v378
    %v437 = vpack.c.b16 %v381, %v379
    %v438 = vpack.c.b16 %v384, %v382
    %v439 = vpack.c.b16 %v385, %v383
    %v440 = vpack.c.b16 %v388, %v386
    %v441 = vpack.c.b16 %v389, %v387
    %v442 = vpack.c.b16 %v392, %v390
    %v443 = vpack.c.b16 %v393, %v391
    %v444 = vpack.c.b16 %v396, %v394
    %v445 = vpack.c.b16 %v397, %v395
    %v446 = vpack.c.b16 %v400, %v398
    %v447 = vpack.c.b16 %v401, %v399
    %v448 = vpack.c.b16 %v404, %v402
    %v449 = vpack.c.b16 %v405, %v403
    %v450 = vpack.c.b16 %v408, %v406
    %v451 = vpack.c.b16 %v409, %v407
    %v452 = vpack.c.b16 %v412, %v410
    %v453 = vpack.c.b16 %v413, %v411
    %v454 = vpack.c.b16 %v416, %v414
    %v455 = vpack.c.b16 %v417, %v415
    %v456 = vpack.c.b16 %v420, %v418
    %v457 = vpack.c.b16 %v421, %v419
    %v458 = vpack.c.b16 %v424, %v422
    %v459 = vpack.c.b16 %v425, %v423
    %v460 = vpack.c.b16 %v428, %v426
    %v461 = vpack.c.b16 %v429, %v427
    %494 = vmatprep.subr.bf16.mxu0 %v445
    %495 = vmatpush1.bf16.msra.mxu0 %v444
    %496 = vmatprep.subr.bf16.mxu0 %v443
    %497 = vmatpush1.bf16.msra.mxu0 %v442
    %498 = vmatprep.subr.bf16.mxu0 %v441
    %499 = vmatpush1.bf16.msra.mxu0 %v440
    %500 = vmatprep.subr.bf16.mxu0 %v439
    %501 = vmatpush1.bf16.msra.mxu0 %v438
    %502 = vmatprep.subr.bf16.mxu0 %v437
    %503 = vmatpush1.bf16.msra.mxu0 %v436
    %504 = vmatprep.subr.bf16.mxu0 %v435
    %505 = vmatpush1.bf16.msra.mxu0 %v434
    %506 = vmatprep.subr.bf16.mxu0 %v433
    %507 = vmatpush1.bf16.msra.mxu0 %v432
    %508 = vmatprep.subr.bf16.mxu0 %v431
    %509 = vmatpush1.bf16.msra.mxu0 %v430
    %510 = vmatprep.subr.bf16.mxu0 %v461
    %511 = vmatpush2.bf16.msra.mxu0 %v460
    %512 = vmatprep.subr.bf16.mxu0 %v459
    %513 = vmatpush2.bf16.msra.mxu0 %v458
    %514 = vmatprep.subr.bf16.mxu0 %v457
    %515 = vmatpush2.bf16.msra.mxu0 %v456
    %516 = vmatprep.subr.bf16.mxu0 %v455
    %517 = vmatpush2.bf16.msra.mxu0 %v454
    %518 = vmatprep.subr.bf16.mxu0 %v453
    %519 = vmatpush2.bf16.msra.mxu0 %v452
    %520 = vmatprep.subr.bf16.mxu0 %v451
    %521 = vmatpush2.bf16.msra.mxu0 %v450
    %522 = vmatprep.subr.bf16.mxu0 %v449
    %523 = vmatpush2.bf16.msra.mxu0 %v448
    %524 = vmatprep.subr.bf16.mxu0 %v447
    %525 = vmatpush2.bf16.msra.mxu0 %v446
    %526 = vmatprep.mubr.bf16.mxu0 0
    %527 = vmatmul.mubr.bf16.gmra.mxu0 0
    %v528 = vpop.f32.mrf.mxu0
    %v529 = vadd.f32 %v328, %v528
    %v530 = vpop.f32.mrf.mxu0
    %v531 = vadd.f32 %v330, %v530
    %v532 = vpop.f32.mrf.mxu0
    %v533 = vpop.f32.mrf.mxu0
    %534 = vdwg.mxu0
    %v535 = vlaneseq
    %v536 = vshrl.u32 %v535, 7
    %v537 = vsub.s32 0, %v536
    %v538 = vrot.slane %v61, %v537
    %v539 = vlaneseq
    %v540 = vshrl.u32 %v539, 7
    %v541 = vsub.s32 0, %v540
    %v542 = vrot.slane %v67, %v541
    %v543 = vadd.f32 %v529, %v538
    %v544 = vadd.f32 %v531, %v542
    %v545 = vadd.f32 %v543, 0.0
    %v546 = vadd.f32 %v544, 0.0
    %vm547 = vcmp.ge.f32.partialorder %v545, 1.0
    %vm548 = vcmp.ge.f32.partialorder %v546, 1.0
    %v549 = vsel %vm547, 1, 0
    %v550 = vsel %vm548, 1, 0
    %v551 = vcvt.s32.f32 %v549
    %v552 = vcvt.s32.f32 %v550
    %v553 = vsel %vm547, 0.0, %v545
    %v554 = vsel %vm548, 0.0, %v546
    %v555 = vpack.c.bf16 %v551, %v551
    %v556 = vpack.c.bf16 %v552, %v552
    %557 = vst [vmem:[#allocation8] sm:$0x1] %v551
    %558 = vst [vmem:[#allocation9] sm:$0x1] %v552
    %v559 = vld [vmem:[#allocation5] sm:$0xff]
    %v560 = vld [vmem:[#allocation5 + $0x8] sm:$0xff]
    %v561 = vld [vmem:[#allocation5 + $0x10] sm:$0xff]
    %v562 = vld [vmem:[#allocation5 + $0x18] sm:$0xff]
    %v563 = vld [vmem:[#allocation5 + $0x20] sm:$0xff]
    %v564 = vld [vmem:[#allocation5 + $0x28] sm:$0xff]
    %v565 = vld [vmem:[#allocation5 + $0x30] sm:$0xff]
    %v566 = vld [vmem:[#allocation5 + $0x38] sm:$0xff]
    %v567 = vld [vmem:[#allocation5 + $0x40] sm:$0xff]
    %v568 = vld [vmem:[#allocation5 + $0x48] sm:$0xff]
    %v569 = vld [vmem:[#allocation5 + $0x50] sm:$0xff]
    %v570 = vld [vmem:[#allocation5 + $0x58] sm:$0xff]
    %v571 = vld [vmem:[#allocation5 + $0x60] sm:$0xff]
    %v572 = vld [vmem:[#allocation5 + $0x68] sm:$0xff]
    %v573 = vld [vmem:[#allocation5 + $0x70] sm:$0xff]
    %v574 = vld [vmem:[#allocation5 + $0x78] sm:$0xff]
    %v575 = vld [vmem:[#allocation5 + $0x80] sm:$0xff]
    %v576 = vld [vmem:[#allocation5 + $0x88] sm:$0xff]
    %v577 = vld [vmem:[#allocation5 + $0x90] sm:$0xff]
    %v578 = vld [vmem:[#allocation5 + $0x98] sm:$0xff]
    %v579 = vld [vmem:[#allocation5 + $0xa0] sm:$0xff]
    %v580 = vld [vmem:[#allocation5 + $0xa8] sm:$0xff]
    %v581 = vld [vmem:[#allocation5 + $0xb0] sm:$0xff]
    %v582 = vld [vmem:[#allocation5 + $0xb8] sm:$0xff]
    %v583 = vld [vmem:[#allocation5 + $0xc0] sm:$0xff]
    %v584 = vld [vmem:[#allocation5 + $0xc8] sm:$0xff]
    %v585 = vld [vmem:[#allocation5 + $0xd0] sm:$0xff]
    %v586 = vld [vmem:[#allocation5 + $0xd8] sm:$0xff]
    %v587 = vld [vmem:[#allocation5 + $0xe0] sm:$0xff]
    %v588 = vld [vmem:[#allocation5 + $0xe8] sm:$0xff]
    %v589 = vld [vmem:[#allocation5 + $0xf0] sm:$0xff]
    %v590 = vld [vmem:[#allocation5 + $0xf8] sm:$0xff]
    %v591 = vld [vmem:[#allocation7] sm:$0xff]
    %v592 = vld [vmem:[#allocation7 + $0x8] sm:$0xff]
    %v593 = vld [vmem:[#allocation7 + $0x10] sm:$0xff]
    %v594 = vld [vmem:[#allocation7 + $0x18] sm:$0xff]
    %v595 = vld [vmem:[#allocation7 + $0x20] sm:$0xff]
    %v596 = vld [vmem:[#allocation7 + $0x28] sm:$0xff]
    %v597 = vld [vmem:[#allocation7 + $0x30] sm:$0xff]
    %v598 = vld [vmem:[#allocation7 + $0x38] sm:$0xff]
    %v599 = vld [vmem:[#allocation7 + $0x40] sm:$0xff]
    %v600 = vld [vmem:[#allocation7 + $0x48] sm:$0xff]
    %v601 = vld [vmem:[#allocation7 + $0x50] sm:$0xff]
    %v602 = vld [vmem:[#allocation7 + $0x58] sm:$0xff]
    %v603 = vld [vmem:[#allocation7 + $0x60] sm:$0xff]
    %v604 = vld [vmem:[#allocation7 + $0x68] sm:$0xff]
    %v605 = vld [vmem:[#allocation7 + $0x70] sm:$0xff]
    %v606 = vld [vmem:[#allocation7 + $0x78] sm:$0xff]
    %v607 = vld [vmem:[#allocation7 + $0x80] sm:$0xff]
    %v608 = vld [vmem:[#allocation7 + $0x88] sm:$0xff]
    %v609 = vld [vmem:[#allocation7 + $0x90] sm:$0xff]
    %v610 = vld [vmem:[#allocation7 + $0x98] sm:$0xff]
    %v611 = vld [vmem:[#allocation7 + $0xa0] sm:$0xff]
    %v612 = vld [vmem:[#allocation7 + $0xa8] sm:$0xff]
    %v613 = vld [vmem:[#allocation7 + $0xb0] sm:$0xff]
    %v614 = vld [vmem:[#allocation7 + $0xb8] sm:$0xff]
    %v615 = vld [vmem:[#allocation7 + $0xc0] sm:$0xff]
    %v616 = vld [vmem:[#allocation7 + $0xc8] sm:$0xff]
    %v617 = vld [vmem:[#allocation7 + $0xd0] sm:$0xff]
    %v618 = vld [vmem:[#allocation7 + $0xd8] sm:$0xff]
    %v619 = vld [vmem:[#allocation7 + $0xe0] sm:$0xff]
    %v620 = vld [vmem:[#allocation7 + $0xe8] sm:$0xff]
    %v621 = vld [vmem:[#allocation7 + $0xf0] sm:$0xff]
    %v622 = vld [vmem:[#allocation7 + $0xf8] sm:$0xff]
    %v655 = vunpack.c.l.b16 %v591
    %v656 = vunpack.c.h.b16 %v591
    %v657 = vunpack.c.l.b16 %v592
    %v658 = vunpack.c.h.b16 %v592
    %v659 = vunpack.c.l.b16 %v593
    %v660 = vunpack.c.h.b16 %v593
    %v661 = vunpack.c.l.b16 %v594
    %v662 = vunpack.c.h.b16 %v594
    %v663 = vunpack.c.l.b16 %v595
    %v664 = vunpack.c.h.b16 %v595
    %v665 = vunpack.c.l.b16 %v596
    %v666 = vunpack.c.h.b16 %v596
    %v667 = vunpack.c.l.b16 %v597
    %v668 = vunpack.c.h.b16 %v597
    %v669 = vunpack.c.l.b16 %v598
    %v670 = vunpack.c.h.b16 %v598
    %v671 = vunpack.c.l.b16 %v599
    %v672 = vunpack.c.h.b16 %v599
    %v673 = vunpack.c.l.b16 %v600
    %v674 = vunpack.c.h.b16 %v600
    %v675 = vunpack.c.l.b16 %v601
    %v676 = vunpack.c.h.b16 %v601
    %v677 = vunpack.c.l.b16 %v602
    %v678 = vunpack.c.h.b16 %v602
    %v679 = vunpack.c.l.b16 %v603
    %v680 = vunpack.c.h.b16 %v603
    %v681 = vunpack.c.l.b16 %v604
    %v682 = vunpack.c.h.b16 %v604
    %v683 = vunpack.c.l.b16 %v605
    %v684 = vunpack.c.h.b16 %v605
    %v685 = vunpack.c.l.b16 %v606
    %v686 = vunpack.c.h.b16 %v606
    %v687 = vunpack.c.l.b16 %v607
    %v688 = vunpack.c.h.b16 %v607
    %v689 = vunpack.c.l.b16 %v608
    %v690 = vunpack.c.h.b16 %v608
    %v691 = vunpack.c.l.b16 %v609
    %v692 = vunpack.c.h.b16 %v609
    %v693 = vunpack.c.l.b16 %v610
    %v694 = vunpack.c.h.b16 %v610
    %v695 = vunpack.c.l.b16 %v611
    %v696 = vunpack.c.h.b16 %v611
    %v697 = vunpack.c.l.b16 %v612
    %v698 = vunpack.c.h.b16 %v612
    %v699 = vunpack.c.l.b16 %v613
    %v700 = vunpack.c.h.b16 %v613
    %v701 = vunpack.c.l.b16 %v614
    %v702 = vunpack.c.h.b16 %v614
    %v703 = vunpack.c.l.b16 %v615
    %v704 = vunpack.c.h.b16 %v615
    %v705 = vunpack.c.l.b16 %v616
    %v706 = vunpack.c.h.b16 %v616
    %v707 = vunpack.c.l.b16 %v617
    %v708 = vunpack.c.h.b16 %v617
    %v709 = vunpack.c.l.b16 %v618
    %v710 = vunpack.c.h.b16 %v618
    %v711 = vunpack.c.l.b16 %v619
    %v712 = vunpack.c.h.b16 %v619
    %v713 = vunpack.c.l.b16 %v620
    %v714 = vunpack.c.h.b16 %v620
    %v715 = vunpack.c.l.b16 %v621
    %v716 = vunpack.c.h.b16 %v621
    %v717 = vunpack.c.l.b16 %v622
    %v718 = vunpack.c.h.b16 %v622
    %v719 = vpack.c.b16 %v657, %v655
    %v720 = vpack.c.b16 %v658, %v656
    %v721 = vpack.c.b16 %v661, %v659
    %v722 = vpack.c.b16 %v662, %v660
    %v723 = vpack.c.b16 %v665, %v663
    %v724 = vpack.c.b16 %v666, %v664
    %v725 = vpack.c.b16 %v669, %v667
    %v726 = vpack.c.b16 %v670, %v668
    %v727 = vpack.c.b16 %v673, %v671
    %v728 = vpack.c.b16 %v674, %v672
    %v729 = vpack.c.b16 %v677, %v675
    %v730 = vpack.c.b16 %v678, %v676
    %v731 = vpack.c.b16 %v681, %v679
    %v732 = vpack.c.b16 %v682, %v680
    %v733 = vpack.c.b16 %v685, %v683
    %v734 = vpack.c.b16 %v686, %v684
    %v735 = vpack.c.b16 %v689, %v687
    %v736 = vpack.c.b16 %v690, %v688
    %v737 = vpack.c.b16 %v693, %v691
    %v738 = vpack.c.b16 %v694, %v692
    %v739 = vpack.c.b16 %v697, %v695
    %v740 = vpack.c.b16 %v698, %v696
    %v741 = vpack.c.b16 %v701, %v699
    %v742 = vpack.c.b16 %v702, %v700
    %v743 = vpack.c.b16 %v705, %v703
    %v744 = vpack.c.b16 %v706, %v704
    %v745 = vpack.c.b16 %v709, %v707
    %v746 = vpack.c.b16 %v710, %v708
    %v747 = vpack.c.b16 %v713, %v711
    %v748 = vpack.c.b16 %v714, %v712
    %v749 = vpack.c.b16 %v717, %v715
    %v750 = vpack.c.b16 %v718, %v716
    %783 = vmatprep.subr.bf16.mxu0 %v734
    %784 = vmatpush1.bf16.msra.mxu0 %v733
    %785 = vmatprep.subr.bf16.mxu0 %v732
    %786 = vmatpush1.bf16.msra.mxu0 %v731
    %787 = vmatprep.subr.bf16.mxu0 %v730
    %788 = vmatpush1.bf16.msra.mxu0 %v729
    %789 = vmatprep.subr.bf16.mxu0 %v728
    %790 = vmatpush1.bf16.msra.mxu0 %v727
    %791 = vmatprep.subr.bf16.mxu0 %v726
    %792 = vmatpush1.bf16.msra.mxu0 %v725
    %793 = vmatprep.subr.bf16.mxu0 %v724
    %794 = vmatpush1.bf16.msra.mxu0 %v723
    %795 = vmatprep.subr.bf16.mxu0 %v722
    %796 = vmatpush1.bf16.msra.mxu0 %v721
    %797 = vmatprep.subr.bf16.mxu0 %v720
    %798 = vmatpush1.bf16.msra.mxu0 %v719
    %799 = vmatprep.subr.bf16.mxu0 %v750
    %800 = vmatpush2.bf16.msra.mxu0 %v749
    %801 = vmatprep.subr.bf16.mxu0 %v748
    %802 = vmatpush2.bf16.msra.mxu0 %v747
    %803 = vmatprep.subr.bf16.mxu0 %v746
    %804 = vmatpush2.bf16.msra.mxu0 %v745
    %805 = vmatprep.subr.bf16.mxu0 %v744
    %806 = vmatpush2.bf16.msra.mxu0 %v743
    %807 = vmatprep.subr.bf16.mxu0 %v742
    %808 = vmatpush2.bf16.msra.mxu0 %v741
    %809 = vmatprep.subr.bf16.mxu0 %v740
    %810 = vmatpush2.bf16.msra.mxu0 %v739
    %811 = vmatprep.subr.bf16.mxu0 %v738
    %812 = vmatpush2.bf16.msra.mxu0 %v737
    %813 = vmatprep.subr.bf16.mxu0 %v736
    %814 = vmatpush2.bf16.msra.mxu0 %v735
    %815 = vmatprep.mubr.bf16.mxu0 %v556
    %816 = vmatmul.mubr.bf16.gmra.mxu0 %v555
    %v817 = vpop.f32.mrf.mxu0
    %v818 = vadd.f32 0.0, %v817
    %v819 = vpop.f32.mrf.mxu0
    %v820 = vadd.f32 0.0, %v819
    %v821 = vpop.f32.mrf.mxu0
    %v822 = vpop.f32.mrf.mxu0
    %823 = vdwg.mxu0
    %v856 = vunpack.c.l.b16 %v559
    %v857 = vunpack.c.h.b16 %v559
    %v858 = vunpack.c.l.b16 %v560
    %v859 = vunpack.c.h.b16 %v560
    %v860 = vunpack.c.l.b16 %v561
    %v861 = vunpack.c.h.b16 %v561
    %v862 = vunpack.c.l.b16 %v562
    %v863 = vunpack.c.h.b16 %v562
    %v864 = vunpack.c.l.b16 %v563
    %v865 = vunpack.c.h.b16 %v563
    %v866 = vunpack.c.l.b16 %v564
    %v867 = vunpack.c.h.b16 %v564
    %v868 = vunpack.c.l.b16 %v565
    %v869 = vunpack.c.h.b16 %v565
    %v870 = vunpack.c.l.b16 %v566
    %v871 = vunpack.c.h.b16 %v566
    %v872 = vunpack.c.l.b16 %v567
    %v873 = vunpack.c.h.b16 %v567
    %v874 = vunpack.c.l.b16 %v568
    %v875 = vunpack.c.h.b16 %v568
    %v876 = vunpack.c.l.b16 %v569
    %v877 = vunpack.c.h.b16 %v569
    %v878 = vunpack.c.l.b16 %v570
    %v879 = vunpack.c.h.b16 %v570
    %v880 = vunpack.c.l.b16 %v571
    %v881 = vunpack.c.h.b16 %v571
    %v882 = vunpack.c.l.b16 %v572
    %v883 = vunpack.c.h.b16 %v572
    %v884 = vunpack.c.l.b16 %v573
    %v885 = vunpack.c.h.b16 %v573
    %v886 = vunpack.c.l.b16 %v574
    %v887 = vunpack.c.h.b16 %v574
    %v888 = vunpack.c.l.b16 %v575
    %v889 = vunpack.c.h.b16 %v575
    %v890 = vunpack.c.l.b16 %v576
    %v891 = vunpack.c.h.b16 %v576
    %v892 = vunpack.c.l.b16 %v577
    %v893 = vunpack.c.h.b16 %v577
    %v894 = vunpack.c.l.b16 %v578
    %v895 = vunpack.c.h.b16 %v578
    %v896 = vunpack.c.l.b16 %v579
    %v897 = vunpack.c.h.b16 %v579
    %v898 = vunpack.c.l.b16 %v580
    %v899 = vunpack.c.h.b16 %v580
    %v900 = vunpack.c.l.b16 %v581
    %v901 = vunpack.c.h.b16 %v581
    %v902 = vunpack.c.l.b16 %v582
    %v903 = vunpack.c.h.b16 %v582
    %v904 = vunpack.c.l.b16 %v583
    %v905 = vunpack.c.h.b16 %v583
    %v906 = vunpack.c.l.b16 %v584
    %v907 = vunpack.c.h.b16 %v584
    %v908 = vunpack.c.l.b16 %v585
    %v909 = vunpack.c.h.b16 %v585
    %v910 = vunpack.c.l.b16 %v586
    %v911 = vunpack.c.h.b16 %v586
    %v912 = vunpack.c.l.b16 %v587
    %v913 = vunpack.c.h.b16 %v587
    %v914 = vunpack.c.l.b16 %v588
    %v915 = vunpack.c.h.b16 %v588
    %v916 = vunpack.c.l.b16 %v589
    %v917 = vunpack.c.h.b16 %v589
    %v918 = vunpack.c.l.b16 %v590
    %v919 = vunpack.c.h.b16 %v590
    %v920 = vpack.c.b16 %v858, %v856
    %v921 = vpack.c.b16 %v859, %v857
    %v922 = vpack.c.b16 %v862, %v860
    %v923 = vpack.c.b16 %v863, %v861
    %v924 = vpack.c.b16 %v866, %v864
    %v925 = vpack.c.b16 %v867, %v865
    %v926 = vpack.c.b16 %v870, %v868
    %v927 = vpack.c.b16 %v871, %v869
    %v928 = vpack.c.b16 %v874, %v872
    %v929 = vpack.c.b16 %v875, %v873
    %v930 = vpack.c.b16 %v878, %v876
    %v931 = vpack.c.b16 %v879, %v877
    %v932 = vpack.c.b16 %v882, %v880
    %v933 = vpack.c.b16 %v883, %v881
    %v934 = vpack.c.b16 %v886, %v884
    %v935 = vpack.c.b16 %v887, %v885
    %v936 = vpack.c.b16 %v890, %v888
    %v937 = vpack.c.b16 %v891, %v889
    %v938 = vpack.c.b16 %v894, %v892
    %v939 = vpack.c.b16 %v895, %v893
    %v940 = vpack.c.b16 %v898, %v896
    %v941 = vpack.c.b16 %v899, %v897
    %v942 = vpack.c.b16 %v902, %v900
    %v943 = vpack.c.b16 %v903, %v901
    %v944 = vpack.c.b16 %v906, %v904
    %v945 = vpack.c.b16 %v907, %v905
    %v946 = vpack.c.b16 %v910, %v908
    %v947 = vpack.c.b16 %v911, %v909
    %v948 = vpack.c.b16 %v914, %v912
    %v949 = vpack.c.b16 %v915, %v913
    %v950 = vpack.c.b16 %v918, %v916
    %v951 = vpack.c.b16 %v919, %v917
    %984 = vmatprep.subr.bf16.mxu0 %v935
    %985 = vmatpush1.bf16.msra.mxu0 %v934
    %986 = vmatprep.subr.bf16.mxu0 %v933
    %987 = vmatpush1.bf16.msra.mxu0 %v932
    %988 = vmatprep.subr.bf16.mxu0 %v931
    %989 = vmatpush1.bf16.msra.mxu0 %v930
    %990 = vmatprep.subr.bf16.mxu0 %v929
    %991 = vmatpush1.bf16.msra.mxu0 %v928
    %992 = vmatprep.subr.bf16.mxu0 %v927
    %993 = vmatpush1.bf16.msra.mxu0 %v926
    %994 = vmatprep.subr.bf16.mxu0 %v925
    %995 = vmatpush1.bf16.msra.mxu0 %v924
    %996 = vmatprep.subr.bf16.mxu0 %v923
    %997 = vmatpush1.bf16.msra.mxu0 %v922
    %998 = vmatprep.subr.bf16.mxu0 %v921
    %999 = vmatpush1.bf16.msra.mxu0 %v920
    %1000 = vmatprep.subr.bf16.mxu0 %v951
    %1001 = vmatpush2.bf16.msra.mxu0 %v950
    %1002 = vmatprep.subr.bf16.mxu0 %v949
    %1003 = vmatpush2.bf16.msra.mxu0 %v948
    %1004 = vmatprep.subr.bf16.mxu0 %v947
    %1005 = vmatpush2.bf16.msra.mxu0 %v946
    %1006 = vmatprep.subr.bf16.mxu0 %v945
    %1007 = vmatpush2.bf16.msra.mxu0 %v944
    %1008 = vmatprep.subr.bf16.mxu0 %v943
    %1009 = vmatpush2.bf16.msra.mxu0 %v942
    %1010 = vmatprep.subr.bf16.mxu0 %v941
    %1011 = vmatpush2.bf16.msra.mxu0 %v940
    %1012 = vmatprep.subr.bf16.mxu0 %v939
    %1013 = vmatpush2.bf16.msra.mxu0 %v938
    %1014 = vmatprep.subr.bf16.mxu0 %v937
    %1015 = vmatpush2.bf16.msra.mxu0 %v936
    %1016 = vmatprep.mubr.bf16.mxu0 %v556
    %1017 = vmatmul.mubr.bf16.gmra.mxu0 %v555
    %v1018 = vpop.f32.mrf.mxu0
    %v1019 = vadd.f32 %v818, %v1018
    %v1020 = vpop.f32.mrf.mxu0
    %v1021 = vadd.f32 %v820, %v1020
    %v1022 = vpop.f32.mrf.mxu0
    %v1023 = vpop.f32.mrf.mxu0
    %1024 = vdwg.mxu0
    %v1025 = vlaneseq
    %v1026 = vshrl.u32 %v1025, 7
    %v1027 = vsub.s32 1, %v1026
    %v1028 = vrot.slane %v61, %v1027
    %v1029 = vlaneseq
    %v1030 = vshrl.u32 %v1029, 7
    %v1031 = vsub.s32 1, %v1030
    %v1032 = vrot.slane %v67, %v1031
    %v1033 = vadd.f32 %v1019, %v1028
    %v1034 = vadd.f32 %v1021, %v1032
    %v1035 = vmul.f32 %v553, 0.9
    %v1036 = vmul.f32 %v554, 0.9
    %v1037 = vadd.f32 %v1035, %v1033
    %v1038 = vadd.f32 %v1036, %v1034
    %vm1039 = vcmp.ge.f32.partialorder %v1037, 1.0
    %vm1040 = vcmp.ge.f32.partialorder %v1038, 1.0
    %v1041 = vsel %vm1039, 1, 0
    %v1042 = vsel %vm1040, 1, 0
    %v1043 = vcvt.s32.f32 %v1041
    %v1044 = vcvt.s32.f32 %v1042
    %v1045 = vsel %vm1039, 0.0, %v1037
    %v1046 = vsel %vm1040, 0.0, %v1038
    %v1047 = vpack.c.bf16 %v1043, %v1043
    %v1048 = vpack.c.bf16 %v1044, %v1044
    %1049 = vst [vmem:[#allocation8 + $0x1] sm:$0x1] %v1043
    %1050 = vst [vmem:[#allocation9 + $0x1] sm:$0x1] %v1044
    %v1051 = vld [vmem:[#allocation5] sm:$0xff]
    %v1052 = vld [vmem:[#allocation5 + $0x8] sm:$0xff]
    %v1053 = vld [vmem:[#allocation5 + $0x10] sm:$0xff]
    %v1054 = vld [vmem:[#allocation5 + $0x18] sm:$0xff]
    %v1055 = vld [vmem:[#allocation5 + $0x20] sm:$0xff]
    %v1056 = vld [vmem:[#allocation5 + $0x28] sm:$0xff]
    %v1057 = vld [vmem:[#allocation5 + $0x30] sm:$0xff]
    %v1058 = vld [vmem:[#allocation5 + $0x38] sm:$0xff]
    %v1059 = vld [vmem:[#allocation5 + $0x40] sm:$0xff]
    %v1060 = vld [vmem:[#allocation5 + $0x48] sm:$0xff]
    %v1061 = vld [vmem:[#allocation5 + $0x50] sm:$0xff]
    %v1062 = vld [vmem:[#allocation5 + $0x58] sm:$0xff]
    %v1063 = vld [vmem:[#allocation5 + $0x60] sm:$0xff]
    %v1064 = vld [vmem:[#allocation5 + $0x68] sm:$0xff]
    %v1065 = vld [vmem:[#allocation5 + $0x70] sm:$0xff]
    %v1066 = vld [vmem:[#allocation5 + $0x78] sm:$0xff]
    %v1067 = vld [vmem:[#allocation5 + $0x80] sm:$0xff]
    %v1068 = vld [vmem:[#allocation5 + $0x88] sm:$0xff]
    %v1069 = vld [vmem:[#allocation5 + $0x90] sm:$0xff]
    %v1070 = vld [vmem:[#allocation5 + $0x98] sm:$0xff]
    %v1071 = vld [vmem:[#allocation5 + $0xa0] sm:$0xff]
    %v1072 = vld [vmem:[#allocation5 + $0xa8] sm:$0xff]
    %v1073 = vld [vmem:[#allocation5 + $0xb0] sm:$0xff]
    %v1074 = vld [vmem:[#allocation5 + $0xb8] sm:$0xff]
    %v1075 = vld [vmem:[#allocation5 + $0xc0] sm:$0xff]
    %v1076 = vld [vmem:[#allocation5 + $0xc8] sm:$0xff]
    %v1077 = vld [vmem:[#allocation5 + $0xd0] sm:$0xff]
    %v1078 = vld [vmem:[#allocation5 + $0xd8] sm:$0xff]
    %v1079 = vld [vmem:[#allocation5 + $0xe0] sm:$0xff]
    %v1080 = vld [vmem:[#allocation5 + $0xe8] sm:$0xff]
    %v1081 = vld [vmem:[#allocation5 + $0xf0] sm:$0xff]
    %v1082 = vld [vmem:[#allocation5 + $0xf8] sm:$0xff]
    %v1083 = vld [vmem:[#allocation7] sm:$0xff]
    %v1084 = vld [vmem:[#allocation7 + $0x8] sm:$0xff]
    %v1085 = vld [vmem:[#allocation7 + $0x10] sm:$0xff]
    %v1086 = vld [vmem:[#allocation7 + $0x18] sm:$0xff]
    %v1087 = vld [vmem:[#allocation7 + $0x20] sm:$0xff]
    %v1088 = vld [vmem:[#allocation7 + $0x28] sm:$0xff]
    %v1089 = vld [vmem:[#allocation7 + $0x30] sm:$0xff]
    %v1090 = vld [vmem:[#allocation7 + $0x38] sm:$0xff]
    %v1091 = vld [vmem:[#allocation7 + $0x40] sm:$0xff]
    %v1092 = vld [vmem:[#allocation7 + $0x48] sm:$0xff]
    %v1093 = vld [vmem:[#allocation7 + $0x50] sm:$0xff]
    %v1094 = vld [vmem:[#allocation7 + $0x58] sm:$0xff]
    %v1095 = vld [vmem:[#allocation7 + $0x60] sm:$0xff]
    %v1096 = vld [vmem:[#allocation7 + $0x68] sm:$0xff]
    %v1097 = vld [vmem:[#allocation7 + $0x70] sm:$0xff]
    %v1098 = vld [vmem:[#allocation7 + $0x78] sm:$0xff]
    %v1099 = vld [vmem:[#allocation7 + $0x80] sm:$0xff]
    %v1100 = vld [vmem:[#allocation7 + $0x88] sm:$0xff]
    %v1101 = vld [vmem:[#allocation7 + $0x90] sm:$0xff]
    %v1102 = vld [vmem:[#allocation7 + $0x98] sm:$0xff]
    %v1103 = vld [vmem:[#allocation7 + $0xa0] sm:$0xff]
    %v1104 = vld [vmem:[#allocation7 + $0xa8] sm:$0xff]
    %v1105 = vld [vmem:[#allocation7 + $0xb0] sm:$0xff]
    %v1106 = vld [vmem:[#allocation7 + $0xb8] sm:$0xff]
    %v1107 = vld [vmem:[#allocation7 + $0xc0] sm:$0xff]
    %v1108 = vld [vmem:[#allocation7 + $0xc8] sm:$0xff]
    %v1109 = vld [vmem:[#allocation7 + $0xd0] sm:$0xff]
    %v1110 = vld [vmem:[#allocation7 + $0xd8] sm:$0xff]
    %v1111 = vld [vmem:[#allocation7 + $0xe0] sm:$0xff]
    %v1112 = vld [vmem:[#allocation7 + $0xe8] sm:$0xff]
    %v1113 = vld [vmem:[#allocation7 + $0xf0] sm:$0xff]
    %v1114 = vld [vmem:[#allocation7 + $0xf8] sm:$0xff]
    %v1147 = vunpack.c.l.b16 %v1083
    %v1148 = vunpack.c.h.b16 %v1083
    %v1149 = vunpack.c.l.b16 %v1084
    %v1150 = vunpack.c.h.b16 %v1084
    %v1151 = vunpack.c.l.b16 %v1085
    %v1152 = vunpack.c.h.b16 %v1085
    %v1153 = vunpack.c.l.b16 %v1086
    %v1154 = vunpack.c.h.b16 %v1086
    %v1155 = vunpack.c.l.b16 %v1087
    %v1156 = vunpack.c.h.b16 %v1087
    %v1157 = vunpack.c.l.b16 %v1088
    %v1158 = vunpack.c.h.b16 %v1088
    %v1159 = vunpack.c.l.b16 %v1089
    %v1160 = vunpack.c.h.b16 %v1089
    %v1161 = vunpack.c.l.b16 %v1090
    %v1162 = vunpack.c.h.b16 %v1090
    %v1163 = vunpack.c.l.b16 %v1091
    %v1164 = vunpack.c.h.b16 %v1091
    %v1165 = vunpack.c.l.b16 %v1092
    %v1166 = vunpack.c.h.b16 %v1092
    %v1167 = vunpack.c.l.b16 %v1093
    %v1168 = vunpack.c.h.b16 %v1093
    %v1169 = vunpack.c.l.b16 %v1094
    %v1170 = vunpack.c.h.b16 %v1094
    %v1171 = vunpack.c.l.b16 %v1095
    %v1172 = vunpack.c.h.b16 %v1095
    %v1173 = vunpack.c.l.b16 %v1096
    %v1174 = vunpack.c.h.b16 %v1096
    %v1175 = vunpack.c.l.b16 %v1097
    %v1176 = vunpack.c.h.b16 %v1097
    %v1177 = vunpack.c.l.b16 %v1098
    %v1178 = vunpack.c.h.b16 %v1098
    %v1179 = vunpack.c.l.b16 %v1099
    %v1180 = vunpack.c.h.b16 %v1099
    %v1181 = vunpack.c.l.b16 %v1100
    %v1182 = vunpack.c.h.b16 %v1100
    %v1183 = vunpack.c.l.b16 %v1101
    %v1184 = vunpack.c.h.b16 %v1101
    %v1185 = vunpack.c.l.b16 %v1102
    %v1186 = vunpack.c.h.b16 %v1102
    %v1187 = vunpack.c.l.b16 %v1103
    %v1188 = vunpack.c.h.b16 %v1103
    %v1189 = vunpack.c.l.b16 %v1104
    %v1190 = vunpack.c.h.b16 %v1104
    %v1191 = vunpack.c.l.b16 %v1105
    %v1192 = vunpack.c.h.b16 %v1105
    %v1193 = vunpack.c.l.b16 %v1106
    %v1194 = vunpack.c.h.b16 %v1106
    %v1195 = vunpack.c.l.b16 %v1107
    %v1196 = vunpack.c.h.b16 %v1107
    %v1197 = vunpack.c.l.b16 %v1108
    %v1198 = vunpack.c.h.b16 %v1108
    %v1199 = vunpack.c.l.b16 %v1109
    %v1200 = vunpack.c.h.b16 %v1109
    %v1201 = vunpack.c.l.b16 %v1110
    %v1202 = vunpack.c.h.b16 %v1110
    %v1203 = vunpack.c.l.b16 %v1111
    %v1204 = vunpack.c.h.b16 %v1111
    %v1205 = vunpack.c.l.b16 %v1112
    %v1206 = vunpack.c.h.b16 %v1112
    %v1207 = vunpack.c.l.b16 %v1113
    %v1208 = vunpack.c.h.b16 %v1113
    %v1209 = vunpack.c.l.b16 %v1114
    %v1210 = vunpack.c.h.b16 %v1114
    %v1211 = vpack.c.b16 %v1149, %v1147
    %v1212 = vpack.c.b16 %v1150, %v1148
    %v1213 = vpack.c.b16 %v1153, %v1151
    %v1214 = vpack.c.b16 %v1154, %v1152
    %v1215 = vpack.c.b16 %v1157, %v1155
    %v1216 = vpack.c.b16 %v1158, %v1156
    %v1217 = vpack.c.b16 %v1161, %v1159
    %v1218 = vpack.c.b16 %v1162, %v1160
    %v1219 = vpack.c.b16 %v1165, %v1163
    %v1220 = vpack.c.b16 %v1166, %v1164
    %v1221 = vpack.c.b16 %v1169, %v1167
    %v1222 = vpack.c.b16 %v1170, %v1168
    %v1223 = vpack.c.b16 %v1173, %v1171
    %v1224 = vpack.c.b16 %v1174, %v1172
    %v1225 = vpack.c.b16 %v1177, %v1175
    %v1226 = vpack.c.b16 %v1178, %v1176
    %v1227 = vpack.c.b16 %v1181, %v1179
    %v1228 = vpack.c.b16 %v1182, %v1180
    %v1229 = vpack.c.b16 %v1185, %v1183
    %v1230 = vpack.c.b16 %v1186, %v1184
    %v1231 = vpack.c.b16 %v1189, %v1187
    %v1232 = vpack.c.b16 %v1190, %v1188
    %v1233 = vpack.c.b16 %v1193, %v1191
    %v1234 = vpack.c.b16 %v1194, %v1192
    %v1235 = vpack.c.b16 %v1197, %v1195
    %v1236 = vpack.c.b16 %v1198, %v1196
    %v1237 = vpack.c.b16 %v1201, %v1199
    %v1238 = vpack.c.b16 %v1202, %v1200
    %v1239 = vpack.c.b16 %v1205, %v1203
    %v1240 = vpack.c.b16 %v1206, %v1204
    %v1241 = vpack.c.b16 %v1209, %v1207
    %v1242 = vpack.c.b16 %v1210, %v1208
    %1275 = vmatprep.subr.bf16.mxu0 %v1226
    %1276 = vmatpush1.bf16.msra.mxu0 %v1225
    %1277 = vmatprep.subr.bf16.mxu0 %v1224
    %1278 = vmatpush1.bf16.msra.mxu0 %v1223
    %1279 = vmatprep.subr.bf16.mxu0 %v1222
    %1280 = vmatpush1.bf16.msra.mxu0 %v1221
    %1281 = vmatprep.subr.bf16.mxu0 %v1220
    %1282 = vmatpush1.bf16.msra.mxu0 %v1219
    %1283 = vmatprep.subr.bf16.mxu0 %v1218
    %1284 = vmatpush1.bf16.msra.mxu0 %v1217
    %1285 = vmatprep.subr.bf16.mxu0 %v1216
    %1286 = vmatpush1.bf16.msra.mxu0 %v1215
    %1287 = vmatprep.subr.bf16.mxu0 %v1214
    %1288 = vmatpush1.bf16.msra.mxu0 %v1213
    %1289 = vmatprep.subr.bf16.mxu0 %v1212
    %1290 = vmatpush1.bf16.msra.mxu0 %v1211
    %1291 = vmatprep.subr.bf16.mxu0 %v1242
    %1292 = vmatpush2.bf16.msra.mxu0 %v1241
    %1293 = vmatprep.subr.bf16.mxu0 %v1240
    %1294 = vmatpush2.bf16.msra.mxu0 %v1239
    %1295 = vmatprep.subr.bf16.mxu0 %v1238
    %1296 = vmatpush2.bf16.msra.mxu0 %v1237
    %1297 = vmatprep.subr.bf16.mxu0 %v1236
    %1298 = vmatpush2.bf16.msra.mxu0 %v1235
    %1299 = vmatprep.subr.bf16.mxu0 %v1234
    %1300 = vmatpush2.bf16.msra.mxu0 %v1233
    %1301 = vmatprep.subr.bf16.mxu0 %v1232
    %1302 = vmatpush2.bf16.msra.mxu0 %v1231
    %1303 = vmatprep.subr.bf16.mxu0 %v1230
    %1304 = vmatpush2.bf16.msra.mxu0 %v1229
    %1305 = vmatprep.subr.bf16.mxu0 %v1228
    %1306 = vmatpush2.bf16.msra.mxu0 %v1227
    %1307 = vmatprep.mubr.bf16.mxu0 %v1048
    %1308 = vmatmul.mubr.bf16.gmra.mxu0 %v1047
    %v1309 = vpop.f32.mrf.mxu0
    %v1310 = vadd.f32 0.0, %v1309
    %v1311 = vpop.f32.mrf.mxu0
    %v1312 = vadd.f32 0.0, %v1311
    %v1313 = vpop.f32.mrf.mxu0
    %v1314 = vpop.f32.mrf.mxu0
    %1315 = vdwg.mxu0
    %v1348 = vunpack.c.l.b16 %v1051
    %v1349 = vunpack.c.h.b16 %v1051
    %v1350 = vunpack.c.l.b16 %v1052
    %v1351 = vunpack.c.h.b16 %v1052
    %v1352 = vunpack.c.l.b16 %v1053
    %v1353 = vunpack.c.h.b16 %v1053
    %v1354 = vunpack.c.l.b16 %v1054
    %v1355 = vunpack.c.h.b16 %v1054
    %v1356 = vunpack.c.l.b16 %v1055
    %v1357 = vunpack.c.h.b16 %v1055
    %v1358 = vunpack.c.l.b16 %v1056
    %v1359 = vunpack.c.h.b16 %v1056
    %v1360 = vunpack.c.l.b16 %v1057
    %v1361 = vunpack.c.h.b16 %v1057
    %v1362 = vunpack.c.l.b16 %v1058
    %v1363 = vunpack.c.h.b16 %v1058
    %v1364 = vunpack.c.l.b16 %v1059
    %v1365 = vunpack.c.h.b16 %v1059
    %v1366 = vunpack.c.l.b16 %v1060
    %v1367 = vunpack.c.h.b16 %v1060
    %v1368 = vunpack.c.l.b16 %v1061
    %v1369 = vunpack.c.h.b16 %v1061
    %v1370 = vunpack.c.l.b16 %v1062
    %v1371 = vunpack.c.h.b16 %v1062
    %v1372 = vunpack.c.l.b16 %v1063
    %v1373 = vunpack.c.h.b16 %v1063
    %v1374 = vunpack.c.l.b16 %v1064
    %v1375 = vunpack.c.h.b16 %v1064
    %v1376 = vunpack.c.l.b16 %v1065
    %v1377 = vunpack.c.h.b16 %v1065
    %v1378 = vunpack.c.l.b16 %v1066
    %v1379 = vunpack.c.h.b16 %v1066
    %v1380 = vunpack.c.l.b16 %v1067
    %v1381 = vunpack.c.h.b16 %v1067
    %v1382 = vunpack.c.l.b16 %v1068
    %v1383 = vunpack.c.h.b16 %v1068
    %v1384 = vunpack.c.l.b16 %v1069
    %v1385 = vunpack.c.h.b16 %v1069
    %v1386 = vunpack.c.l.b16 %v1070
    %v1387 = vunpack.c.h.b16 %v1070
    %v1388 = vunpack.c.l.b16 %v1071
    %v1389 = vunpack.c.h.b16 %v1071
    %v1390 = vunpack.c.l.b16 %v1072
    %v1391 = vunpack.c.h.b16 %v1072
    %v1392 = vunpack.c.l.b16 %v1073
    %v1393 = vunpack.c.h.b16 %v1073
    %v1394 = vunpack.c.l.b16 %v1074
    %v1395 = vunpack.c.h.b16 %v1074
    %v1396 = vunpack.c.l.b16 %v1075
    %v1397 = vunpack.c.h.b16 %v1075
    %v1398 = vunpack.c.l.b16 %v1076
    %v1399 = vunpack.c.h.b16 %v1076
    %v1400 = vunpack.c.l.b16 %v1077
    %v1401 = vunpack.c.h.b16 %v1077
    %v1402 = vunpack.c.l.b16 %v1078
    %v1403 = vunpack.c.h.b16 %v1078
    %v1404 = vunpack.c.l.b16 %v1079
    %v1405 = vunpack.c.h.b16 %v1079
    %v1406 = vunpack.c.l.b16 %v1080
    %v1407 = vunpack.c.h.b16 %v1080
    %v1408 = vunpack.c.l.b16 %v1081
    %v1409 = vunpack.c.h.b16 %v1081
    %v1410 = vunpack.c.l.b16 %v1082
    %v1411 = vunpack.c.h.b16 %v1082
    %v1412 = vpack.c.b16 %v1350, %v1348
    %v1413 = vpack.c.b16 %v1351, %v1349
    %v1414 = vpack.c.b16 %v1354, %v1352
    %v1415 = vpack.c.b16 %v1355, %v1353
    %v1416 = vpack.c.b16 %v1358, %v1356
    %v1417 = vpack.c.b16 %v1359, %v1357
    %v1418 = vpack.c.b16 %v1362, %v1360
    %v1419 = vpack.c.b16 %v1363, %v1361
    %v1420 = vpack.c.b16 %v1366, %v1364
    %v1421 = vpack.c.b16 %v1367, %v1365
    %v1422 = vpack.c.b16 %v1370, %v1368
    %v1423 = vpack.c.b16 %v1371, %v1369
    %v1424 = vpack.c.b16 %v1374, %v1372
    %v1425 = vpack.c.b16 %v1375, %v1373
    %v1426 = vpack.c.b16 %v1378, %v1376
    %v1427 = vpack.c.b16 %v1379, %v1377
    %v1428 = vpack.c.b16 %v1382, %v1380
    %v1429 = vpack.c.b16 %v1383, %v1381
    %v1430 = vpack.c.b16 %v1386, %v1384
    %v1431 = vpack.c.b16 %v1387, %v1385
    %v1432 = vpack.c.b16 %v1390, %v1388
    %v1433 = vpack.c.b16 %v1391, %v1389
    %v1434 = vpack.c.b16 %v1394, %v1392
    %v1435 = vpack.c.b16 %v1395, %v1393
    %v1436 = vpack.c.b16 %v1398, %v1396
    %v1437 = vpack.c.b16 %v1399, %v1397
    %v1438 = vpack.c.b16 %v1402, %v1400
    %v1439 = vpack.c.b16 %v1403, %v1401
    %v1440 = vpack.c.b16 %v1406, %v1404
    %v1441 = vpack.c.b16 %v1407, %v1405
    %v1442 = vpack.c.b16 %v1410, %v1408
    %v1443 = vpack.c.b16 %v1411, %v1409
    %1476 = vmatprep.subr.bf16.mxu0 %v1427
    %1477 = vmatpush1.bf16.msra.mxu0 %v1426
    %1478 = vmatprep.subr.bf16.mxu0 %v1425
    %1479 = vmatpush1.bf16.msra.mxu0 %v1424
    %1480 = vmatprep.subr.bf16.mxu0 %v1423
    %1481 = vmatpush1.bf16.msra.mxu0 %v1422
    %1482 = vmatprep.subr.bf16.mxu0 %v1421
    %1483 = vmatpush1.bf16.msra.mxu0 %v1420
    %1484 = vmatprep.subr.bf16.mxu0 %v1419
    %1485 = vmatpush1.bf16.msra.mxu0 %v1418
    %1486 = vmatprep.subr.bf16.mxu0 %v1417
    %1487 = vmatpush1.bf16.msra.mxu0 %v1416
    %1488 = vmatprep.subr.bf16.mxu0 %v1415
    %1489 = vmatpush1.bf16.msra.mxu0 %v1414
    %1490 = vmatprep.subr.bf16.mxu0 %v1413
    %1491 = vmatpush1.bf16.msra.mxu0 %v1412
    %1492 = vmatprep.subr.bf16.mxu0 %v1443
    %1493 = vmatpush2.bf16.msra.mxu0 %v1442
    %1494 = vmatprep.subr.bf16.mxu0 %v1441
    %1495 = vmatpush2.bf16.msra.mxu0 %v1440
    %1496 = vmatprep.subr.bf16.mxu0 %v1439
    %1497 = vmatpush2.bf16.msra.mxu0 %v1438
    %1498 = vmatprep.subr.bf16.mxu0 %v1437
    %1499 = vmatpush2.bf16.msra.mxu0 %v1436
    %1500 = vmatprep.subr.bf16.mxu0 %v1435
    %1501 = vmatpush2.bf16.msra.mxu0 %v1434
    %1502 = vmatprep.subr.bf16.mxu0 %v1433
    %1503 = vmatpush2.bf16.msra.mxu0 %v1432
    %1504 = vmatprep.subr.bf16.mxu0 %v1431
    %1505 = vmatpush2.bf16.msra.mxu0 %v1430
    %1506 = vmatprep.subr.bf16.mxu0 %v1429
    %1507 = vmatpush2.bf16.msra.mxu0 %v1428
    %1508 = vmatprep.mubr.bf16.mxu0 %v1048
    %1509 = vmatmul.mubr.bf16.gmra.mxu0 %v1047
    %v1510 = vpop.f32.mrf.mxu0
    %v1511 = vadd.f32 %v1310, %v1510
    %v1512 = vpop.f32.mrf.mxu0
    %v1513 = vadd.f32 %v1312, %v1512
    %v1514 = vpop.f32.mrf.mxu0
    %v1515 = vpop.f32.mrf.mxu0
    %1516 = vdwg.mxu0
    %v1517 = vlaneseq
    %v1518 = vshrl.u32 %v1517, 7
    %v1519 = vsub.s32 2, %v1518
    %v1520 = vrot.slane %v61, %v1519
    %v1521 = vlaneseq
    %v1522 = vshrl.u32 %v1521, 7
    %v1523 = vsub.s32 2, %v1522
    %v1524 = vrot.slane %v67, %v1523
    %v1525 = vadd.f32 %v1511, %v1520
    %v1526 = vadd.f32 %v1513, %v1524
    %v1527 = vmul.f32 %v1045, 0.9
    %v1528 = vmul.f32 %v1046, 0.9
    %v1529 = vadd.f32 %v1527, %v1525
    %v1530 = vadd.f32 %v1528, %v1526
    %vm1531 = vcmp.ge.f32.partialorder %v1529, 1.0
    %vm1532 = vcmp.ge.f32.partialorder %v1530, 1.0
    %v1533 = vsel %vm1531, 1, 0
    %v1534 = vsel %vm1532, 1, 0
    %v1535 = vcvt.s32.f32 %v1533
    %v1536 = vcvt.s32.f32 %v1534
    %v1537 = vsel %vm1531, 0.0, %v1529
    %v1538 = vsel %vm1532, 0.0, %v1530
    %v1539 = vpack.c.bf16 %v1535, %v1535
    %v1540 = vpack.c.bf16 %v1536, %v1536
    %1541 = vst [vmem:[#allocation8 + $0x2] sm:$0x1] %v1535
    %1542 = vst [vmem:[#allocation9 + $0x2] sm:$0x1] %v1536
    %v1543 = vld [vmem:[#allocation5] sm:$0xff]
    %v1544 = vld [vmem:[#allocation5 + $0x8] sm:$0xff]
    %v1545 = vld [vmem:[#allocation5 + $0x10] sm:$0xff]
    %v1546 = vld [vmem:[#allocation5 + $0x18] sm:$0xff]
    %v1547 = vld [vmem:[#allocation5 + $0x20] sm:$0xff]
    %v1548 = vld [vmem:[#allocation5 + $0x28] sm:$0xff]
    %v1549 = vld [vmem:[#allocation5 + $0x30] sm:$0xff]
    %v1550 = vld [vmem:[#allocation5 + $0x38] sm:$0xff]
    %v1551 = vld [vmem:[#allocation5 + $0x40] sm:$0xff]
    %v1552 = vld [vmem:[#allocation5 + $0x48] sm:$0xff]
    %v1553 = vld [vmem:[#allocation5 + $0x50] sm:$0xff]
    %v1554 = vld [vmem:[#allocation5 + $0x58] sm:$0xff]
    %v1555 = vld [vmem:[#allocation5 + $0x60] sm:$0xff]
    %v1556 = vld [vmem:[#allocation5 + $0x68] sm:$0xff]
    %v1557 = vld [vmem:[#allocation5 + $0x70] sm:$0xff]
    %v1558 = vld [vmem:[#allocation5 + $0x78] sm:$0xff]
    %v1559 = vld [vmem:[#allocation5 + $0x80] sm:$0xff]
    %v1560 = vld [vmem:[#allocation5 + $0x88] sm:$0xff]
    %v1561 = vld [vmem:[#allocation5 + $0x90] sm:$0xff]
    %v1562 = vld [vmem:[#allocation5 + $0x98] sm:$0xff]
    %v1563 = vld [vmem:[#allocation5 + $0xa0] sm:$0xff]
    %v1564 = vld [vmem:[#allocation5 + $0xa8] sm:$0xff]
    %v1565 = vld [vmem:[#allocation5 + $0xb0] sm:$0xff]
    %v1566 = vld [vmem:[#allocation5 + $0xb8] sm:$0xff]
    %v1567 = vld [vmem:[#allocation5 + $0xc0] sm:$0xff]
    %v1568 = vld [vmem:[#allocation5 + $0xc8] sm:$0xff]
    %v1569 = vld [vmem:[#allocation5 + $0xd0] sm:$0xff]
    %v1570 = vld [vmem:[#allocation5 + $0xd8] sm:$0xff]
    %v1571 = vld [vmem:[#allocation5 + $0xe0] sm:$0xff]
    %v1572 = vld [vmem:[#allocation5 + $0xe8] sm:$0xff]
    %v1573 = vld [vmem:[#allocation5 + $0xf0] sm:$0xff]
    %v1574 = vld [vmem:[#allocation5 + $0xf8] sm:$0xff]
    %v1575 = vld [vmem:[#allocation7] sm:$0xff]
    %v1576 = vld [vmem:[#allocation7 + $0x8] sm:$0xff]
    %v1577 = vld [vmem:[#allocation7 + $0x10] sm:$0xff]
    %v1578 = vld [vmem:[#allocation7 + $0x18] sm:$0xff]
    %v1579 = vld [vmem:[#allocation7 + $0x20] sm:$0xff]
    %v1580 = vld [vmem:[#allocation7 + $0x28] sm:$0xff]
    %v1581 = vld [vmem:[#allocation7 + $0x30] sm:$0xff]
    %v1582 = vld [vmem:[#allocation7 + $0x38] sm:$0xff]
    %v1583 = vld [vmem:[#allocation7 + $0x40] sm:$0xff]
    %v1584 = vld [vmem:[#allocation7 + $0x48] sm:$0xff]
    %v1585 = vld [vmem:[#allocation7 + $0x50] sm:$0xff]
    %v1586 = vld [vmem:[#allocation7 + $0x58] sm:$0xff]
    %v1587 = vld [vmem:[#allocation7 + $0x60] sm:$0xff]
    %v1588 = vld [vmem:[#allocation7 + $0x68] sm:$0xff]
    %v1589 = vld [vmem:[#allocation7 + $0x70] sm:$0xff]
    %v1590 = vld [vmem:[#allocation7 + $0x78] sm:$0xff]
    %v1591 = vld [vmem:[#allocation7 + $0x80] sm:$0xff]
    %v1592 = vld [vmem:[#allocation7 + $0x88] sm:$0xff]
    %v1593 = vld [vmem:[#allocation7 + $0x90] sm:$0xff]
    %v1594 = vld [vmem:[#allocation7 + $0x98] sm:$0xff]
    %v1595 = vld [vmem:[#allocation7 + $0xa0] sm:$0xff]
    %v1596 = vld [vmem:[#allocation7 + $0xa8] sm:$0xff]
    %v1597 = vld [vmem:[#allocation7 + $0xb0] sm:$0xff]
    %v1598 = vld [vmem:[#allocation7 + $0xb8] sm:$0xff]
    %v1599 = vld [vmem:[#allocation7 + $0xc0] sm:$0xff]
    %v1600 = vld [vmem:[#allocation7 + $0xc8] sm:$0xff]
    %v1601 = vld [vmem:[#allocation7 + $0xd0] sm:$0xff]
    %v1602 = vld [vmem:[#allocation7 + $0xd8] sm:$0xff]
    %v1603 = vld [vmem:[#allocation7 + $0xe0] sm:$0xff]
    %v1604 = vld [vmem:[#allocation7 + $0xe8] sm:$0xff]
    %v1605 = vld [vmem:[#allocation7 + $0xf0] sm:$0xff]
    %v1606 = vld [vmem:[#allocation7 + $0xf8] sm:$0xff]
    %v1639 = vunpack.c.l.b16 %v1575
    %v1640 = vunpack.c.h.b16 %v1575
    %v1641 = vunpack.c.l.b16 %v1576
    %v1642 = vunpack.c.h.b16 %v1576
    %v1643 = vunpack.c.l.b16 %v1577
    %v1644 = vunpack.c.h.b16 %v1577
    %v1645 = vunpack.c.l.b16 %v1578
    %v1646 = vunpack.c.h.b16 %v1578
    %v1647 = vunpack.c.l.b16 %v1579
    %v1648 = vunpack.c.h.b16 %v1579
    %v1649 = vunpack.c.l.b16 %v1580
    %v1650 = vunpack.c.h.b16 %v1580
    %v1651 = vunpack.c.l.b16 %v1581
    %v1652 = vunpack.c.h.b16 %v1581
    %v1653 = vunpack.c.l.b16 %v1582
    %v1654 = vunpack.c.h.b16 %v1582
    %v1655 = vunpack.c.l.b16 %v1583
    %v1656 = vunpack.c.h.b16 %v1583
    %v1657 = vunpack.c.l.b16 %v1584
    %v1658 = vunpack.c.h.b16 %v1584
    %v1659 = vunpack.c.l.b16 %v1585
    %v1660 = vunpack.c.h.b16 %v1585
    %v1661 = vunpack.c.l.b16 %v1586
    %v1662 = vunpack.c.h.b16 %v1586
    %v1663 = vunpack.c.l.b16 %v1587
    %v1664 = vunpack.c.h.b16 %v1587
    %v1665 = vunpack.c.l.b16 %v1588
    %v1666 = vunpack.c.h.b16 %v1588
    %v1667 = vunpack.c.l.b16 %v1589
    %v1668 = vunpack.c.h.b16 %v1589
    %v1669 = vunpack.c.l.b16 %v1590
    %v1670 = vunpack.c.h.b16 %v1590
    %v1671 = vunpack.c.l.b16 %v1591
    %v1672 = vunpack.c.h.b16 %v1591
    %v1673 = vunpack.c.l.b16 %v1592
    %v1674 = vunpack.c.h.b16 %v1592
    %v1675 = vunpack.c.l.b16 %v1593
    %v1676 = vunpack.c.h.b16 %v1593
    %v1677 = vunpack.c.l.b16 %v1594
    %v1678 = vunpack.c.h.b16 %v1594
    %v1679 = vunpack.c.l.b16 %v1595
    %v1680 = vunpack.c.h.b16 %v1595
    %v1681 = vunpack.c.l.b16 %v1596
    %v1682 = vunpack.c.h.b16 %v1596
    %v1683 = vunpack.c.l.b16 %v1597
    %v1684 = vunpack.c.h.b16 %v1597
    %v1685 = vunpack.c.l.b16 %v1598
    %v1686 = vunpack.c.h.b16 %v1598
    %v1687 = vunpack.c.l.b16 %v1599
    %v1688 = vunpack.c.h.b16 %v1599
    %v1689 = vunpack.c.l.b16 %v1600
    %v1690 = vunpack.c.h.b16 %v1600
    %v1691 = vunpack.c.l.b16 %v1601
    %v1692 = vunpack.c.h.b16 %v1601
    %v1693 = vunpack.c.l.b16 %v1602
    %v1694 = vunpack.c.h.b16 %v1602
    %v1695 = vunpack.c.l.b16 %v1603
    %v1696 = vunpack.c.h.b16 %v1603
    %v1697 = vunpack.c.l.b16 %v1604
    %v1698 = vunpack.c.h.b16 %v1604
    %v1699 = vunpack.c.l.b16 %v1605
    %v1700 = vunpack.c.h.b16 %v1605
    %v1701 = vunpack.c.l.b16 %v1606
    %v1702 = vunpack.c.h.b16 %v1606
    %v1703 = vpack.c.b16 %v1641, %v1639
    %v1704 = vpack.c.b16 %v1642, %v1640
    %v1705 = vpack.c.b16 %v1645, %v1643
    %v1706 = vpack.c.b16 %v1646, %v1644
    %v1707 = vpack.c.b16 %v1649, %v1647
    %v1708 = vpack.c.b16 %v1650, %v1648
    %v1709 = vpack.c.b16 %v1653, %v1651
    %v1710 = vpack.c.b16 %v1654, %v1652
    %v1711 = vpack.c.b16 %v1657, %v1655
    %v1712 = vpack.c.b16 %v1658, %v1656
    %v1713 = vpack.c.b16 %v1661, %v1659
    %v1714 = vpack.c.b16 %v1662, %v1660
    %v1715 = vpack.c.b16 %v1665, %v1663
    %v1716 = vpack.c.b16 %v1666, %v1664
    %v1717 = vpack.c.b16 %v1669, %v1667
    %v1718 = vpack.c.b16 %v1670, %v1668
    %v1719 = vpack.c.b16 %v1673, %v1671
    %v1720 = vpack.c.b16 %v1674, %v1672
    %v1721 = vpack.c.b16 %v1677, %v1675
    %v1722 = vpack.c.b16 %v1678, %v1676
    %v1723 = vpack.c.b16 %v1681, %v1679
    %v1724 = vpack.c.b16 %v1682, %v1680
    %v1725 = vpack.c.b16 %v1685, %v1683
    %v1726 = vpack.c.b16 %v1686, %v1684
    %v1727 = vpack.c.b16 %v1689, %v1687
    %v1728 = vpack.c.b16 %v1690, %v1688
    %v1729 = vpack.c.b16 %v1693, %v1691
    %v1730 = vpack.c.b16 %v1694, %v1692
    %v1731 = vpack.c.b16 %v1697, %v1695
    %v1732 = vpack.c.b16 %v1698, %v1696
    %v1733 = vpack.c.b16 %v1701, %v1699
    %v1734 = vpack.c.b16 %v1702, %v1700
    %1767 = vmatprep.subr.bf16.mxu0 %v1718
    %1768 = vmatpush1.bf16.msra.mxu0 %v1717
    %1769 = vmatprep.subr.bf16.mxu0 %v1716
    %1770 = vmatpush1.bf16.msra.mxu0 %v1715
    %1771 = vmatprep.subr.bf16.mxu0 %v1714
    %1772 = vmatpush1.bf16.msra.mxu0 %v1713
    %1773 = vmatprep.subr.bf16.mxu0 %v1712
    %1774 = vmatpush1.bf16.msra.mxu0 %v1711
    %1775 = vmatprep.subr.bf16.mxu0 %v1710
    %1776 = vmatpush1.bf16.msra.mxu0 %v1709
    %1777 = vmatprep.subr.bf16.mxu0 %v1708
    %1778 = vmatpush1.bf16.msra.mxu0 %v1707
    %1779 = vmatprep.subr.bf16.mxu0 %v1706
    %1780 = vmatpush1.bf16.msra.mxu0 %v1705
    %1781 = vmatprep.subr.bf16.mxu0 %v1704
    %1782 = vmatpush1.bf16.msra.mxu0 %v1703
    %1783 = vmatprep.subr.bf16.mxu0 %v1734
    %1784 = vmatpush2.bf16.msra.mxu0 %v1733
    %1785 = vmatprep.subr.bf16.mxu0 %v1732
    %1786 = vmatpush2.bf16.msra.mxu0 %v1731
    %1787 = vmatprep.subr.bf16.mxu0 %v1730
    %1788 = vmatpush2.bf16.msra.mxu0 %v1729
    %1789 = vmatprep.subr.bf16.mxu0 %v1728
    %1790 = vmatpush2.bf16.msra.mxu0 %v1727
    %1791 = vmatprep.subr.bf16.mxu0 %v1726
    %1792 = vmatpush2.bf16.msra.mxu0 %v1725
    %1793 = vmatprep.subr.bf16.mxu0 %v1724
    %1794 = vmatpush2.bf16.msra.mxu0 %v1723
    %1795 = vmatprep.subr.bf16.mxu0 %v1722
    %1796 = vmatpush2.bf16.msra.mxu0 %v1721
    %1797 = vmatprep.subr.bf16.mxu0 %v1720
    %1798 = vmatpush2.bf16.msra.mxu0 %v1719
    %1799 = vmatprep.mubr.bf16.mxu0 %v1540
    %1800 = vmatmul.mubr.bf16.gmra.mxu0 %v1539
    %v1801 = vpop.f32.mrf.mxu0
    %v1802 = vadd.f32 0.0, %v1801
    %v1803 = vpop.f32.mrf.mxu0
    %v1804 = vadd.f32 0.0, %v1803
    %v1805 = vpop.f32.mrf.mxu0
    %v1806 = vpop.f32.mrf.mxu0
    %1807 = vdwg.mxu0
    %v1840 = vunpack.c.l.b16 %v1543
    %v1841 = vunpack.c.h.b16 %v1543
    %v1842 = vunpack.c.l.b16 %v1544
    %v1843 = vunpack.c.h.b16 %v1544
    %v1844 = vunpack.c.l.b16 %v1545
    %v1845 = vunpack.c.h.b16 %v1545
    %v1846 = vunpack.c.l.b16 %v1546
    %v1847 = vunpack.c.h.b16 %v1546
    %v1848 = vunpack.c.l.b16 %v1547
    %v1849 = vunpack.c.h.b16 %v1547
    %v1850 = vunpack.c.l.b16 %v1548
    %v1851 = vunpack.c.h.b16 %v1548
    %v1852 = vunpack.c.l.b16 %v1549
    %v1853 = vunpack.c.h.b16 %v1549
    %v1854 = vunpack.c.l.b16 %v1550
    %v1855 = vunpack.c.h.b16 %v1550
    %v1856 = vunpack.c.l.b16 %v1551
    %v1857 = vunpack.c.h.b16 %v1551
    %v1858 = vunpack.c.l.b16 %v1552
    %v1859 = vunpack.c.h.b16 %v1552
    %v1860 = vunpack.c.l.b16 %v1553
    %v1861 = vunpack.c.h.b16 %v1553
    %v1862 = vunpack.c.l.b16 %v1554
    %v1863 = vunpack.c.h.b16 %v1554
    %v1864 = vunpack.c.l.b16 %v1555
    %v1865 = vunpack.c.h.b16 %v1555
    %v1866 = vunpack.c.l.b16 %v1556
    %v1867 = vunpack.c.h.b16 %v1556
    %v1868 = vunpack.c.l.b16 %v1557
    %v1869 = vunpack.c.h.b16 %v1557
    %v1870 = vunpack.c.l.b16 %v1558
    %v1871 = vunpack.c.h.b16 %v1558
    %v1872 = vunpack.c.l.b16 %v1559
    %v1873 = vunpack.c.h.b16 %v1559
    %v1874 = vunpack.c.l.b16 %v1560
    %v1875 = vunpack.c.h.b16 %v1560
    %v1876 = vunpack.c.l.b16 %v1561
    %v1877 = vunpack.c.h.b16 %v1561
    %v1878 = vunpack.c.l.b16 %v1562
    %v1879 = vunpack.c.h.b16 %v1562
    %v1880 = vunpack.c.l.b16 %v1563
    %v1881 = vunpack.c.h.b16 %v1563
    %v1882 = vunpack.c.l.b16 %v1564
    %v1883 = vunpack.c.h.b16 %v1564
    %v1884 = vunpack.c.l.b16 %v1565
    %v1885 = vunpack.c.h.b16 %v1565
    %v1886 = vunpack.c.l.b16 %v1566
    %v1887 = vunpack.c.h.b16 %v1566
    %v1888 = vunpack.c.l.b16 %v1567
    %v1889 = vunpack.c.h.b16 %v1567
    %v1890 = vunpack.c.l.b16 %v1568
    %v1891 = vunpack.c.h.b16 %v1568
    %v1892 = vunpack.c.l.b16 %v1569
    %v1893 = vunpack.c.h.b16 %v1569
    %v1894 = vunpack.c.l.b16 %v1570
    %v1895 = vunpack.c.h.b16 %v1570
    %v1896 = vunpack.c.l.b16 %v1571
    %v1897 = vunpack.c.h.b16 %v1571
    %v1898 = vunpack.c.l.b16 %v1572
    %v1899 = vunpack.c.h.b16 %v1572
    %v1900 = vunpack.c.l.b16 %v1573
    %v1901 = vunpack.c.h.b16 %v1573
    %v1902 = vunpack.c.l.b16 %v1574
    %v1903 = vunpack.c.h.b16 %v1574
    %v1904 = vpack.c.b16 %v1842, %v1840
    %v1905 = vpack.c.b16 %v1843, %v1841
    %v1906 = vpack.c.b16 %v1846, %v1844
    %v1907 = vpack.c.b16 %v1847, %v1845
    %v1908 = vpack.c.b16 %v1850, %v1848
    %v1909 = vpack.c.b16 %v1851, %v1849
    %v1910 = vpack.c.b16 %v1854, %v1852
    %v1911 = vpack.c.b16 %v1855, %v1853
    %v1912 = vpack.c.b16 %v1858, %v1856
    %v1913 = vpack.c.b16 %v1859, %v1857
    %v1914 = vpack.c.b16 %v1862, %v1860
    %v1915 = vpack.c.b16 %v1863, %v1861
    %v1916 = vpack.c.b16 %v1866, %v1864
    %v1917 = vpack.c.b16 %v1867, %v1865
    %v1918 = vpack.c.b16 %v1870, %v1868
    %v1919 = vpack.c.b16 %v1871, %v1869
    %v1920 = vpack.c.b16 %v1874, %v1872
    %v1921 = vpack.c.b16 %v1875, %v1873
    %v1922 = vpack.c.b16 %v1878, %v1876
    %v1923 = vpack.c.b16 %v1879, %v1877
    %v1924 = vpack.c.b16 %v1882, %v1880
    %v1925 = vpack.c.b16 %v1883, %v1881
    %v1926 = vpack.c.b16 %v1886, %v1884
    %v1927 = vpack.c.b16 %v1887, %v1885
    %v1928 = vpack.c.b16 %v1890, %v1888
    %v1929 = vpack.c.b16 %v1891, %v1889
    %v1930 = vpack.c.b16 %v1894, %v1892
    %v1931 = vpack.c.b16 %v1895, %v1893
    %v1932 = vpack.c.b16 %v1898, %v1896
    %v1933 = vpack.c.b16 %v1899, %v1897
    %v1934 = vpack.c.b16 %v1902, %v1900
    %v1935 = vpack.c.b16 %v1903, %v1901
    %1968 = vmatprep.subr.bf16.mxu0 %v1919
    %1969 = vmatpush1.bf16.msra.mxu0 %v1918
    %1970 = vmatprep.subr.bf16.mxu0 %v1917
    %1971 = vmatpush1.bf16.msra.mxu0 %v1916
    %1972 = vmatprep.subr.bf16.mxu0 %v1915
    %1973 = vmatpush1.bf16.msra.mxu0 %v1914
    %1974 = vmatprep.subr.bf16.mxu0 %v1913
    %1975 = vmatpush1.bf16.msra.mxu0 %v1912
    %1976 = vmatprep.subr.bf16.mxu0 %v1911
    %1977 = vmatpush1.bf16.msra.mxu0 %v1910
    %1978 = vmatprep.subr.bf16.mxu0 %v1909
    %1979 = vmatpush1.bf16.msra.mxu0 %v1908
    %1980 = vmatprep.subr.bf16.mxu0 %v1907
    %1981 = vmatpush1.bf16.msra.mxu0 %v1906
    %1982 = vmatprep.subr.bf16.mxu0 %v1905
    %1983 = vmatpush1.bf16.msra.mxu0 %v1904
    %1984 = vmatprep.subr.bf16.mxu0 %v1935
    %1985 = vmatpush2.bf16.msra.mxu0 %v1934
    %1986 = vmatprep.subr.bf16.mxu0 %v1933
    %1987 = vmatpush2.bf16.msra.mxu0 %v1932
    %1988 = vmatprep.subr.bf16.mxu0 %v1931
    %1989 = vmatpush2.bf16.msra.mxu0 %v1930
    %1990 = vmatprep.subr.bf16.mxu0 %v1929
    %1991 = vmatpush2.bf16.msra.mxu0 %v1928
    %1992 = vmatprep.subr.bf16.mxu0 %v1927
    %1993 = vmatpush2.bf16.msra.mxu0 %v1926
    %1994 = vmatprep.subr.bf16.mxu0 %v1925
    %1995 = vmatpush2.bf16.msra.mxu0 %v1924
    %1996 = vmatprep.subr.bf16.mxu0 %v1923
    %1997 = vmatpush2.bf16.msra.mxu0 %v1922
    %1998 = vmatprep.subr.bf16.mxu0 %v1921
    %1999 = vmatpush2.bf16.msra.mxu0 %v1920
    %2000 = vmatprep.mubr.bf16.mxu0 %v1540
    %2001 = vmatmul.mubr.bf16.gmra.mxu0 %v1539
    %v2002 = vpop.f32.mrf.mxu0
    %v2003 = vadd.f32 %v1802, %v2002
    %v2004 = vpop.f32.mrf.mxu0
    %v2005 = vadd.f32 %v1804, %v2004
    %v2006 = vpop.f32.mrf.mxu0
    %v2007 = vpop.f32.mrf.mxu0
    %2008 = vdwg.mxu0
    %v2009 = vlaneseq
    %v2010 = vshrl.u32 %v2009, 7
    %v2011 = vsub.s32 3, %v2010
    %v2012 = vrot.slane %v61, %v2011
    %v2013 = vlaneseq
    %v2014 = vshrl.u32 %v2013, 7
    %v2015 = vsub.s32 3, %v2014
    %v2016 = vrot.slane %v67, %v2015
    %v2017 = vadd.f32 %v2003, %v2012
    %v2018 = vadd.f32 %v2005, %v2016
    %v2019 = vmul.f32 %v1537, 0.9
    %v2020 = vmul.f32 %v1538, 0.9
    %v2021 = vadd.f32 %v2019, %v2017
    %v2022 = vadd.f32 %v2020, %v2018
    %vm2023 = vcmp.ge.f32.partialorder %v2021, 1.0
    %vm2024 = vcmp.ge.f32.partialorder %v2022, 1.0
    %v2025 = vsel %vm2023, 1, 0
    %v2026 = vsel %vm2024, 1, 0
    %v2027 = vcvt.s32.f32 %v2025
    %v2028 = vcvt.s32.f32 %v2026
    %v2029 = vsel %vm2023, 0.0, %v2021
    %v2030 = vsel %vm2024, 0.0, %v2022
    %v2031 = vpack.c.bf16 %v2027, %v2027
    %v2032 = vpack.c.bf16 %v2028, %v2028
    %2033 = vst [vmem:[#allocation8 + $0x3] sm:$0x1] %v2027
    %2034 = vst [vmem:[#allocation9 + $0x3] sm:$0x1] %v2028
    %v2035 = vld [vmem:[#allocation5] sm:$0xff]
    %v2036 = vld [vmem:[#allocation5 + $0x8] sm:$0xff]
    %v2037 = vld [vmem:[#allocation5 + $0x10] sm:$0xff]
    %v2038 = vld [vmem:[#allocation5 + $0x18] sm:$0xff]
    %v2039 = vld [vmem:[#allocation5 + $0x20] sm:$0xff]
    %v2040 = vld [vmem:[#allocation5 + $0x28] sm:$0xff]
    %v2041 = vld [vmem:[#allocation5 + $0x30] sm:$0xff]
    %v2042 = vld [vmem:[#allocation5 + $0x38] sm:$0xff]
    %v2043 = vld [vmem:[#allocation5 + $0x40] sm:$0xff]
    %v2044 = vld [vmem:[#allocation5 + $0x48] sm:$0xff]
    %v2045 = vld [vmem:[#allocation5 + $0x50] sm:$0xff]
    %v2046 = vld [vmem:[#allocation5 + $0x58] sm:$0xff]
    %v2047 = vld [vmem:[#allocation5 + $0x60] sm:$0xff]
    %v2048 = vld [vmem:[#allocation5 + $0x68] sm:$0xff]
    %v2049 = vld [vmem:[#allocation5 + $0x70] sm:$0xff]
    %v2050 = vld [vmem:[#allocation5 + $0x78] sm:$0xff]
    %v2051 = vld [vmem:[#allocation5 + $0x80] sm:$0xff]
    %v2052 = vld [vmem:[#allocation5 + $0x88] sm:$0xff]
    %v2053 = vld [vmem:[#allocation5 + $0x90] sm:$0xff]
    %v2054 = vld [vmem:[#allocation5 + $0x98] sm:$0xff]
    %v2055 = vld [vmem:[#allocation5 + $0xa0] sm:$0xff]
    %v2056 = vld [vmem:[#allocation5 + $0xa8] sm:$0xff]
    %v2057 = vld [vmem:[#allocation5 + $0xb0] sm:$0xff]
    %v2058 = vld [vmem:[#allocation5 + $0xb8] sm:$0xff]
    %v2059 = vld [vmem:[#allocation5 + $0xc0] sm:$0xff]
    %v2060 = vld [vmem:[#allocation5 + $0xc8] sm:$0xff]
    %v2061 = vld [vmem:[#allocation5 + $0xd0] sm:$0xff]
    %v2062 = vld [vmem:[#allocation5 + $0xd8] sm:$0xff]
    %v2063 = vld [vmem:[#allocation5 + $0xe0] sm:$0xff]
    %v2064 = vld [vmem:[#allocation5 + $0xe8] sm:$0xff]
    %v2065 = vld [vmem:[#allocation5 + $0xf0] sm:$0xff]
    %v2066 = vld [vmem:[#allocation5 + $0xf8] sm:$0xff]
    %v2067 = vld [vmem:[#allocation7] sm:$0xff]
    %v2068 = vld [vmem:[#allocation7 + $0x8] sm:$0xff]
    %v2069 = vld [vmem:[#allocation7 + $0x10] sm:$0xff]
    %v2070 = vld [vmem:[#allocation7 + $0x18] sm:$0xff]
    %v2071 = vld [vmem:[#allocation7 + $0x20] sm:$0xff]
    %v2072 = vld [vmem:[#allocation7 + $0x28] sm:$0xff]
    %v2073 = vld [vmem:[#allocation7 + $0x30] sm:$0xff]
    %v2074 = vld [vmem:[#allocation7 + $0x38] sm:$0xff]
    %v2075 = vld [vmem:[#allocation7 + $0x40] sm:$0xff]
    %v2076 = vld [vmem:[#allocation7 + $0x48] sm:$0xff]
    %v2077 = vld [vmem:[#allocation7 + $0x50] sm:$0xff]
    %v2078 = vld [vmem:[#allocation7 + $0x58] sm:$0xff]
    %v2079 = vld [vmem:[#allocation7 + $0x60] sm:$0xff]
    %v2080 = vld [vmem:[#allocation7 + $0x68] sm:$0xff]
    %v2081 = vld [vmem:[#allocation7 + $0x70] sm:$0xff]
    %v2082 = vld [vmem:[#allocation7 + $0x78] sm:$0xff]
    %v2083 = vld [vmem:[#allocation7 + $0x80] sm:$0xff]
    %v2084 = vld [vmem:[#allocation7 + $0x88] sm:$0xff]
    %v2085 = vld [vmem:[#allocation7 + $0x90] sm:$0xff]
    %v2086 = vld [vmem:[#allocation7 + $0x98] sm:$0xff]
    %v2087 = vld [vmem:[#allocation7 + $0xa0] sm:$0xff]
    %v2088 = vld [vmem:[#allocation7 + $0xa8] sm:$0xff]
    %v2089 = vld [vmem:[#allocation7 + $0xb0] sm:$0xff]
    %v2090 = vld [vmem:[#allocation7 + $0xb8] sm:$0xff]
    %v2091 = vld [vmem:[#allocation7 + $0xc0] sm:$0xff]
    %v2092 = vld [vmem:[#allocation7 + $0xc8] sm:$0xff]
    %v2093 = vld [vmem:[#allocation7 + $0xd0] sm:$0xff]
    %v2094 = vld [vmem:[#allocation7 + $0xd8] sm:$0xff]
    %v2095 = vld [vmem:[#allocation7 + $0xe0] sm:$0xff]
    %v2096 = vld [vmem:[#allocation7 + $0xe8] sm:$0xff]
    %v2097 = vld [vmem:[#allocation7 + $0xf0] sm:$0xff]
    %v2098 = vld [vmem:[#allocation7 + $0xf8] sm:$0xff]
    %v2131 = vunpack.c.l.b16 %v2067
    %v2132 = vunpack.c.h.b16 %v2067
    %v2133 = vunpack.c.l.b16 %v2068
    %v2134 = vunpack.c.h.b16 %v2068
    %v2135 = vunpack.c.l.b16 %v2069
    %v2136 = vunpack.c.h.b16 %v2069
    %v2137 = vunpack.c.l.b16 %v2070
    %v2138 = vunpack.c.h.b16 %v2070
    %v2139 = vunpack.c.l.b16 %v2071
    %v2140 = vunpack.c.h.b16 %v2071
    %v2141 = vunpack.c.l.b16 %v2072
    %v2142 = vunpack.c.h.b16 %v2072
    %v2143 = vunpack.c.l.b16 %v2073
    %v2144 = vunpack.c.h.b16 %v2073
    %v2145 = vunpack.c.l.b16 %v2074
    %v2146 = vunpack.c.h.b16 %v2074
    %v2147 = vunpack.c.l.b16 %v2075
    %v2148 = vunpack.c.h.b16 %v2075
    %v2149 = vunpack.c.l.b16 %v2076
    %v2150 = vunpack.c.h.b16 %v2076
    %v2151 = vunpack.c.l.b16 %v2077
    %v2152 = vunpack.c.h.b16 %v2077
    %v2153 = vunpack.c.l.b16 %v2078
    %v2154 = vunpack.c.h.b16 %v2078
    %v2155 = vunpack.c.l.b16 %v2079
    %v2156 = vunpack.c.h.b16 %v2079
    %v2157 = vunpack.c.l.b16 %v2080
    %v2158 = vunpack.c.h.b16 %v2080
    %v2159 = vunpack.c.l.b16 %v2081
    %v2160 = vunpack.c.h.b16 %v2081
    %v2161 = vunpack.c.l.b16 %v2082
    %v2162 = vunpack.c.h.b16 %v2082
    %v2163 = vunpack.c.l.b16 %v2083
    %v2164 = vunpack.c.h.b16 %v2083
    %v2165 = vunpack.c.l.b16 %v2084
    %v2166 = vunpack.c.h.b16 %v2084
    %v2167 = vunpack.c.l.b16 %v2085
    %v2168 = vunpack.c.h.b16 %v2085
    %v2169 = vunpack.c.l.b16 %v2086
    %v2170 = vunpack.c.h.b16 %v2086
    %v2171 = vunpack.c.l.b16 %v2087
    %v2172 = vunpack.c.h.b16 %v2087
    %v2173 = vunpack.c.l.b16 %v2088
    %v2174 = vunpack.c.h.b16 %v2088
    %v2175 = vunpack.c.l.b16 %v2089
    %v2176 = vunpack.c.h.b16 %v2089
    %v2177 = vunpack.c.l.b16 %v2090
    %v2178 = vunpack.c.h.b16 %v2090
    %v2179 = vunpack.c.l.b16 %v2091
    %v2180 = vunpack.c.h.b16 %v2091
    %v2181 = vunpack.c.l.b16 %v2092
    %v2182 = vunpack.c.h.b16 %v2092
    %v2183 = vunpack.c.l.b16 %v2093
    %v2184 = vunpack.c.h.b16 %v2093
    %v2185 = vunpack.c.l.b16 %v2094
    %v2186 = vunpack.c.h.b16 %v2094
    %v2187 = vunpack.c.l.b16 %v2095
    %v2188 = vunpack.c.h.b16 %v2095
    %v2189 = vunpack.c.l.b16 %v2096
    %v2190 = vunpack.c.h.b16 %v2096
    %v2191 = vunpack.c.l.b16 %v2097
    %v2192 = vunpack.c.h.b16 %v2097
    %v2193 = vunpack.c.l.b16 %v2098
    %v2194 = vunpack.c.h.b16 %v2098
    %v2195 = vpack.c.b16 %v2133, %v2131
    %v2196 = vpack.c.b16 %v2134, %v2132
    %v2197 = vpack.c.b16 %v2137, %v2135
    %v2198 = vpack.c.b16 %v2138, %v2136
    %v2199 = vpack.c.b16 %v2141, %v2139
    %v2200 = vpack.c.b16 %v2142, %v2140
    %v2201 = vpack.c.b16 %v2145, %v2143
    %v2202 = vpack.c.b16 %v2146, %v2144
    %v2203 = vpack.c.b16 %v2149, %v2147
    %v2204 = vpack.c.b16 %v2150, %v2148
    %v2205 = vpack.c.b16 %v2153, %v2151
    %v2206 = vpack.c.b16 %v2154, %v2152
    %v2207 = vpack.c.b16 %v2157, %v2155
    %v2208 = vpack.c.b16 %v2158, %v2156
    %v2209 = vpack.c.b16 %v2161, %v2159
    %v2210 = vpack.c.b16 %v2162, %v2160
    %v2211 = vpack.c.b16 %v2165, %v2163
    %v2212 = vpack.c.b16 %v2166, %v2164
    %v2213 = vpack.c.b16 %v2169, %v2167
    %v2214 = vpack.c.b16 %v2170, %v2168
    %v2215 = vpack.c.b16 %v2173, %v2171
    %v2216 = vpack.c.b16 %v2174, %v2172
    %v2217 = vpack.c.b16 %v2177, %v2175
    %v2218 = vpack.c.b16 %v2178, %v2176
    %v2219 = vpack.c.b16 %v2181, %v2179
    %v2220 = vpack.c.b16 %v2182, %v2180
    %v2221 = vpack.c.b16 %v2185, %v2183
    %v2222 = vpack.c.b16 %v2186, %v2184
    %v2223 = vpack.c.b16 %v2189, %v2187
    %v2224 = vpack.c.b16 %v2190, %v2188
    %v2225 = vpack.c.b16 %v2193, %v2191
    %v2226 = vpack.c.b16 %v2194, %v2192
    %2259 = vmatprep.subr.bf16.mxu0 %v2210
    %2260 = vmatpush1.bf16.msra.mxu0 %v2209
    %2261 = vmatprep.subr.bf16.mxu0 %v2208
    %2262 = vmatpush1.bf16.msra.mxu0 %v2207
    %2263 = vmatprep.subr.bf16.mxu0 %v2206
    %2264 = vmatpush1.bf16.msra.mxu0 %v2205
    %2265 = vmatprep.subr.bf16.mxu0 %v2204
    %2266 = vmatpush1.bf16.msra.mxu0 %v2203
    %2267 = vmatprep.subr.bf16.mxu0 %v2202
    %2268 = vmatpush1.bf16.msra.mxu0 %v2201
    %2269 = vmatprep.subr.bf16.mxu0 %v2200
    %2270 = vmatpush1.bf16.msra.mxu0 %v2199
    %2271 = vmatprep.subr.bf16.mxu0 %v2198
    %2272 = vmatpush1.bf16.msra.mxu0 %v2197
    %2273 = vmatprep.subr.bf16.mxu0 %v2196
    %2274 = vmatpush1.bf16.msra.mxu0 %v2195
    %2275 = vmatprep.subr.bf16.mxu0 %v2226
    %2276 = vmatpush2.bf16.msra.mxu0 %v2225
    %2277 = vmatprep.subr.bf16.mxu0 %v2224
    %2278 = vmatpush2.bf16.msra.mxu0 %v2223
    %2279 = vmatprep.subr.bf16.mxu0 %v2222
    %2280 = vmatpush2.bf16.msra.mxu0 %v2221
    %2281 = vmatprep.subr.bf16.mxu0 %v2220
    %2282 = vmatpush2.bf16.msra.mxu0 %v2219
    %2283 = vmatprep.subr.bf16.mxu0 %v2218
    %2284 = vmatpush2.bf16.msra.mxu0 %v2217
    %2285 = vmatprep.subr.bf16.mxu0 %v2216
    %2286 = vmatpush2.bf16.msra.mxu0 %v2215
    %2287 = vmatprep.subr.bf16.mxu0 %v2214
    %2288 = vmatpush2.bf16.msra.mxu0 %v2213
    %2289 = vmatprep.subr.bf16.mxu0 %v2212
    %2290 = vmatpush2.bf16.msra.mxu0 %v2211
    %2291 = vmatprep.mubr.bf16.mxu0 %v2032
    %2292 = vmatmul.mubr.bf16.gmra.mxu0 %v2031
    %v2293 = vpop.f32.mrf.mxu0
    %v2294 = vadd.f32 0.0, %v2293
    %v2295 = vpop.f32.mrf.mxu0
    %v2296 = vadd.f32 0.0, %v2295
    %v2297 = vpop.f32.mrf.mxu0
    %v2298 = vpop.f32.mrf.mxu0
    %2299 = vdwg.mxu0
    %v2332 = vunpack.c.l.b16 %v2035
    %v2333 = vunpack.c.h.b16 %v2035
    %v2334 = vunpack.c.l.b16 %v2036
    %v2335 = vunpack.c.h.b16 %v2036
    %v2336 = vunpack.c.l.b16 %v2037
    %v2337 = vunpack.c.h.b16 %v2037
    %v2338 = vunpack.c.l.b16 %v2038
    %v2339 = vunpack.c.h.b16 %v2038
    %v2340 = vunpack.c.l.b16 %v2039
    %v2341 = vunpack.c.h.b16 %v2039
    %v2342 = vunpack.c.l.b16 %v2040
    %v2343 = vunpack.c.h.b16 %v2040
    %v2344 = vunpack.c.l.b16 %v2041
    %v2345 = vunpack.c.h.b16 %v2041
    %v2346 = vunpack.c.l.b16 %v2042
    %v2347 = vunpack.c.h.b16 %v2042
    %v2348 = vunpack.c.l.b16 %v2043
    %v2349 = vunpack.c.h.b16 %v2043
    %v2350 = vunpack.c.l.b16 %v2044
    %v2351 = vunpack.c.h.b16 %v2044
    %v2352 = vunpack.c.l.b16 %v2045
    %v2353 = vunpack.c.h.b16 %v2045
    %v2354 = vunpack.c.l.b16 %v2046
    %v2355 = vunpack.c.h.b16 %v2046
    %v2356 = vunpack.c.l.b16 %v2047
    %v2357 = vunpack.c.h.b16 %v2047
    %v2358 = vunpack.c.l.b16 %v2048
    %v2359 = vunpack.c.h.b16 %v2048
    %v2360 = vunpack.c.l.b16 %v2049
    %v2361 = vunpack.c.h.b16 %v2049
    %v2362 = vunpack.c.l.b16 %v2050
    %v2363 = vunpack.c.h.b16 %v2050
    %v2364 = vunpack.c.l.b16 %v2051
    %v2365 = vunpack.c.h.b16 %v2051
    %v2366 = vunpack.c.l.b16 %v2052
    %v2367 = vunpack.c.h.b16 %v2052
    %v2368 = vunpack.c.l.b16 %v2053
    %v2369 = vunpack.c.h.b16 %v2053
    %v2370 = vunpack.c.l.b16 %v2054
    %v2371 = vunpack.c.h.b16 %v2054
    %v2372 = vunpack.c.l.b16 %v2055
    %v2373 = vunpack.c.h.b16 %v2055
    %v2374 = vunpack.c.l.b16 %v2056
    %v2375 = vunpack.c.h.b16 %v2056
    %v2376 = vunpack.c.l.b16 %v2057
    %v2377 = vunpack.c.h.b16 %v2057
    %v2378 = vunpack.c.l.b16 %v2058
    %v2379 = vunpack.c.h.b16 %v2058
    %v2380 = vunpack.c.l.b16 %v2059
    %v2381 = vunpack.c.h.b16 %v2059
    %v2382 = vunpack.c.l.b16 %v2060
    %v2383 = vunpack.c.h.b16 %v2060
    %v2384 = vunpack.c.l.b16 %v2061
    %v2385 = vunpack.c.h.b16 %v2061
    %v2386 = vunpack.c.l.b16 %v2062
    %v2387 = vunpack.c.h.b16 %v2062
    %v2388 = vunpack.c.l.b16 %v2063
    %v2389 = vunpack.c.h.b16 %v2063
    %v2390 = vunpack.c.l.b16 %v2064
    %v2391 = vunpack.c.h.b16 %v2064
    %v2392 = vunpack.c.l.b16 %v2065
    %v2393 = vunpack.c.h.b16 %v2065
    %v2394 = vunpack.c.l.b16 %v2066
    %v2395 = vunpack.c.h.b16 %v2066
    %v2396 = vpack.c.b16 %v2334, %v2332
    %v2397 = vpack.c.b16 %v2335, %v2333
    %v2398 = vpack.c.b16 %v2338, %v2336
    %v2399 = vpack.c.b16 %v2339, %v2337
    %v2400 = vpack.c.b16 %v2342, %v2340
    %v2401 = vpack.c.b16 %v2343, %v2341
    %v2402 = vpack.c.b16 %v2346, %v2344
    %v2403 = vpack.c.b16 %v2347, %v2345
    %v2404 = vpack.c.b16 %v2350, %v2348
    %v2405 = vpack.c.b16 %v2351, %v2349
    %v2406 = vpack.c.b16 %v2354, %v2352
    %v2407 = vpack.c.b16 %v2355, %v2353
    %v2408 = vpack.c.b16 %v2358, %v2356
    %v2409 = vpack.c.b16 %v2359, %v2357
    %v2410 = vpack.c.b16 %v2362, %v2360
    %v2411 = vpack.c.b16 %v2363, %v2361
    %v2412 = vpack.c.b16 %v2366, %v2364
    %v2413 = vpack.c.b16 %v2367, %v2365
    %v2414 = vpack.c.b16 %v2370, %v2368
    %v2415 = vpack.c.b16 %v2371, %v2369
    %v2416 = vpack.c.b16 %v2374, %v2372
    %v2417 = vpack.c.b16 %v2375, %v2373
    %v2418 = vpack.c.b16 %v2378, %v2376
    %v2419 = vpack.c.b16 %v2379, %v2377
    %v2420 = vpack.c.b16 %v2382, %v2380
    %v2421 = vpack.c.b16 %v2383, %v2381
    %v2422 = vpack.c.b16 %v2386, %v2384
    %v2423 = vpack.c.b16 %v2387, %v2385
    %v2424 = vpack.c.b16 %v2390, %v2388
    %v2425 = vpack.c.b16 %v2391, %v2389
    %v2426 = vpack.c.b16 %v2394, %v2392
    %v2427 = vpack.c.b16 %v2395, %v2393
    %2460 = vmatprep.subr.bf16.mxu0 %v2411
    %2461 = vmatpush1.bf16.msra.mxu0 %v2410
    %2462 = vmatprep.subr.bf16.mxu0 %v2409
    %2463 = vmatpush1.bf16.msra.mxu0 %v2408
    %2464 = vmatprep.subr.bf16.mxu0 %v2407
    %2465 = vmatpush1.bf16.msra.mxu0 %v2406
    %2466 = vmatprep.subr.bf16.mxu0 %v2405
    %2467 = vmatpush1.bf16.msra.mxu0 %v2404
    %2468 = vmatprep.subr.bf16.mxu0 %v2403
    %2469 = vmatpush1.bf16.msra.mxu0 %v2402
    %2470 = vmatprep.subr.bf16.mxu0 %v2401
    %2471 = vmatpush1.bf16.msra.mxu0 %v2400
    %2472 = vmatprep.subr.bf16.mxu0 %v2399
    %2473 = vmatpush1.bf16.msra.mxu0 %v2398
    %2474 = vmatprep.subr.bf16.mxu0 %v2397
    %2475 = vmatpush1.bf16.msra.mxu0 %v2396
    %2476 = vmatprep.subr.bf16.mxu0 %v2427
    %2477 = vmatpush2.bf16.msra.mxu0 %v2426
    %2478 = vmatprep.subr.bf16.mxu0 %v2425
    %2479 = vmatpush2.bf16.msra.mxu0 %v2424
    %2480 = vmatprep.subr.bf16.mxu0 %v2423
    %2481 = vmatpush2.bf16.msra.mxu0 %v2422
    %2482 = vmatprep.subr.bf16.mxu0 %v2421
    %2483 = vmatpush2.bf16.msra.mxu0 %v2420
    %2484 = vmatprep.subr.bf16.mxu0 %v2419
    %2485 = vmatpush2.bf16.msra.mxu0 %v2418
    %2486 = vmatprep.subr.bf16.mxu0 %v2417
    %2487 = vmatpush2.bf16.msra.mxu0 %v2416
    %2488 = vmatprep.subr.bf16.mxu0 %v2415
    %2489 = vmatpush2.bf16.msra.mxu0 %v2414
    %2490 = vmatprep.subr.bf16.mxu0 %v2413
    %2491 = vmatpush2.bf16.msra.mxu0 %v2412
    %2492 = vmatprep.mubr.bf16.mxu0 %v2032
    %2493 = vmatmul.mubr.bf16.gmra.mxu0 %v2031
    %v2494 = vpop.f32.mrf.mxu0
    %v2495 = vadd.f32 %v2294, %v2494
    %v2496 = vpop.f32.mrf.mxu0
    %v2497 = vadd.f32 %v2296, %v2496
    %v2498 = vpop.f32.mrf.mxu0
    %v2499 = vpop.f32.mrf.mxu0
    %2500 = vdwg.mxu0
    %v2501 = vlaneseq
    %v2502 = vshrl.u32 %v2501, 7
    %v2503 = vsub.s32 4, %v2502
    %v2504 = vrot.slane %v61, %v2503
    %v2505 = vlaneseq
    %v2506 = vshrl.u32 %v2505, 7
    %v2507 = vsub.s32 4, %v2506
    %v2508 = vrot.slane %v67, %v2507
    %v2509 = vadd.f32 %v2495, %v2504
    %v2510 = vadd.f32 %v2497, %v2508
    %v2511 = vmul.f32 %v2029, 0.9
    %v2512 = vmul.f32 %v2030, 0.9
    %v2513 = vadd.f32 %v2511, %v2509
    %v2514 = vadd.f32 %v2512, %v2510
    %vm2515 = vcmp.ge.f32.partialorder %v2513, 1.0
    %vm2516 = vcmp.ge.f32.partialorder %v2514, 1.0
    %v2517 = vsel %vm2515, 1, 0
    %v2518 = vsel %vm2516, 1, 0
    %v2519 = vcvt.s32.f32 %v2517
    %v2520 = vcvt.s32.f32 %v2518
    %v2521 = vsel %vm2515, 0.0, %v2513
    %v2522 = vsel %vm2516, 0.0, %v2514
    %v2523 = vpack.c.bf16 %v2519, %v2519
    %v2524 = vpack.c.bf16 %v2520, %v2520
    %2525 = vst [vmem:[#allocation8 + $0x4] sm:$0x1] %v2519
    %2526 = vst [vmem:[#allocation9 + $0x4] sm:$0x1] %v2520
    %v2527 = vld [vmem:[#allocation5] sm:$0xff]
    %v2528 = vld [vmem:[#allocation5 + $0x8] sm:$0xff]
    %v2529 = vld [vmem:[#allocation5 + $0x10] sm:$0xff]
    %v2530 = vld [vmem:[#allocation5 + $0x18] sm:$0xff]
    %v2531 = vld [vmem:[#allocation5 + $0x20] sm:$0xff]
    %v2532 = vld [vmem:[#allocation5 + $0x28] sm:$0xff]
    %v2533 = vld [vmem:[#allocation5 + $0x30] sm:$0xff]
    %v2534 = vld [vmem:[#allocation5 + $0x38] sm:$0xff]
    %v2535 = vld [vmem:[#allocation5 + $0x40] sm:$0xff]
    %v2536 = vld [vmem:[#allocation5 + $0x48] sm:$0xff]
    %v2537 = vld [vmem:[#allocation5 + $0x50] sm:$0xff]
    %v2538 = vld [vmem:[#allocation5 + $0x58] sm:$0xff]
    %v2539 = vld [vmem:[#allocation5 + $0x60] sm:$0xff]
    %v2540 = vld [vmem:[#allocation5 + $0x68] sm:$0xff]
    %v2541 = vld [vmem:[#allocation5 + $0x70] sm:$0xff]
    %v2542 = vld [vmem:[#allocation5 + $0x78] sm:$0xff]
    %v2543 = vld [vmem:[#allocation5 + $0x80] sm:$0xff]
    %v2544 = vld [vmem:[#allocation5 + $0x88] sm:$0xff]
    %v2545 = vld [vmem:[#allocation5 + $0x90] sm:$0xff]
    %v2546 = vld [vmem:[#allocation5 + $0x98] sm:$0xff]
    %v2547 = vld [vmem:[#allocation5 + $0xa0] sm:$0xff]
    %v2548 = vld [vmem:[#allocation5 + $0xa8] sm:$0xff]
    %v2549 = vld [vmem:[#allocation5 + $0xb0] sm:$0xff]
    %v2550 = vld [vmem:[#allocation5 + $0xb8] sm:$0xff]
    %v2551 = vld [vmem:[#allocation5 + $0xc0] sm:$0xff]
    %v2552 = vld [vmem:[#allocation5 + $0xc8] sm:$0xff]
    %v2553 = vld [vmem:[#allocation5 + $0xd0] sm:$0xff]
    %v2554 = vld [vmem:[#allocation5 + $0xd8] sm:$0xff]
    %v2555 = vld [vmem:[#allocation5 + $0xe0] sm:$0xff]
    %v2556 = vld [vmem:[#allocation5 + $0xe8] sm:$0xff]
    %v2557 = vld [vmem:[#allocation5 + $0xf0] sm:$0xff]
    %v2558 = vld [vmem:[#allocation5 + $0xf8] sm:$0xff]
    %v2559 = vld [vmem:[#allocation7] sm:$0xff]
    %v2560 = vld [vmem:[#allocation7 + $0x8] sm:$0xff]
    %v2561 = vld [vmem:[#allocation7 + $0x10] sm:$0xff]
    %v2562 = vld [vmem:[#allocation7 + $0x18] sm:$0xff]
    %v2563 = vld [vmem:[#allocation7 + $0x20] sm:$0xff]
    %v2564 = vld [vmem:[#allocation7 + $0x28] sm:$0xff]
    %v2565 = vld [vmem:[#allocation7 + $0x30] sm:$0xff]
    %v2566 = vld [vmem:[#allocation7 + $0x38] sm:$0xff]
    %v2567 = vld [vmem:[#allocation7 + $0x40] sm:$0xff]
    %v2568 = vld [vmem:[#allocation7 + $0x48] sm:$0xff]
    %v2569 = vld [vmem:[#allocation7 + $0x50] sm:$0xff]
    %v2570 = vld [vmem:[#allocation7 + $0x58] sm:$0xff]
    %v2571 = vld [vmem:[#allocation7 + $0x60] sm:$0xff]
    %v2572 = vld [vmem:[#allocation7 + $0x68] sm:$0xff]
    %v2573 = vld [vmem:[#allocation7 + $0x70] sm:$0xff]
    %v2574 = vld [vmem:[#allocation7 + $0x78] sm:$0xff]
    %v2575 = vld [vmem:[#allocation7 + $0x80] sm:$0xff]
    %v2576 = vld [vmem:[#allocation7 + $0x88] sm:$0xff]
    %v2577 = vld [vmem:[#allocation7 + $0x90] sm:$0xff]
    %v2578 = vld [vmem:[#allocation7 + $0x98] sm:$0xff]
    %v2579 = vld [vmem:[#allocation7 + $0xa0] sm:$0xff]
    %v2580 = vld [vmem:[#allocation7 + $0xa8] sm:$0xff]
    %v2581 = vld [vmem:[#allocation7 + $0xb0] sm:$0xff]
    %v2582 = vld [vmem:[#allocation7 + $0xb8] sm:$0xff]
    %v2583 = vld [vmem:[#allocation7 + $0xc0] sm:$0xff]
    %v2584 = vld [vmem:[#allocation7 + $0xc8] sm:$0xff]
    %v2585 = vld [vmem:[#allocation7 + $0xd0] sm:$0xff]
    %v2586 = vld [vmem:[#allocation7 + $0xd8] sm:$0xff]
    %v2587 = vld [vmem:[#allocation7 + $0xe0] sm:$0xff]
    %v2588 = vld [vmem:[#allocation7 + $0xe8] sm:$0xff]
    %v2589 = vld [vmem:[#allocation7 + $0xf0] sm:$0xff]
    %v2590 = vld [vmem:[#allocation7 + $0xf8] sm:$0xff]
    %v2623 = vunpack.c.l.b16 %v2559
    %v2624 = vunpack.c.h.b16 %v2559
    %v2625 = vunpack.c.l.b16 %v2560
    %v2626 = vunpack.c.h.b16 %v2560
    %v2627 = vunpack.c.l.b16 %v2561
    %v2628 = vunpack.c.h.b16 %v2561
    %v2629 = vunpack.c.l.b16 %v2562
    %v2630 = vunpack.c.h.b16 %v2562
    %v2631 = vunpack.c.l.b16 %v2563
    %v2632 = vunpack.c.h.b16 %v2563
    %v2633 = vunpack.c.l.b16 %v2564
    %v2634 = vunpack.c.h.b16 %v2564
    %v2635 = vunpack.c.l.b16 %v2565
    %v2636 = vunpack.c.h.b16 %v2565
    %v2637 = vunpack.c.l.b16 %v2566
    %v2638 = vunpack.c.h.b16 %v2566
    %v2639 = vunpack.c.l.b16 %v2567
    %v2640 = vunpack.c.h.b16 %v2567
    %v2641 = vunpack.c.l.b16 %v2568
    %v2642 = vunpack.c.h.b16 %v2568
    %v2643 = vunpack.c.l.b16 %v2569
    %v2644 = vunpack.c.h.b16 %v2569
    %v2645 = vunpack.c.l.b16 %v2570
    %v2646 = vunpack.c.h.b16 %v2570
    %v2647 = vunpack.c.l.b16 %v2571
    %v2648 = vunpack.c.h.b16 %v2571
    %v2649 = vunpack.c.l.b16 %v2572
    %v2650 = vunpack.c.h.b16 %v2572
    %v2651 = vunpack.c.l.b16 %v2573
    %v2652 = vunpack.c.h.b16 %v2573
    %v2653 = vunpack.c.l.b16 %v2574
    %v2654 = vunpack.c.h.b16 %v2574
    %v2655 = vunpack.c.l.b16 %v2575
    %v2656 = vunpack.c.h.b16 %v2575
    %v2657 = vunpack.c.l.b16 %v2576
    %v2658 = vunpack.c.h.b16 %v2576
    %v2659 = vunpack.c.l.b16 %v2577
    %v2660 = vunpack.c.h.b16 %v2577
    %v2661 = vunpack.c.l.b16 %v2578
    %v2662 = vunpack.c.h.b16 %v2578
    %v2663 = vunpack.c.l.b16 %v2579
    %v2664 = vunpack.c.h.b16 %v2579
    %v2665 = vunpack.c.l.b16 %v2580
    %v2666 = vunpack.c.h.b16 %v2580
    %v2667 = vunpack.c.l.b16 %v2581
    %v2668 = vunpack.c.h.b16 %v2581
    %v2669 = vunpack.c.l.b16 %v2582
    %v2670 = vunpack.c.h.b16 %v2582
    %v2671 = vunpack.c.l.b16 %v2583
    %v2672 = vunpack.c.h.b16 %v2583
    %v2673 = vunpack.c.l.b16 %v2584
    %v2674 = vunpack.c.h.b16 %v2584
    %v2675 = vunpack.c.l.b16 %v2585
    %v2676 = vunpack.c.h.b16 %v2585
    %v2677 = vunpack.c.l.b16 %v2586
    %v2678 = vunpack.c.h.b16 %v2586
    %v2679 = vunpack.c.l.b16 %v2587
    %v2680 = vunpack.c.h.b16 %v2587
    %v2681 = vunpack.c.l.b16 %v2588
    %v2682 = vunpack.c.h.b16 %v2588
    %v2683 = vunpack.c.l.b16 %v2589
    %v2684 = vunpack.c.h.b16 %v2589
    %v2685 = vunpack.c.l.b16 %v2590
    %v2686 = vunpack.c.h.b16 %v2590
    %v2687 = vpack.c.b16 %v2625, %v2623
    %v2688 = vpack.c.b16 %v2626, %v2624
    %v2689 = vpack.c.b16 %v2629, %v2627
    %v2690 = vpack.c.b16 %v2630, %v2628
    %v2691 = vpack.c.b16 %v2633, %v2631
    %v2692 = vpack.c.b16 %v2634, %v2632
    %v2693 = vpack.c.b16 %v2637, %v2635
    %v2694 = vpack.c.b16 %v2638, %v2636
    %v2695 = vpack.c.b16 %v2641, %v2639
    %v2696 = vpack.c.b16 %v2642, %v2640
    %v2697 = vpack.c.b16 %v2645, %v2643
    %v2698 = vpack.c.b16 %v2646, %v2644
    %v2699 = vpack.c.b16 %v2649, %v2647
    %v2700 = vpack.c.b16 %v2650, %v2648
    %v2701 = vpack.c.b16 %v2653, %v2651
    %v2702 = vpack.c.b16 %v2654, %v2652
    %v2703 = vpack.c.b16 %v2657, %v2655
    %v2704 = vpack.c.b16 %v2658, %v2656
    %v2705 = vpack.c.b16 %v2661, %v2659
    %v2706 = vpack.c.b16 %v2662, %v2660
    %v2707 = vpack.c.b16 %v2665, %v2663
    %v2708 = vpack.c.b16 %v2666, %v2664
    %v2709 = vpack.c.b16 %v2669, %v2667
    %v2710 = vpack.c.b16 %v2670, %v2668
    %v2711 = vpack.c.b16 %v2673, %v2671
    %v2712 = vpack.c.b16 %v2674, %v2672
    %v2713 = vpack.c.b16 %v2677, %v2675
    %v2714 = vpack.c.b16 %v2678, %v2676
    %v2715 = vpack.c.b16 %v2681, %v2679
    %v2716 = vpack.c.b16 %v2682, %v2680
    %v2717 = vpack.c.b16 %v2685, %v2683
    %v2718 = vpack.c.b16 %v2686, %v2684
    %2751 = vmatprep.subr.bf16.mxu0 %v2702
    %2752 = vmatpush1.bf16.msra.mxu0 %v2701
    %2753 = vmatprep.subr.bf16.mxu0 %v2700
    %2754 = vmatpush1.bf16.msra.mxu0 %v2699
    %2755 = vmatprep.subr.bf16.mxu0 %v2698
    %2756 = vmatpush1.bf16.msra.mxu0 %v2697
    %2757 = vmatprep.subr.bf16.mxu0 %v2696
    %2758 = vmatpush1.bf16.msra.mxu0 %v2695
    %2759 = vmatprep.subr.bf16.mxu0 %v2694
    %2760 = vmatpush1.bf16.msra.mxu0 %v2693
    %2761 = vmatprep.subr.bf16.mxu0 %v2692
    %2762 = vmatpush1.bf16.msra.mxu0 %v2691
    %2763 = vmatprep.subr.bf16.mxu0 %v2690
    %2764 = vmatpush1.bf16.msra.mxu0 %v2689
    %2765 = vmatprep.subr.bf16.mxu0 %v2688
    %2766 = vmatpush1.bf16.msra.mxu0 %v2687
    %2767 = vmatprep.subr.bf16.mxu0 %v2718
    %2768 = vmatpush2.bf16.msra.mxu0 %v2717
    %2769 = vmatprep.subr.bf16.mxu0 %v2716
    %2770 = vmatpush2.bf16.msra.mxu0 %v2715
    %2771 = vmatprep.subr.bf16.mxu0 %v2714
    %2772 = vmatpush2.bf16.msra.mxu0 %v2713
    %2773 = vmatprep.subr.bf16.mxu0 %v2712
    %2774 = vmatpush2.bf16.msra.mxu0 %v2711
    %2775 = vmatprep.subr.bf16.mxu0 %v2710
    %2776 = vmatpush2.bf16.msra.mxu0 %v2709
    %2777 = vmatprep.subr.bf16.mxu0 %v2708
    %2778 = vmatpush2.bf16.msra.mxu0 %v2707
    %2779 = vmatprep.subr.bf16.mxu0 %v2706
    %2780 = vmatpush2.bf16.msra.mxu0 %v2705
    %2781 = vmatprep.subr.bf16.mxu0 %v2704
    %2782 = vmatpush2.bf16.msra.mxu0 %v2703
    %2783 = vmatprep.mubr.bf16.mxu0 %v2524
    %2784 = vmatmul.mubr.bf16.gmra.mxu0 %v2523
    %v2785 = vpop.f32.mrf.mxu0
    %v2786 = vadd.f32 0.0, %v2785
    %v2787 = vpop.f32.mrf.mxu0
    %v2788 = vadd.f32 0.0, %v2787
    %v2789 = vpop.f32.mrf.mxu0
    %v2790 = vpop.f32.mrf.mxu0
    %2791 = vdwg.mxu0
    %v2824 = vunpack.c.l.b16 %v2527
    %v2825 = vunpack.c.h.b16 %v2527
    %v2826 = vunpack.c.l.b16 %v2528
    %v2827 = vunpack.c.h.b16 %v2528
    %v2828 = vunpack.c.l.b16 %v2529
    %v2829 = vunpack.c.h.b16 %v2529
    %v2830 = vunpack.c.l.b16 %v2530
    %v2831 = vunpack.c.h.b16 %v2530
    %v2832 = vunpack.c.l.b16 %v2531
    %v2833 = vunpack.c.h.b16 %v2531
    %v2834 = vunpack.c.l.b16 %v2532
    %v2835 = vunpack.c.h.b16 %v2532
    %v2836 = vunpack.c.l.b16 %v2533
    %v2837 = vunpack.c.h.b16 %v2533
    %v2838 = vunpack.c.l.b16 %v2534
    %v2839 = vunpack.c.h.b16 %v2534
    %v2840 = vunpack.c.l.b16 %v2535
    %v2841 = vunpack.c.h.b16 %v2535
    %v2842 = vunpack.c.l.b16 %v2536
    %v2843 = vunpack.c.h.b16 %v2536
    %v2844 = vunpack.c.l.b16 %v2537
    %v2845 = vunpack.c.h.b16 %v2537
    %v2846 = vunpack.c.l.b16 %v2538
    %v2847 = vunpack.c.h.b16 %v2538
    %v2848 = vunpack.c.l.b16 %v2539
    %v2849 = vunpack.c.h.b16 %v2539
    %v2850 = vunpack.c.l.b16 %v2540
    %v2851 = vunpack.c.h.b16 %v2540
    %v2852 = vunpack.c.l.b16 %v2541
    %v2853 = vunpack.c.h.b16 %v2541
    %v2854 = vunpack.c.l.b16 %v2542
    %v2855 = vunpack.c.h.b16 %v2542
    %v2856 = vunpack.c.l.b16 %v2543
    %v2857 = vunpack.c.h.b16 %v2543
    %v2858 = vunpack.c.l.b16 %v2544
    %v2859 = vunpack.c.h.b16 %v2544
    %v2860 = vunpack.c.l.b16 %v2545
    %v2861 = vunpack.c.h.b16 %v2545
    %v2862 = vunpack.c.l.b16 %v2546
    %v2863 = vunpack.c.h.b16 %v2546
    %v2864 = vunpack.c.l.b16 %v2547
    %v2865 = vunpack.c.h.b16 %v2547
    %v2866 = vunpack.c.l.b16 %v2548
    %v2867 = vunpack.c.h.b16 %v2548
    %v2868 = vunpack.c.l.b16 %v2549
    %v2869 = vunpack.c.h.b16 %v2549
    %v2870 = vunpack.c.l.b16 %v2550
    %v2871 = vunpack.c.h.b16 %v2550
    %v2872 = vunpack.c.l.b16 %v2551
    %v2873 = vunpack.c.h.b16 %v2551
    %v2874 = vunpack.c.l.b16 %v2552
    %v2875 = vunpack.c.h.b16 %v2552
    %v2876 = vunpack.c.l.b16 %v2553
    %v2877 = vunpack.c.h.b16 %v2553
    %v2878 = vunpack.c.l.b16 %v2554
    %v2879 = vunpack.c.h.b16 %v2554
    %v2880 = vunpack.c.l.b16 %v2555
    %v2881 = vunpack.c.h.b16 %v2555
    %v2882 = vunpack.c.l.b16 %v2556
    %v2883 = vunpack.c.h.b16 %v2556
    %v2884 = vunpack.c.l.b16 %v2557
    %v2885 = vunpack.c.h.b16 %v2557
    %v2886 = vunpack.c.l.b16 %v2558
    %v2887 = vunpack.c.h.b16 %v2558
    %v2888 = vpack.c.b16 %v2826, %v2824
    %v2889 = vpack.c.b16 %v2827, %v2825
    %v2890 = vpack.c.b16 %v2830, %v2828
    %v2891 = vpack.c.b16 %v2831, %v2829
    %v2892 = vpack.c.b16 %v2834, %v2832
    %v2893 = vpack.c.b16 %v2835, %v2833
    %v2894 = vpack.c.b16 %v2838, %v2836
    %v2895 = vpack.c.b16 %v2839, %v2837
    %v2896 = vpack.c.b16 %v2842, %v2840
    %v2897 = vpack.c.b16 %v2843, %v2841
    %v2898 = vpack.c.b16 %v2846, %v2844
    %v2899 = vpack.c.b16 %v2847, %v2845
    %v2900 = vpack.c.b16 %v2850, %v2848
    %v2901 = vpack.c.b16 %v2851, %v2849
    %v2902 = vpack.c.b16 %v2854, %v2852
    %v2903 = vpack.c.b16 %v2855, %v2853
    %v2904 = vpack.c.b16 %v2858, %v2856
    %v2905 = vpack.c.b16 %v2859, %v2857
    %v2906 = vpack.c.b16 %v2862, %v2860
    %v2907 = vpack.c.b16 %v2863, %v2861
    %v2908 = vpack.c.b16 %v2866, %v2864
    %v2909 = vpack.c.b16 %v2867, %v2865
    %v2910 = vpack.c.b16 %v2870, %v2868
    %v2911 = vpack.c.b16 %v2871, %v2869
    %v2912 = vpack.c.b16 %v2874, %v2872
    %v2913 = vpack.c.b16 %v2875, %v2873
    %v2914 = vpack.c.b16 %v2878, %v2876
    %v2915 = vpack.c.b16 %v2879, %v2877
    %v2916 = vpack.c.b16 %v2882, %v2880
    %v2917 = vpack.c.b16 %v2883, %v2881
    %v2918 = vpack.c.b16 %v2886, %v2884
    %v2919 = vpack.c.b16 %v2887, %v2885
    %2952 = vmatprep.subr.bf16.mxu0 %v2903
    %2953 = vmatpush1.bf16.msra.mxu0 %v2902
    %2954 = vmatprep.subr.bf16.mxu0 %v2901
    %2955 = vmatpush1.bf16.msra.mxu0 %v2900
    %2956 = vmatprep.subr.bf16.mxu0 %v2899
    %2957 = vmatpush1.bf16.msra.mxu0 %v2898
    %2958 = vmatprep.subr.bf16.mxu0 %v2897
    %2959 = vmatpush1.bf16.msra.mxu0 %v2896
    %2960 = vmatprep.subr.bf16.mxu0 %v2895
    %2961 = vmatpush1.bf16.msra.mxu0 %v2894
    %2962 = vmatprep.subr.bf16.mxu0 %v2893
    %2963 = vmatpush1.bf16.msra.mxu0 %v2892
    %2964 = vmatprep.subr.bf16.mxu0 %v2891
    %2965 = vmatpush1.bf16.msra.mxu0 %v2890
    %2966 = vmatprep.subr.bf16.mxu0 %v2889
    %2967 = vmatpush1.bf16.msra.mxu0 %v2888
    %2968 = vmatprep.subr.bf16.mxu0 %v2919
    %2969 = vmatpush2.bf16.msra.mxu0 %v2918
    %2970 = vmatprep.subr.bf16.mxu0 %v2917
    %2971 = vmatpush2.bf16.msra.mxu0 %v2916
    %2972 = vmatprep.subr.bf16.mxu0 %v2915
    %2973 = vmatpush2.bf16.msra.mxu0 %v2914
    %2974 = vmatprep.subr.bf16.mxu0 %v2913
    %2975 = vmatpush2.bf16.msra.mxu0 %v2912
    %2976 = vmatprep.subr.bf16.mxu0 %v2911
    %2977 = vmatpush2.bf16.msra.mxu0 %v2910
    %2978 = vmatprep.subr.bf16.mxu0 %v2909
    %2979 = vmatpush2.bf16.msra.mxu0 %v2908
    %2980 = vmatprep.subr.bf16.mxu0 %v2907
    %2981 = vmatpush2.bf16.msra.mxu0 %v2906
    %2982 = vmatprep.subr.bf16.mxu0 %v2905
    %2983 = vmatpush2.bf16.msra.mxu0 %v2904
    %2984 = vmatprep.mubr.bf16.mxu0 %v2524
    %2985 = vmatmul.mubr.bf16.gmra.mxu0 %v2523
    %v2986 = vpop.f32.mrf.mxu0
    %v2987 = vadd.f32 %v2786, %v2986
    %v2988 = vpop.f32.mrf.mxu0
    %v2989 = vadd.f32 %v2788, %v2988
    %v2990 = vpop.f32.mrf.mxu0
    %v2991 = vpop.f32.mrf.mxu0
    %2992 = vdwg.mxu0
    %v2993 = vlaneseq
    %v2994 = vshrl.u32 %v2993, 7
    %v2995 = vsub.s32 5, %v2994
    %v2996 = vrot.slane %v61, %v2995
    %v2997 = vlaneseq
    %v2998 = vshrl.u32 %v2997, 7
    %v2999 = vsub.s32 5, %v2998
    %v3000 = vrot.slane %v67, %v2999
    %v3001 = vadd.f32 %v2987, %v2996
    %v3002 = vadd.f32 %v2989, %v3000
    %v3003 = vmul.f32 %v2521, 0.9
    %v3004 = vmul.f32 %v2522, 0.9
    %v3005 = vadd.f32 %v3003, %v3001
    %v3006 = vadd.f32 %v3004, %v3002
    %vm3007 = vcmp.ge.f32.partialorder %v3005, 1.0
    %vm3008 = vcmp.ge.f32.partialorder %v3006, 1.0
    %v3009 = vsel %vm3007, 1, 0
    %v3010 = vsel %vm3008, 1, 0
    %v3011 = vcvt.s32.f32 %v3009
    %v3012 = vcvt.s32.f32 %v3010
    %v3013 = vsel %vm3007, 0.0, %v3005
    %v3014 = vsel %vm3008, 0.0, %v3006
    %v3015 = vpack.c.bf16 %v3011, %v3011
    %v3016 = vpack.c.bf16 %v3012, %v3012
    %3017 = vst [vmem:[#allocation8 + $0x5] sm:$0x1] %v3011
    %3018 = vst [vmem:[#allocation9 + $0x5] sm:$0x1] %v3012
    %v3019 = vld [vmem:[#allocation5] sm:$0xff]
    %v3020 = vld [vmem:[#allocation5 + $0x8] sm:$0xff]
    %v3021 = vld [vmem:[#allocation5 + $0x10] sm:$0xff]
    %v3022 = vld [vmem:[#allocation5 + $0x18] sm:$0xff]
    %v3023 = vld [vmem:[#allocation5 + $0x20] sm:$0xff]
    %v3024 = vld [vmem:[#allocation5 + $0x28] sm:$0xff]
    %v3025 = vld [vmem:[#allocation5 + $0x30] sm:$0xff]
    %v3026 = vld [vmem:[#allocation5 + $0x38] sm:$0xff]
    %v3027 = vld [vmem:[#allocation5 + $0x40] sm:$0xff]
    %v3028 = vld [vmem:[#allocation5 + $0x48] sm:$0xff]
    %v3029 = vld [vmem:[#allocation5 + $0x50] sm:$0xff]
    %v3030 = vld [vmem:[#allocation5 + $0x58] sm:$0xff]
    %v3031 = vld [vmem:[#allocation5 + $0x60] sm:$0xff]
    %v3032 = vld [vmem:[#allocation5 + $0x68] sm:$0xff]
    %v3033 = vld [vmem:[#allocation5 + $0x70] sm:$0xff]
    %v3034 = vld [vmem:[#allocation5 + $0x78] sm:$0xff]
    %v3035 = vld [vmem:[#allocation5 + $0x80] sm:$0xff]
    %v3036 = vld [vmem:[#allocation5 + $0x88] sm:$0xff]
    %v3037 = vld [vmem:[#allocation5 + $0x90] sm:$0xff]
    %v3038 = vld [vmem:[#allocation5 + $0x98] sm:$0xff]
    %v3039 = vld [vmem:[#allocation5 + $0xa0] sm:$0xff]
    %v3040 = vld [vmem:[#allocation5 + $0xa8] sm:$0xff]
    %v3041 = vld [vmem:[#allocation5 + $0xb0] sm:$0xff]
    %v3042 = vld [vmem:[#allocation5 + $0xb8] sm:$0xff]
    %v3043 = vld [vmem:[#allocation5 + $0xc0] sm:$0xff]
    %v3044 = vld [vmem:[#allocation5 + $0xc8] sm:$0xff]
    %v3045 = vld [vmem:[#allocation5 + $0xd0] sm:$0xff]
    %v3046 = vld [vmem:[#allocation5 + $0xd8] sm:$0xff]
    %v3047 = vld [vmem:[#allocation5 + $0xe0] sm:$0xff]
    %v3048 = vld [vmem:[#allocation5 + $0xe8] sm:$0xff]
    %v3049 = vld [vmem:[#allocation5 + $0xf0] sm:$0xff]
    %v3050 = vld [vmem:[#allocation5 + $0xf8] sm:$0xff]
    %v3051 = vld [vmem:[#allocation7] sm:$0xff]
    %v3052 = vld [vmem:[#allocation7 + $0x8] sm:$0xff]
    %v3053 = vld [vmem:[#allocation7 + $0x10] sm:$0xff]
    %v3054 = vld [vmem:[#allocation7 + $0x18] sm:$0xff]
    %v3055 = vld [vmem:[#allocation7 + $0x20] sm:$0xff]
    %v3056 = vld [vmem:[#allocation7 + $0x28] sm:$0xff]
    %v3057 = vld [vmem:[#allocation7 + $0x30] sm:$0xff]
    %v3058 = vld [vmem:[#allocation7 + $0x38] sm:$0xff]
    %v3059 = vld [vmem:[#allocation7 + $0x40] sm:$0xff]
    %v3060 = vld [vmem:[#allocation7 + $0x48] sm:$0xff]
    %v3061 = vld [vmem:[#allocation7 + $0x50] sm:$0xff]
    %v3062 = vld [vmem:[#allocation7 + $0x58] sm:$0xff]
    %v3063 = vld [vmem:[#allocation7 + $0x60] sm:$0xff]
    %v3064 = vld [vmem:[#allocation7 + $0x68] sm:$0xff]
    %v3065 = vld [vmem:[#allocation7 + $0x70] sm:$0xff]
    %v3066 = vld [vmem:[#allocation7 + $0x78] sm:$0xff]
    %v3067 = vld [vmem:[#allocation7 + $0x80] sm:$0xff]
    %v3068 = vld [vmem:[#allocation7 + $0x88] sm:$0xff]
    %v3069 = vld [vmem:[#allocation7 + $0x90] sm:$0xff]
    %v3070 = vld [vmem:[#allocation7 + $0x98] sm:$0xff]
    %v3071 = vld [vmem:[#allocation7 + $0xa0] sm:$0xff]
    %v3072 = vld [vmem:[#allocation7 + $0xa8] sm:$0xff]
    %v3073 = vld [vmem:[#allocation7 + $0xb0] sm:$0xff]
    %v3074 = vld [vmem:[#allocation7 + $0xb8] sm:$0xff]
    %v3075 = vld [vmem:[#allocation7 + $0xc0] sm:$0xff]
    %v3076 = vld [vmem:[#allocation7 + $0xc8] sm:$0xff]
    %v3077 = vld [vmem:[#allocation7 + $0xd0] sm:$0xff]
    %v3078 = vld [vmem:[#allocation7 + $0xd8] sm:$0xff]
    %v3079 = vld [vmem:[#allocation7 + $0xe0] sm:$0xff]
    %v3080 = vld [vmem:[#allocation7 + $0xe8] sm:$0xff]
    %v3081 = vld [vmem:[#allocation7 + $0xf0] sm:$0xff]
    %v3082 = vld [vmem:[#allocation7 + $0xf8] sm:$0xff]
    %v3115 = vunpack.c.l.b16 %v3051
    %v3116 = vunpack.c.h.b16 %v3051
    %v3117 = vunpack.c.l.b16 %v3052
    %v3118 = vunpack.c.h.b16 %v3052
    %v3119 = vunpack.c.l.b16 %v3053
    %v3120 = vunpack.c.h.b16 %v3053
    %v3121 = vunpack.c.l.b16 %v3054
    %v3122 = vunpack.c.h.b16 %v3054
    %v3123 = vunpack.c.l.b16 %v3055
    %v3124 = vunpack.c.h.b16 %v3055
    %v3125 = vunpack.c.l.b16 %v3056
    %v3126 = vunpack.c.h.b16 %v3056
    %v3127 = vunpack.c.l.b16 %v3057
    %v3128 = vunpack.c.h.b16 %v3057
    %v3129 = vunpack.c.l.b16 %v3058
    %v3130 = vunpack.c.h.b16 %v3058
    %v3131 = vunpack.c.l.b16 %v3059
    %v3132 = vunpack.c.h.b16 %v3059
    %v3133 = vunpack.c.l.b16 %v3060
    %v3134 = vunpack.c.h.b16 %v3060
    %v3135 = vunpack.c.l.b16 %v3061
    %v3136 = vunpack.c.h.b16 %v3061
    %v3137 = vunpack.c.l.b16 %v3062
    %v3138 = vunpack.c.h.b16 %v3062
    %v3139 = vunpack.c.l.b16 %v3063
    %v3140 = vunpack.c.h.b16 %v3063
    %v3141 = vunpack.c.l.b16 %v3064
    %v3142 = vunpack.c.h.b16 %v3064
    %v3143 = vunpack.c.l.b16 %v3065
    %v3144 = vunpack.c.h.b16 %v3065
    %v3145 = vunpack.c.l.b16 %v3066
    %v3146 = vunpack.c.h.b16 %v3066
    %v3147 = vunpack.c.l.b16 %v3067
    %v3148 = vunpack.c.h.b16 %v3067
    %v3149 = vunpack.c.l.b16 %v3068
    %v3150 = vunpack.c.h.b16 %v3068
    %v3151 = vunpack.c.l.b16 %v3069
    %v3152 = vunpack.c.h.b16 %v3069
    %v3153 = vunpack.c.l.b16 %v3070
    %v3154 = vunpack.c.h.b16 %v3070
    %v3155 = vunpack.c.l.b16 %v3071
    %v3156 = vunpack.c.h.b16 %v3071
    %v3157 = vunpack.c.l.b16 %v3072
    %v3158 = vunpack.c.h.b16 %v3072
    %v3159 = vunpack.c.l.b16 %v3073
    %v3160 = vunpack.c.h.b16 %v3073
    %v3161 = vunpack.c.l.b16 %v3074
    %v3162 = vunpack.c.h.b16 %v3074
    %v3163 = vunpack.c.l.b16 %v3075
    %v3164 = vunpack.c.h.b16 %v3075
    %v3165 = vunpack.c.l.b16 %v3076
    %v3166 = vunpack.c.h.b16 %v3076
    %v3167 = vunpack.c.l.b16 %v3077
    %v3168 = vunpack.c.h.b16 %v3077
    %v3169 = vunpack.c.l.b16 %v3078
    %v3170 = vunpack.c.h.b16 %v3078
    %v3171 = vunpack.c.l.b16 %v3079
    %v3172 = vunpack.c.h.b16 %v3079
    %v3173 = vunpack.c.l.b16 %v3080
    %v3174 = vunpack.c.h.b16 %v3080
    %v3175 = vunpack.c.l.b16 %v3081
    %v3176 = vunpack.c.h.b16 %v3081
    %v3177 = vunpack.c.l.b16 %v3082
    %v3178 = vunpack.c.h.b16 %v3082
    %v3179 = vpack.c.b16 %v3117, %v3115
    %v3180 = vpack.c.b16 %v3118, %v3116
    %v3181 = vpack.c.b16 %v3121, %v3119
    %v3182 = vpack.c.b16 %v3122, %v3120
    %v3183 = vpack.c.b16 %v3125, %v3123
    %v3184 = vpack.c.b16 %v3126, %v3124
    %v3185 = vpack.c.b16 %v3129, %v3127
    %v3186 = vpack.c.b16 %v3130, %v3128
    %v3187 = vpack.c.b16 %v3133, %v3131
    %v3188 = vpack.c.b16 %v3134, %v3132
    %v3189 = vpack.c.b16 %v3137, %v3135
    %v3190 = vpack.c.b16 %v3138, %v3136
    %v3191 = vpack.c.b16 %v3141, %v3139
    %v3192 = vpack.c.b16 %v3142, %v3140
    %v3193 = vpack.c.b16 %v3145, %v3143
    %v3194 = vpack.c.b16 %v3146, %v3144
    %v3195 = vpack.c.b16 %v3149, %v3147
    %v3196 = vpack.c.b16 %v3150, %v3148
    %v3197 = vpack.c.b16 %v3153, %v3151
    %v3198 = vpack.c.b16 %v3154, %v3152
    %v3199 = vpack.c.b16 %v3157, %v3155
    %v3200 = vpack.c.b16 %v3158, %v3156
    %v3201 = vpack.c.b16 %v3161, %v3159
    %v3202 = vpack.c.b16 %v3162, %v3160
    %v3203 = vpack.c.b16 %v3165, %v3163
    %v3204 = vpack.c.b16 %v3166, %v3164
    %v3205 = vpack.c.b16 %v3169, %v3167
    %v3206 = vpack.c.b16 %v3170, %v3168
    %v3207 = vpack.c.b16 %v3173, %v3171
    %v3208 = vpack.c.b16 %v3174, %v3172
    %v3209 = vpack.c.b16 %v3177, %v3175
    %v3210 = vpack.c.b16 %v3178, %v3176
    %3243 = vmatprep.subr.bf16.mxu0 %v3194
    %3244 = vmatpush1.bf16.msra.mxu0 %v3193
    %3245 = vmatprep.subr.bf16.mxu0 %v3192
    %3246 = vmatpush1.bf16.msra.mxu0 %v3191
    %3247 = vmatprep.subr.bf16.mxu0 %v3190
    %3248 = vmatpush1.bf16.msra.mxu0 %v3189
    %3249 = vmatprep.subr.bf16.mxu0 %v3188
    %3250 = vmatpush1.bf16.msra.mxu0 %v3187
    %3251 = vmatprep.subr.bf16.mxu0 %v3186
    %3252 = vmatpush1.bf16.msra.mxu0 %v3185
    %3253 = vmatprep.subr.bf16.mxu0 %v3184
    %3254 = vmatpush1.bf16.msra.mxu0 %v3183
    %3255 = vmatprep.subr.bf16.mxu0 %v3182
    %3256 = vmatpush1.bf16.msra.mxu0 %v3181
    %3257 = vmatprep.subr.bf16.mxu0 %v3180
    %3258 = vmatpush1.bf16.msra.mxu0 %v3179
    %3259 = vmatprep.subr.bf16.mxu0 %v3210
    %3260 = vmatpush2.bf16.msra.mxu0 %v3209
    %3261 = vmatprep.subr.bf16.mxu0 %v3208
    %3262 = vmatpush2.bf16.msra.mxu0 %v3207
    %3263 = vmatprep.subr.bf16.mxu0 %v3206
    %3264 = vmatpush2.bf16.msra.mxu0 %v3205
    %3265 = vmatprep.subr.bf16.mxu0 %v3204
    %3266 = vmatpush2.bf16.msra.mxu0 %v3203
    %3267 = vmatprep.subr.bf16.mxu0 %v3202
    %3268 = vmatpush2.bf16.msra.mxu0 %v3201
    %3269 = vmatprep.subr.bf16.mxu0 %v3200
    %3270 = vmatpush2.bf16.msra.mxu0 %v3199
    %3271 = vmatprep.subr.bf16.mxu0 %v3198
    %3272 = vmatpush2.bf16.msra.mxu0 %v3197
    %3273 = vmatprep.subr.bf16.mxu0 %v3196
    %3274 = vmatpush2.bf16.msra.mxu0 %v3195
    %3275 = vmatprep.mubr.bf16.mxu0 %v3016
    %3276 = vmatmul.mubr.bf16.gmra.mxu0 %v3015
    %v3277 = vpop.f32.mrf.mxu0
    %v3278 = vadd.f32 0.0, %v3277
    %v3279 = vpop.f32.mrf.mxu0
    %v3280 = vadd.f32 0.0, %v3279
    %v3281 = vpop.f32.mrf.mxu0
    %v3282 = vpop.f32.mrf.mxu0
    %3283 = vdwg.mxu0
    %v3316 = vunpack.c.l.b16 %v3019
    %v3317 = vunpack.c.h.b16 %v3019
    %v3318 = vunpack.c.l.b16 %v3020
    %v3319 = vunpack.c.h.b16 %v3020
    %v3320 = vunpack.c.l.b16 %v3021
    %v3321 = vunpack.c.h.b16 %v3021
    %v3322 = vunpack.c.l.b16 %v3022
    %v3323 = vunpack.c.h.b16 %v3022
    %v3324 = vunpack.c.l.b16 %v3023
    %v3325 = vunpack.c.h.b16 %v3023
    %v3326 = vunpack.c.l.b16 %v3024
    %v3327 = vunpack.c.h.b16 %v3024
    %v3328 = vunpack.c.l.b16 %v3025
    %v3329 = vunpack.c.h.b16 %v3025
    %v3330 = vunpack.c.l.b16 %v3026
    %v3331 = vunpack.c.h.b16 %v3026
    %v3332 = vunpack.c.l.b16 %v3027
    %v3333 = vunpack.c.h.b16 %v3027
    %v3334 = vunpack.c.l.b16 %v3028
    %v3335 = vunpack.c.h.b16 %v3028
    %v3336 = vunpack.c.l.b16 %v3029
    %v3337 = vunpack.c.h.b16 %v3029
    %v3338 = vunpack.c.l.b16 %v3030
    %v3339 = vunpack.c.h.b16 %v3030
    %v3340 = vunpack.c.l.b16 %v3031
    %v3341 = vunpack.c.h.b16 %v3031
    %v3342 = vunpack.c.l.b16 %v3032
    %v3343 = vunpack.c.h.b16 %v3032
    %v3344 = vunpack.c.l.b16 %v3033
    %v3345 = vunpack.c.h.b16 %v3033
    %v3346 = vunpack.c.l.b16 %v3034
    %v3347 = vunpack.c.h.b16 %v3034
    %v3348 = vunpack.c.l.b16 %v3035
    %v3349 = vunpack.c.h.b16 %v3035
    %v3350 = vunpack.c.l.b16 %v3036
    %v3351 = vunpack.c.h.b16 %v3036
    %v3352 = vunpack.c.l.b16 %v3037
    %v3353 = vunpack.c.h.b16 %v3037
    %v3354 = vunpack.c.l.b16 %v3038
    %v3355 = vunpack.c.h.b16 %v3038
    %v3356 = vunpack.c.l.b16 %v3039
    %v3357 = vunpack.c.h.b16 %v3039
    %v3358 = vunpack.c.l.b16 %v3040
    %v3359 = vunpack.c.h.b16 %v3040
    %v3360 = vunpack.c.l.b16 %v3041
    %v3361 = vunpack.c.h.b16 %v3041
    %v3362 = vunpack.c.l.b16 %v3042
    %v3363 = vunpack.c.h.b16 %v3042
    %v3364 = vunpack.c.l.b16 %v3043
    %v3365 = vunpack.c.h.b16 %v3043
    %v3366 = vunpack.c.l.b16 %v3044
    %v3367 = vunpack.c.h.b16 %v3044
    %v3368 = vunpack.c.l.b16 %v3045
    %v3369 = vunpack.c.h.b16 %v3045
    %v3370 = vunpack.c.l.b16 %v3046
    %v3371 = vunpack.c.h.b16 %v3046
    %v3372 = vunpack.c.l.b16 %v3047
    %v3373 = vunpack.c.h.b16 %v3047
    %v3374 = vunpack.c.l.b16 %v3048
    %v3375 = vunpack.c.h.b16 %v3048
    %v3376 = vunpack.c.l.b16 %v3049
    %v3377 = vunpack.c.h.b16 %v3049
    %v3378 = vunpack.c.l.b16 %v3050
    %v3379 = vunpack.c.h.b16 %v3050
    %v3380 = vpack.c.b16 %v3318, %v3316
    %v3381 = vpack.c.b16 %v3319, %v3317
    %v3382 = vpack.c.b16 %v3322, %v3320
    %v3383 = vpack.c.b16 %v3323, %v3321
    %v3384 = vpack.c.b16 %v3326, %v3324
    %v3385 = vpack.c.b16 %v3327, %v3325
    %v3386 = vpack.c.b16 %v3330, %v3328
    %v3387 = vpack.c.b16 %v3331, %v3329
    %v3388 = vpack.c.b16 %v3334, %v3332
    %v3389 = vpack.c.b16 %v3335, %v3333
    %v3390 = vpack.c.b16 %v3338, %v3336
    %v3391 = vpack.c.b16 %v3339, %v3337
    %v3392 = vpack.c.b16 %v3342, %v3340
    %v3393 = vpack.c.b16 %v3343, %v3341
    %v3394 = vpack.c.b16 %v3346, %v3344
    %v3395 = vpack.c.b16 %v3347, %v3345
    %v3396 = vpack.c.b16 %v3350, %v3348
    %v3397 = vpack.c.b16 %v3351, %v3349
    %v3398 = vpack.c.b16 %v3354, %v3352
    %v3399 = vpack.c.b16 %v3355, %v3353
    %v3400 = vpack.c.b16 %v3358, %v3356
    %v3401 = vpack.c.b16 %v3359, %v3357
    %v3402 = vpack.c.b16 %v3362, %v3360
    %v3403 = vpack.c.b16 %v3363, %v3361
    %v3404 = vpack.c.b16 %v3366, %v3364
    %v3405 = vpack.c.b16 %v3367, %v3365
    %v3406 = vpack.c.b16 %v3370, %v3368
    %v3407 = vpack.c.b16 %v3371, %v3369
    %v3408 = vpack.c.b16 %v3374, %v3372
    %v3409 = vpack.c.b16 %v3375, %v3373
    %v3410 = vpack.c.b16 %v3378, %v3376
    %v3411 = vpack.c.b16 %v3379, %v3377
    %3444 = vmatprep.subr.bf16.mxu0 %v3395
    %3445 = vmatpush1.bf16.msra.mxu0 %v3394
    %3446 = vmatprep.subr.bf16.mxu0 %v3393
    %3447 = vmatpush1.bf16.msra.mxu0 %v3392
    %3448 = vmatprep.subr.bf16.mxu0 %v3391
    %3449 = vmatpush1.bf16.msra.mxu0 %v3390
    %3450 = vmatprep.subr.bf16.mxu0 %v3389
    %3451 = vmatpush1.bf16.msra.mxu0 %v3388
    %3452 = vmatprep.subr.bf16.mxu0 %v3387
    %3453 = vmatpush1.bf16.msra.mxu0 %v3386
    %3454 = vmatprep.subr.bf16.mxu0 %v3385
    %3455 = vmatpush1.bf16.msra.mxu0 %v3384
    %3456 = vmatprep.subr.bf16.mxu0 %v3383
    %3457 = vmatpush1.bf16.msra.mxu0 %v3382
    %3458 = vmatprep.subr.bf16.mxu0 %v3381
    %3459 = vmatpush1.bf16.msra.mxu0 %v3380
    %3460 = vmatprep.subr.bf16.mxu0 %v3411
    %3461 = vmatpush2.bf16.msra.mxu0 %v3410
    %3462 = vmatprep.subr.bf16.mxu0 %v3409
    %3463 = vmatpush2.bf16.msra.mxu0 %v3408
    %3464 = vmatprep.subr.bf16.mxu0 %v3407
    %3465 = vmatpush2.bf16.msra.mxu0 %v3406
    %3466 = vmatprep.subr.bf16.mxu0 %v3405
    %3467 = vmatpush2.bf16.msra.mxu0 %v3404
    %3468 = vmatprep.subr.bf16.mxu0 %v3403
    %3469 = vmatpush2.bf16.msra.mxu0 %v3402
    %3470 = vmatprep.subr.bf16.mxu0 %v3401
    %3471 = vmatpush2.bf16.msra.mxu0 %v3400
    %3472 = vmatprep.subr.bf16.mxu0 %v3399
    %3473 = vmatpush2.bf16.msra.mxu0 %v3398
    %3474 = vmatprep.subr.bf16.mxu0 %v3397
    %3475 = vmatpush2.bf16.msra.mxu0 %v3396
    %3476 = vmatprep.mubr.bf16.mxu0 %v3016
    %3477 = vmatmul.mubr.bf16.gmra.mxu0 %v3015
    %v3478 = vpop.f32.mrf.mxu0
    %v3479 = vadd.f32 %v3278, %v3478
    %v3480 = vpop.f32.mrf.mxu0
    %v3481 = vadd.f32 %v3280, %v3480
    %v3482 = vpop.f32.mrf.mxu0
    %v3483 = vpop.f32.mrf.mxu0
    %3484 = vdwg.mxu0
    %v3485 = vlaneseq
    %v3486 = vshrl.u32 %v3485, 7
    %v3487 = vsub.s32 6, %v3486
    %v3488 = vrot.slane %v61, %v3487
    %v3489 = vlaneseq
    %v3490 = vshrl.u32 %v3489, 7
    %v3491 = vsub.s32 6, %v3490
    %v3492 = vrot.slane %v67, %v3491
    %v3493 = vadd.f32 %v3479, %v3488
    %v3494 = vadd.f32 %v3481, %v3492
    %v3495 = vmul.f32 %v3013, 0.9
    %v3496 = vmul.f32 %v3014, 0.9
    %v3497 = vadd.f32 %v3495, %v3493
    %v3498 = vadd.f32 %v3496, %v3494
    %vm3499 = vcmp.ge.f32.partialorder %v3497, 1.0
    %vm3500 = vcmp.ge.f32.partialorder %v3498, 1.0
    %v3501 = vsel %vm3499, 1, 0
    %v3502 = vsel %vm3500, 1, 0
    %v3503 = vcvt.s32.f32 %v3501
    %v3504 = vcvt.s32.f32 %v3502
    %v3505 = vsel %vm3499, 0.0, %v3497
    %v3506 = vsel %vm3500, 0.0, %v3498
    %v3507 = vpack.c.bf16 %v3503, %v3503
    %v3508 = vpack.c.bf16 %v3504, %v3504
    %3509 = vst [vmem:[#allocation8 + $0x6] sm:$0x1] %v3503
    %3510 = vst [vmem:[#allocation9 + $0x6] sm:$0x1] %v3504
    %v3511 = vld [vmem:[#allocation5] sm:$0xff]
    %v3512 = vld [vmem:[#allocation5 + $0x8] sm:$0xff]
    %v3513 = vld [vmem:[#allocation5 + $0x10] sm:$0xff]
    %v3514 = vld [vmem:[#allocation5 + $0x18] sm:$0xff]
    %v3515 = vld [vmem:[#allocation5 + $0x20] sm:$0xff]
    %v3516 = vld [vmem:[#allocation5 + $0x28] sm:$0xff]
    %v3517 = vld [vmem:[#allocation5 + $0x30] sm:$0xff]
    %v3518 = vld [vmem:[#allocation5 + $0x38] sm:$0xff]
    %v3519 = vld [vmem:[#allocation5 + $0x40] sm:$0xff]
    %v3520 = vld [vmem:[#allocation5 + $0x48] sm:$0xff]
    %v3521 = vld [vmem:[#allocation5 + $0x50] sm:$0xff]
    %v3522 = vld [vmem:[#allocation5 + $0x58] sm:$0xff]
    %v3523 = vld [vmem:[#allocation5 + $0x60] sm:$0xff]
    %v3524 = vld [vmem:[#allocation5 + $0x68] sm:$0xff]
    %v3525 = vld [vmem:[#allocation5 + $0x70] sm:$0xff]
    %v3526 = vld [vmem:[#allocation5 + $0x78] sm:$0xff]
    %v3527 = vld [vmem:[#allocation5 + $0x80] sm:$0xff]
    %v3528 = vld [vmem:[#allocation5 + $0x88] sm:$0xff]
    %v3529 = vld [vmem:[#allocation5 + $0x90] sm:$0xff]
    %v3530 = vld [vmem:[#allocation5 + $0x98] sm:$0xff]
    %v3531 = vld [vmem:[#allocation5 + $0xa0] sm:$0xff]
    %v3532 = vld [vmem:[#allocation5 + $0xa8] sm:$0xff]
    %v3533 = vld [vmem:[#allocation5 + $0xb0] sm:$0xff]
    %v3534 = vld [vmem:[#allocation5 + $0xb8] sm:$0xff]
    %v3535 = vld [vmem:[#allocation5 + $0xc0] sm:$0xff]
    %v3536 = vld [vmem:[#allocation5 + $0xc8] sm:$0xff]
    %v3537 = vld [vmem:[#allocation5 + $0xd0] sm:$0xff]
    %v3538 = vld [vmem:[#allocation5 + $0xd8] sm:$0xff]
    %v3539 = vld [vmem:[#allocation5 + $0xe0] sm:$0xff]
    %v3540 = vld [vmem:[#allocation5 + $0xe8] sm:$0xff]
    %v3541 = vld [vmem:[#allocation5 + $0xf0] sm:$0xff]
    %v3542 = vld [vmem:[#allocation5 + $0xf8] sm:$0xff]
    %v3543 = vld [vmem:[#allocation7] sm:$0xff]
    %v3544 = vld [vmem:[#allocation7 + $0x8] sm:$0xff]
    %v3545 = vld [vmem:[#allocation7 + $0x10] sm:$0xff]
    %v3546 = vld [vmem:[#allocation7 + $0x18] sm:$0xff]
    %v3547 = vld [vmem:[#allocation7 + $0x20] sm:$0xff]
    %v3548 = vld [vmem:[#allocation7 + $0x28] sm:$0xff]
    %v3549 = vld [vmem:[#allocation7 + $0x30] sm:$0xff]
    %v3550 = vld [vmem:[#allocation7 + $0x38] sm:$0xff]
    %v3551 = vld [vmem:[#allocation7 + $0x40] sm:$0xff]
    %v3552 = vld [vmem:[#allocation7 + $0x48] sm:$0xff]
    %v3553 = vld [vmem:[#allocation7 + $0x50] sm:$0xff]
    %v3554 = vld [vmem:[#allocation7 + $0x58] sm:$0xff]
    %v3555 = vld [vmem:[#allocation7 + $0x60] sm:$0xff]
    %v3556 = vld [vmem:[#allocation7 + $0x68] sm:$0xff]
    %v3557 = vld [vmem:[#allocation7 + $0x70] sm:$0xff]
    %v3558 = vld [vmem:[#allocation7 + $0x78] sm:$0xff]
    %v3559 = vld [vmem:[#allocation7 + $0x80] sm:$0xff]
    %v3560 = vld [vmem:[#allocation7 + $0x88] sm:$0xff]
    %v3561 = vld [vmem:[#allocation7 + $0x90] sm:$0xff]
    %v3562 = vld [vmem:[#allocation7 + $0x98] sm:$0xff]
    %v3563 = vld [vmem:[#allocation7 + $0xa0] sm:$0xff]
    %v3564 = vld [vmem:[#allocation7 + $0xa8] sm:$0xff]
    %v3565 = vld [vmem:[#allocation7 + $0xb0] sm:$0xff]
    %v3566 = vld [vmem:[#allocation7 + $0xb8] sm:$0xff]
    %v3567 = vld [vmem:[#allocation7 + $0xc0] sm:$0xff]
    %v3568 = vld [vmem:[#allocation7 + $0xc8] sm:$0xff]
    %v3569 = vld [vmem:[#allocation7 + $0xd0] sm:$0xff]
    %v3570 = vld [vmem:[#allocation7 + $0xd8] sm:$0xff]
    %v3571 = vld [vmem:[#allocation7 + $0xe0] sm:$0xff]
    %v3572 = vld [vmem:[#allocation7 + $0xe8] sm:$0xff]
    %v3573 = vld [vmem:[#allocation7 + $0xf0] sm:$0xff]
    %v3574 = vld [vmem:[#allocation7 + $0xf8] sm:$0xff]
    %v3607 = vunpack.c.l.b16 %v3543
    %v3608 = vunpack.c.h.b16 %v3543
    %v3609 = vunpack.c.l.b16 %v3544
    %v3610 = vunpack.c.h.b16 %v3544
    %v3611 = vunpack.c.l.b16 %v3545
    %v3612 = vunpack.c.h.b16 %v3545
    %v3613 = vunpack.c.l.b16 %v3546
    %v3614 = vunpack.c.h.b16 %v3546
    %v3615 = vunpack.c.l.b16 %v3547
    %v3616 = vunpack.c.h.b16 %v3547
    %v3617 = vunpack.c.l.b16 %v3548
    %v3618 = vunpack.c.h.b16 %v3548
    %v3619 = vunpack.c.l.b16 %v3549
    %v3620 = vunpack.c.h.b16 %v3549
    %v3621 = vunpack.c.l.b16 %v3550
    %v3622 = vunpack.c.h.b16 %v3550
    %v3623 = vunpack.c.l.b16 %v3551
    %v3624 = vunpack.c.h.b16 %v3551
    %v3625 = vunpack.c.l.b16 %v3552
    %v3626 = vunpack.c.h.b16 %v3552
    %v3627 = vunpack.c.l.b16 %v3553
    %v3628 = vunpack.c.h.b16 %v3553
    %v3629 = vunpack.c.l.b16 %v3554
    %v3630 = vunpack.c.h.b16 %v3554
    %v3631 = vunpack.c.l.b16 %v3555
    %v3632 = vunpack.c.h.b16 %v3555
    %v3633 = vunpack.c.l.b16 %v3556
    %v3634 = vunpack.c.h.b16 %v3556
    %v3635 = vunpack.c.l.b16 %v3557
    %v3636 = vunpack.c.h.b16 %v3557
    %v3637 = vunpack.c.l.b16 %v3558
    %v3638 = vunpack.c.h.b16 %v3558
    %v3639 = vunpack.c.l.b16 %v3559
    %v3640 = vunpack.c.h.b16 %v3559
    %v3641 = vunpack.c.l.b16 %v3560
    %v3642 = vunpack.c.h.b16 %v3560
    %v3643 = vunpack.c.l.b16 %v3561
    %v3644 = vunpack.c.h.b16 %v3561
    %v3645 = vunpack.c.l.b16 %v3562
    %v3646 = vunpack.c.h.b16 %v3562
    %v3647 = vunpack.c.l.b16 %v3563
    %v3648 = vunpack.c.h.b16 %v3563
    %v3649 = vunpack.c.l.b16 %v3564
    %v3650 = vunpack.c.h.b16 %v3564
    %v3651 = vunpack.c.l.b16 %v3565
    %v3652 = vunpack.c.h.b16 %v3565
    %v3653 = vunpack.c.l.b16 %v3566
    %v3654 = vunpack.c.h.b16 %v3566
    %v3655 = vunpack.c.l.b16 %v3567
    %v3656 = vunpack.c.h.b16 %v3567
    %v3657 = vunpack.c.l.b16 %v3568
    %v3658 = vunpack.c.h.b16 %v3568
    %v3659 = vunpack.c.l.b16 %v3569
    %v3660 = vunpack.c.h.b16 %v3569
    %v3661 = vunpack.c.l.b16 %v3570
    %v3662 = vunpack.c.h.b16 %v3570
    %v3663 = vunpack.c.l.b16 %v3571
    %v3664 = vunpack.c.h.b16 %v3571
    %v3665 = vunpack.c.l.b16 %v3572
    %v3666 = vunpack.c.h.b16 %v3572
    %v3667 = vunpack.c.l.b16 %v3573
    %v3668 = vunpack.c.h.b16 %v3573
    %v3669 = vunpack.c.l.b16 %v3574
    %v3670 = vunpack.c.h.b16 %v3574
    %v3671 = vpack.c.b16 %v3609, %v3607
    %v3672 = vpack.c.b16 %v3610, %v3608
    %v3673 = vpack.c.b16 %v3613, %v3611
    %v3674 = vpack.c.b16 %v3614, %v3612
    %v3675 = vpack.c.b16 %v3617, %v3615
    %v3676 = vpack.c.b16 %v3618, %v3616
    %v3677 = vpack.c.b16 %v3621, %v3619
    %v3678 = vpack.c.b16 %v3622, %v3620
    %v3679 = vpack.c.b16 %v3625, %v3623
    %v3680 = vpack.c.b16 %v3626, %v3624
    %v3681 = vpack.c.b16 %v3629, %v3627
    %v3682 = vpack.c.b16 %v3630, %v3628
    %v3683 = vpack.c.b16 %v3633, %v3631
    %v3684 = vpack.c.b16 %v3634, %v3632
    %v3685 = vpack.c.b16 %v3637, %v3635
    %v3686 = vpack.c.b16 %v3638, %v3636
    %v3687 = vpack.c.b16 %v3641, %v3639
    %v3688 = vpack.c.b16 %v3642, %v3640
    %v3689 = vpack.c.b16 %v3645, %v3643
    %v3690 = vpack.c.b16 %v3646, %v3644
    %v3691 = vpack.c.b16 %v3649, %v3647
    %v3692 = vpack.c.b16 %v3650, %v3648
    %v3693 = vpack.c.b16 %v3653, %v3651
    %v3694 = vpack.c.b16 %v3654, %v3652
    %v3695 = vpack.c.b16 %v3657, %v3655
    %v3696 = vpack.c.b16 %v3658, %v3656
    %v3697 = vpack.c.b16 %v3661, %v3659
    %v3698 = vpack.c.b16 %v3662, %v3660
    %v3699 = vpack.c.b16 %v3665, %v3663
    %v3700 = vpack.c.b16 %v3666, %v3664
    %v3701 = vpack.c.b16 %v3669, %v3667
    %v3702 = vpack.c.b16 %v3670, %v3668
    %3735 = vmatprep.subr.bf16.mxu0 %v3686
    %3736 = vmatpush1.bf16.msra.mxu0 %v3685
    %3737 = vmatprep.subr.bf16.mxu0 %v3684
    %3738 = vmatpush1.bf16.msra.mxu0 %v3683
    %3739 = vmatprep.subr.bf16.mxu0 %v3682
    %3740 = vmatpush1.bf16.msra.mxu0 %v3681
    %3741 = vmatprep.subr.bf16.mxu0 %v3680
    %3742 = vmatpush1.bf16.msra.mxu0 %v3679
    %3743 = vmatprep.subr.bf16.mxu0 %v3678
    %3744 = vmatpush1.bf16.msra.mxu0 %v3677
    %3745 = vmatprep.subr.bf16.mxu0 %v3676
    %3746 = vmatpush1.bf16.msra.mxu0 %v3675
    %3747 = vmatprep.subr.bf16.mxu0 %v3674
    %3748 = vmatpush1.bf16.msra.mxu0 %v3673
    %3749 = vmatprep.subr.bf16.mxu0 %v3672
    %3750 = vmatpush1.bf16.msra.mxu0 %v3671
    %3751 = vmatprep.subr.bf16.mxu0 %v3702
    %3752 = vmatpush2.bf16.msra.mxu0 %v3701
    %3753 = vmatprep.subr.bf16.mxu0 %v3700
    %3754 = vmatpush2.bf16.msra.mxu0 %v3699
    %3755 = vmatprep.subr.bf16.mxu0 %v3698
    %3756 = vmatpush2.bf16.msra.mxu0 %v3697
    %3757 = vmatprep.subr.bf16.mxu0 %v3696
    %3758 = vmatpush2.bf16.msra.mxu0 %v3695
    %3759 = vmatprep.subr.bf16.mxu0 %v3694
    %3760 = vmatpush2.bf16.msra.mxu0 %v3693
    %3761 = vmatprep.subr.bf16.mxu0 %v3692
    %3762 = vmatpush2.bf16.msra.mxu0 %v3691
    %3763 = vmatprep.subr.bf16.mxu0 %v3690
    %3764 = vmatpush2.bf16.msra.mxu0 %v3689
    %3765 = vmatprep.subr.bf16.mxu0 %v3688
    %3766 = vmatpush2.bf16.msra.mxu0 %v3687
    %3767 = vmatprep.mubr.bf16.mxu0 %v3508
    %3768 = vmatmul.mubr.bf16.gmra.mxu0 %v3507
    %v3769 = vpop.f32.mrf.mxu0
    %v3770 = vadd.f32 0.0, %v3769
    %v3771 = vpop.f32.mrf.mxu0
    %v3772 = vadd.f32 0.0, %v3771
    %v3773 = vpop.f32.mrf.mxu0
    %v3774 = vpop.f32.mrf.mxu0
    %3775 = vdwg.mxu0
    %v3808 = vunpack.c.l.b16 %v3511
    %v3809 = vunpack.c.h.b16 %v3511
    %v3810 = vunpack.c.l.b16 %v3512
    %v3811 = vunpack.c.h.b16 %v3512
    %v3812 = vunpack.c.l.b16 %v3513
    %v3813 = vunpack.c.h.b16 %v3513
    %v3814 = vunpack.c.l.b16 %v3514
    %v3815 = vunpack.c.h.b16 %v3514
    %v3816 = vunpack.c.l.b16 %v3515
    %v3817 = vunpack.c.h.b16 %v3515
    %v3818 = vunpack.c.l.b16 %v3516
    %v3819 = vunpack.c.h.b16 %v3516
    %v3820 = vunpack.c.l.b16 %v3517
    %v3821 = vunpack.c.h.b16 %v3517
    %v3822 = vunpack.c.l.b16 %v3518
    %v3823 = vunpack.c.h.b16 %v3518
    %v3824 = vunpack.c.l.b16 %v3519
    %v3825 = vunpack.c.h.b16 %v3519
    %v3826 = vunpack.c.l.b16 %v3520
    %v3827 = vunpack.c.h.b16 %v3520
    %v3828 = vunpack.c.l.b16 %v3521
    %v3829 = vunpack.c.h.b16 %v3521
    %v3830 = vunpack.c.l.b16 %v3522
    %v3831 = vunpack.c.h.b16 %v3522
    %v3832 = vunpack.c.l.b16 %v3523
    %v3833 = vunpack.c.h.b16 %v3523
    %v3834 = vunpack.c.l.b16 %v3524
    %v3835 = vunpack.c.h.b16 %v3524
    %v3836 = vunpack.c.l.b16 %v3525
    %v3837 = vunpack.c.h.b16 %v3525
    %v3838 = vunpack.c.l.b16 %v3526
    %v3839 = vunpack.c.h.b16 %v3526
    %v3840 = vunpack.c.l.b16 %v3527
    %v3841 = vunpack.c.h.b16 %v3527
    %v3842 = vunpack.c.l.b16 %v3528
    %v3843 = vunpack.c.h.b16 %v3528
    %v3844 = vunpack.c.l.b16 %v3529
    %v3845 = vunpack.c.h.b16 %v3529
    %v3846 = vunpack.c.l.b16 %v3530
    %v3847 = vunpack.c.h.b16 %v3530
    %v3848 = vunpack.c.l.b16 %v3531
    %v3849 = vunpack.c.h.b16 %v3531
    %v3850 = vunpack.c.l.b16 %v3532
    %v3851 = vunpack.c.h.b16 %v3532
    %v3852 = vunpack.c.l.b16 %v3533
    %v3853 = vunpack.c.h.b16 %v3533
    %v3854 = vunpack.c.l.b16 %v3534
    %v3855 = vunpack.c.h.b16 %v3534
    %v3856 = vunpack.c.l.b16 %v3535
    %v3857 = vunpack.c.h.b16 %v3535
    %v3858 = vunpack.c.l.b16 %v3536
    %v3859 = vunpack.c.h.b16 %v3536
    %v3860 = vunpack.c.l.b16 %v3537
    %v3861 = vunpack.c.h.b16 %v3537
    %v3862 = vunpack.c.l.b16 %v3538
    %v3863 = vunpack.c.h.b16 %v3538
    %v3864 = vunpack.c.l.b16 %v3539
    %v3865 = vunpack.c.h.b16 %v3539
    %v3866 = vunpack.c.l.b16 %v3540
    %v3867 = vunpack.c.h.b16 %v3540
    %v3868 = vunpack.c.l.b16 %v3541
    %v3869 = vunpack.c.h.b16 %v3541
    %v3870 = vunpack.c.l.b16 %v3542
    %v3871 = vunpack.c.h.b16 %v3542
    %v3872 = vpack.c.b16 %v3810, %v3808
    %v3873 = vpack.c.b16 %v3811, %v3809
    %v3874 = vpack.c.b16 %v3814, %v3812
    %v3875 = vpack.c.b16 %v3815, %v3813
    %v3876 = vpack.c.b16 %v3818, %v3816
    %v3877 = vpack.c.b16 %v3819, %v3817
    %v3878 = vpack.c.b16 %v3822, %v3820
    %v3879 = vpack.c.b16 %v3823, %v3821
    %v3880 = vpack.c.b16 %v3826, %v3824
    %v3881 = vpack.c.b16 %v3827, %v3825
    %v3882 = vpack.c.b16 %v3830, %v3828
    %v3883 = vpack.c.b16 %v3831, %v3829
    %v3884 = vpack.c.b16 %v3834, %v3832
    %v3885 = vpack.c.b16 %v3835, %v3833
    %v3886 = vpack.c.b16 %v3838, %v3836
    %v3887 = vpack.c.b16 %v3839, %v3837
    %v3888 = vpack.c.b16 %v3842, %v3840
    %v3889 = vpack.c.b16 %v3843, %v3841
    %v3890 = vpack.c.b16 %v3846, %v3844
    %v3891 = vpack.c.b16 %v3847, %v3845
    %v3892 = vpack.c.b16 %v3850, %v3848
    %v3893 = vpack.c.b16 %v3851, %v3849
    %v3894 = vpack.c.b16 %v3854, %v3852
    %v3895 = vpack.c.b16 %v3855, %v3853
    %v3896 = vpack.c.b16 %v3858, %v3856
    %v3897 = vpack.c.b16 %v3859, %v3857
    %v3898 = vpack.c.b16 %v3862, %v3860
    %v3899 = vpack.c.b16 %v3863, %v3861
    %v3900 = vpack.c.b16 %v3866, %v3864
    %v3901 = vpack.c.b16 %v3867, %v3865
    %v3902 = vpack.c.b16 %v3870, %v3868
    %v3903 = vpack.c.b16 %v3871, %v3869
    %3936 = vmatprep.subr.bf16.mxu0 %v3887
    %3937 = vmatpush1.bf16.msra.mxu0 %v3886
    %3938 = vmatprep.subr.bf16.mxu0 %v3885
    %3939 = vmatpush1.bf16.msra.mxu0 %v3884
    %3940 = vmatprep.subr.bf16.mxu0 %v3883
    %3941 = vmatpush1.bf16.msra.mxu0 %v3882
    %3942 = vmatprep.subr.bf16.mxu0 %v3881
    %3943 = vmatpush1.bf16.msra.mxu0 %v3880
    %3944 = vmatprep.subr.bf16.mxu0 %v3879
    %3945 = vmatpush1.bf16.msra.mxu0 %v3878
    %3946 = vmatprep.subr.bf16.mxu0 %v3877
    %3947 = vmatpush1.bf16.msra.mxu0 %v3876
    %3948 = vmatprep.subr.bf16.mxu0 %v3875
    %3949 = vmatpush1.bf16.msra.mxu0 %v3874
    %3950 = vmatprep.subr.bf16.mxu0 %v3873
    %3951 = vmatpush1.bf16.msra.mxu0 %v3872
    %3952 = vmatprep.subr.bf16.mxu0 %v3903
    %3953 = vmatpush2.bf16.msra.mxu0 %v3902
    %3954 = vmatprep.subr.bf16.mxu0 %v3901
    %3955 = vmatpush2.bf16.msra.mxu0 %v3900
    %3956 = vmatprep.subr.bf16.mxu0 %v3899
    %3957 = vmatpush2.bf16.msra.mxu0 %v3898
    %3958 = vmatprep.subr.bf16.mxu0 %v3897
    %3959 = vmatpush2.bf16.msra.mxu0 %v3896
    %3960 = vmatprep.subr.bf16.mxu0 %v3895
    %3961 = vmatpush2.bf16.msra.mxu0 %v3894
    %3962 = vmatprep.subr.bf16.mxu0 %v3893
    %3963 = vmatpush2.bf16.msra.mxu0 %v3892
    %3964 = vmatprep.subr.bf16.mxu0 %v3891
    %3965 = vmatpush2.bf16.msra.mxu0 %v3890
    %3966 = vmatprep.subr.bf16.mxu0 %v3889
    %3967 = vmatpush2.bf16.msra.mxu0 %v3888
    %3968 = vmatprep.mubr.bf16.mxu0 %v3508
    %3969 = vmatmul.mubr.bf16.gmra.mxu0 %v3507
    %v3970 = vpop.f32.mrf.mxu0
    %v3971 = vadd.f32 %v3770, %v3970
    %v3972 = vpop.f32.mrf.mxu0
    %v3973 = vadd.f32 %v3772, %v3972
    %v3974 = vpop.f32.mrf.mxu0
    %v3975 = vpop.f32.mrf.mxu0
    %3976 = vdwg.mxu0
    %v3977 = vlaneseq
    %v3978 = vshrl.u32 %v3977, 7
    %v3979 = vsub.s32 7, %v3978
    %v3980 = vrot.slane %v61, %v3979
    %v3981 = vlaneseq
    %v3982 = vshrl.u32 %v3981, 7
    %v3983 = vsub.s32 7, %v3982
    %v3984 = vrot.slane %v67, %v3983
    %v3985 = vadd.f32 %v3971, %v3980
    %v3986 = vadd.f32 %v3973, %v3984
    %v3987 = vmul.f32 %v3505, 0.9
    %v3988 = vmul.f32 %v3506, 0.9
    %v3989 = vadd.f32 %v3987, %v3985
    %v3990 = vadd.f32 %v3988, %v3986
    %vm3991 = vcmp.ge.f32.partialorder %v3989, 1.0
    %vm3992 = vcmp.ge.f32.partialorder %v3990, 1.0
    %v3993 = vsel %vm3991, 1, 0
    %v3994 = vsel %vm3992, 1, 0
    %v3995 = vcvt.s32.f32 %v3993
    %v3996 = vcvt.s32.f32 %v3994
    %3997 = vst [vmem:[#allocation8 + $0x7] sm:$0x1] %v3995
    %3998 = vst [vmem:[#allocation9 + $0x7] sm:$0x1] %v3996
    // Predicated region
    $region30: #{tpu_custom_call.1} parent=1 // pred_check
      _
    $region31: #{tpu_custom_call.1} parent=1 // pred_check_branch
      %4000 = sbr.rel (0) target = $region33
    $region32: #{tpu_custom_call.1} parent=1 // pred_region
      %s4002 = ssub.s32 128, 128
      %4003 = vsyncadd [#allocation4], %s4002
      %s4005 = sshll.u32 [#allocation8], 4
      %s4006 = int_to_ptr.vmem [resolvable:$true] %s4005
      %4008 = dma.vmem_to_hbm [thread:$0]  %s4006, 128, %s4, [#allocation4]
    $region33: #{tpu_custom_call.1} parent=1 // pred_fallthru
      _
    // Predicated region
    $region34: #{tpu_custom_call.1} parent=1 // pred_check
      _
    $region35: #{tpu_custom_call.1} parent=1 // pred_check_branch
      %4010 = sbr.rel (0) target = $region37
    $region36: #{tpu_custom_call.1} parent=1 // pred_region
      %s4012 = ssub.s32 128, 128
      %4013 = vsyncadd [#allocation10], %s4012
      %s4015 = sshll.u32 [#allocation9], 4
      %s4016 = int_to_ptr.vmem [resolvable:$true] %s4015
      %4018 = dma.vmem_to_hbm [thread:$0]  %s4016, 128, %s5, [#allocation10]
    $region37: #{tpu_custom_call.1} parent=1 // pred_fallthru
      _
    // Predicated region
    $region38: #{tpu_custom_call.1} parent=1 // pred_check
      _
    $region39: #{tpu_custom_call.1} parent=1 // pred_check_branch
      %4020 = sbr.rel (0) target = $region41
    $region40: #{tpu_custom_call.1} parent=1 // pred_region
      %4021 = dma.done [#allocation4], 128
    $region41: #{tpu_custom_call.1} parent=1 // pred_fallthru
      _
    // Predicated region
    $region42: #{tpu_custom_call.1} parent=1 // pred_check
      _
    $region43: #{tpu_custom_call.1} parent=1 // pred_check_branch
      %4023 = sbr.rel (0) target = $region45
    $region44: #{tpu_custom_call.1} parent=1 // pred_region
      %4024 = dma.done [#allocation10], 128
    $region45: #{tpu_custom_call.1} parent=1 // pred_fallthru
      _
    %4025 = vsyncpa [#allocation3], 1
    %4026 = vsyncpa [#allocation6], 1
    %4027 = vsyncpa [#allocation4], 1
    %4028 = vsyncpa [#allocation10], 1

</llo_original>
